<compile_context>
chip_gen: v5e
topology: v5e:2x2
jax: 0.10.0
libtpu: 0.0.40
codegen_flags: <defaults>
</compile_context>

<pallas_src>
import math
from functools import partial

import jax
import jax.numpy as jnp
from jax.experimental import pallas as pl
from jax.experimental.pallas import tpu as pltpu

BN_SCALE = 1.0 / math.sqrt(1.0 + 1e-5)   # BatchNorm1d eval mode, default running stats
MATMUL_DTYPE = jnp.bfloat16              # MXU-native input dtype; accumulation stays f32
_PARALLEL = pltpu.CompilerParams(dimension_semantics=("parallel",))


# ----------------------------------------------------------------------------
# Pallas kernels
# ----------------------------------------------------------------------------
def _linear_kernel(x_ref, w_ref, b_ref, o_ref, *, relu):
    y = jnp.dot(x_ref[...].astype(MATMUL_DTYPE), w_ref[...].astype(MATMUL_DTYPE),
                preferred_element_type=jnp.float32)
    y = y + b_ref[...]
    if relu:
        y = jnp.maximum(y, 0.0)
    o_ref[...] = y


def pallas_linear(x, w, b=None, relu=False, tm=None):
    """y = relu_opt(x @ w + b), tiled over rows of x (single block when n is small)."""
    n, cin = x.shape
    cout = w.shape[1]
    b = jnp.zeros((1, cout), jnp.float32) if b is None else b.reshape(1, cout)
    if tm is None:
        tm = n if n <= 1024 else 512          # large row tiles; single block for small n
    npad = pl.cdiv(n, tm) * tm
    xp = x if npad == n else jnp.pad(x, ((0, npad - n), (0, 0)))
    out = pl.pallas_call(
        partial(_linear_kernel, relu=relu),
        out_shape=jax.ShapeDtypeStruct((npad, cout), jnp.float32),
        grid=(npad // tm,),
        in_specs=[
            pl.BlockSpec((tm, cin), lambda i: (i, 0)),
            pl.BlockSpec((cin, cout), lambda i: (0, 0)),
            pl.BlockSpec((1, cout), lambda i: (0, 0)),
        ],
        out_specs=pl.BlockSpec((tm, cout), lambda i: (i, 0)),
        compiler_params=_PARALLEL,
    )(xp, w, b)
    return out if npad == n else out[:n]


def _linear_logsoftmax_kernel(x_ref, w_ref, b_ref, o_ref):
    y = jnp.dot(x_ref[...].astype(MATMUL_DTYPE), w_ref[...].astype(MATMUL_DTYPE),
                preferred_element_type=jnp.float32) + b_ref[...]
    m = jnp.max(y, axis=-1, keepdims=True)
    s = y - m
    lse = jnp.log(jnp.sum(jnp.exp(s), axis=-1, keepdims=True))
    o_ref[...] = s - lse


def pallas_linear_log_softmax(x, w, b, tm=None):
    """log_softmax(x @ w + b, axis=-1) fused in one kernel."""
    n, cin = x.shape
    cout = w.shape[1]
    b = b.reshape(1, cout)
    if tm is None:
        tm = n if n <= 1024 else 512
    npad = pl.cdiv(n, tm) * tm
    xp = x if npad == n else jnp.pad(x, ((0, npad - n), (0, 0)))
    out = pl.pallas_call(
        _linear_logsoftmax_kernel,
        out_shape=jax.ShapeDtypeStruct((npad, cout), jnp.float32),
        grid=(npad // tm,),
        in_specs=[
            pl.BlockSpec((tm, cin), lambda i: (i, 0)),
            pl.BlockSpec((cin, cout), lambda i: (0, 0)),
            pl.BlockSpec((1, cout), lambda i: (0, 0)),
        ],
        out_specs=pl.BlockSpec((tm, cout), lambda i: (i, 0)),
        compiler_params=_PARALLEL,
    )(xp, w, b)
    return out if npad == n else out[:n]


def _pt_attn_kernel(rel_ref, xj_ref, asrcj_ref, adst_ref,
                    w1_ref, b1_ref, w2_ref, b2_ref,
                    a1_ref, c1_ref, a2_ref, c2_ref, o_ref, *, k1):
    """One tile of T destination nodes; online softmax over the k1 neighbour slots.

    Neighbour-major layout: rel_ref (k1,T,3), xj_ref/asrcj_ref (k1,T,C), adst_ref (T,C).
    Every op is a 2-D matmul or elementwise VPU op (no reshapes / cross-sublane reduces).
    """
    adst = adst_ref[...]
    w1 = w1_ref[...].astype(MATMUL_DTYPE); b1 = b1_ref[...]
    w2 = w2_ref[...].astype(MATMUL_DTYPE); b2 = b2_ref[...]
    a1 = a1_ref[...].astype(MATMUL_DTYPE); c1 = c1_ref[...]
    a2 = a2_ref[...].astype(MATMUL_DTYPE); c2 = c2_ref[...]

    m = jnp.zeros(adst.shape, jnp.float32)      # logits >= 0 after the trailing ReLU
    l = jnp.zeros(adst.shape, jnp.float32)
    acc = jnp.zeros(adst.shape, jnp.float32)

    for j in range(k1):                          # small, statically unrolled
        rel = rel_ref[j]                                                     # (T, 3)
        h = jnp.dot(rel.astype(MATMUL_DTYPE), w1,
                    preferred_element_type=jnp.float32) + b1
        h = jnp.maximum(h, 0.0)
        delta = jnp.dot(h.astype(MATMUL_DTYPE), w2,
                        preferred_element_type=jnp.float32) + b2
        delta = jnp.maximum(delta, 0.0)                                      # pos_nn(pos_i-pos_j)

        alpha = adst - asrcj_ref[j]                                          # alpha_i - alpha_j
        g = jnp.dot((alpha + delta).astype(MATMUL_DTYPE), a1,
                    preferred_element_type=jnp.float32) + c1
        g = jnp.maximum(g, 0.0)
        logit = jnp.dot(g.astype(MATMUL_DTYPE), a2,
                        preferred_element_type=jnp.float32) + c2
        logit = jnp.maximum(logit, 0.0)                                      # attn_nn(...)

        # online per-channel softmax over the neighbour axis
        m_new = jnp.maximum(m, logit)
        scale = jnp.exp(m - m_new)
        p = jnp.exp(logit - m_new)
        l = l * scale + p
        acc = acc * scale + p * (xj_ref[j] + delta)                          # alpha*(x_j+delta)
        m = m_new

    o_ref[...] = acc * pl.reciprocal(l, approx=True)                         # aggr='add'


def pallas_pt_attention(rel_t, xj_t, asrcj_t, adst, pos_nn, attn_nn, tm=None):
    """rel_t (K1,N,3), xj_t/asrcj_t (K1,N,C), adst (N,C) -> (N,C)."""
    k1, n, _ = rel_t.shape
    c = adst.shape[1]
    h1 = pos_nn[0]['w'].shape[1]
    h2 = attn_nn[0]['w'].shape[1]
    if tm is None:
        tm = n if n <= 256 else 128              # keep (k1, tm, C) live set modest
    npad = pl.cdiv(n, tm) * tm
    if npad != n:
        pad3 = ((0, 0), (0, npad - n), (0, 0))
        rel_t = jnp.pad(rel_t, pad3)
        xj_t = jnp.pad(xj_t, pad3)
        asrcj_t = jnp.pad(asrcj_t, pad3)
        adst = jnp.pad(adst, ((0, npad - n), (0, 0)))
    out = pl.pallas_call(
        partial(_pt_attn_kernel, k1=k1),
        out_shape=jax.ShapeDtypeStruct((npad, c), jnp.float32),
        grid=(npad // tm,),
        in_specs=[
            pl.BlockSpec((k1, tm, 3), lambda i: (0, i, 0)),
            pl.BlockSpec((k1, tm, c), lambda i: (0, i, 0)),
            pl.BlockSpec((k1, tm, c), lambda i: (0, i, 0)),
            pl.BlockSpec((tm, c), lambda i: (i, 0)),
            pl.BlockSpec((3, h1), lambda i: (0, 0)),
            pl.BlockSpec((1, h1), lambda i: (0, 0)),
            pl.BlockSpec((h1, c), lambda i: (0, 0)),
            pl.BlockSpec((1, c), lambda i: (0, 0)),
            pl.BlockSpec((c, h2), lambda i: (0, 0)),
            pl.BlockSpec((1, h2), lambda i: (0, 0)),
            pl.BlockSpec((h2, c), lambda i: (0, 0)),
            pl.BlockSpec((1, c), lambda i: (0, 0)),
        ],
        out_specs=pl.BlockSpec((tm, c), lambda i: (i, 0)),
        compiler_params=_PARALLEL,
    )(rel_t, xj_t, asrcj_t, adst,
      pos_nn[0]['w'], pos_nn[0]['b'], pos_nn[1]['w'], pos_nn[1]['b'],
      attn_nn[0]['w'], attn_nn[0]['b'], attn_nn[1]['w'], attn_nn[1]['b'])
    return out if npad == n else out[:n]


def _neighbor_max_kernel(xg_ref, o_ref, *, k):
    acc = xg_ref[0]
    for j in range(1, k):
        acc = jnp.maximum(acc, xg_ref[j])
    o_ref[...] = acc


def pallas_neighbor_max(xg_t, tm=None):
    """(K, M, C) -> (M, C) max over the K neighbour slots (fixed-degree scatter-max)."""
    k, m, c = xg_t.shape
    if tm is None:
        tm = m if m <= 1024 else 512
    mpad = pl.cdiv(m, tm) * tm
    if mpad != m:
        xg_t = jnp.pad(xg_t, ((0, 0), (0, mpad - m), (0, 0)))
    out = pl.pallas_call(
        partial(_neighbor_max_kernel, k=k),
        out_shape=jax.ShapeDtypeStruct((mpad, c), jnp.float32),
        grid=(mpad // tm,),
        in_specs=[pl.BlockSpec((k, tm, c), lambda i: (0, i, 0))],
        out_specs=pl.BlockSpec((tm, c), lambda i: (i, 0)),
        compiler_params=_PARALLEL,
    )(xg_t)
    return out if mpad == m else out[:m]


def _knn_interp_kernel(xg_ref, w_ref, o_ref, *, k):
    w0 = w_ref[0]
    num = w0 * xg_ref[0]
    den = w0
    for j in range(1, k):
        wj = w_ref[j]
        num = num + wj * xg_ref[j]
        den = den + wj
    o_ref[...] = num * pl.reciprocal(den, approx=True)


def pallas_knn_interpolate_reduce(xg_t, w_t, tm=None):
    """(K, N, C) features, (K, N) inverse-square-distance weights -> (N, C)."""
    k, n, c = xg_t.shape
    w_t = w_t.reshape(k, n, 1)
    if tm is None:
        tm = n if n <= 1024 else 512
    npad = pl.cdiv(n, tm) * tm
    if npad != n:
        xg_t = jnp.pad(xg_t, ((0, 0), (0, npad - n), (0, 0)))
        w_t = jnp.pad(w_t, ((0, 0), (0, npad - n), (0, 0)), constant_values=1.0)
    out = pl.pallas_call(
        partial(_knn_interp_kernel, k=k),
        out_shape=jax.ShapeDtypeStruct((npad, c), jnp.float32),
        grid=(npad // tm,),
        in_specs=[pl.BlockSpec((k, tm, c), lambda i: (0, i, 0)),
                  pl.BlockSpec((k, tm, 1), lambda i: (0, i, 0))],
        out_specs=pl.BlockSpec((tm, c), lambda i: (i, 0)),
        compiler_params=_PARALLEL,
    )(xg_t, w_t)
    return out if npad == n else out[:n]


# ----------------------------------------------------------------------------
# Plain-JAX glue: knn_graph / knn / fps (index generation only)
# ----------------------------------------------------------------------------
def knn_graph_dense(pos, k):
    """For each node i, its k nearest neighbours j != i (k sources per target)."""
    n = pos.shape[0]
    d = jnp.sum((pos[:, None, :] - pos[None, :, :]) ** 2, axis=-1)
    d = d + jnp.eye(n, dtype=d.dtype) * 1e10
    _, idx = jax.lax.top_k(-d, k)
    return idx.astype(jnp.int32)


def knn_dense(pos_db, pos_q, k):
    """For each query, k nearest points in pos_db. Returns (indices, squared distances)."""
    d = jnp.sum((pos_q[:, None, :] - pos_db[None, :, :]) ** 2, axis=-1)
    neg, idx = jax.lax.top_k(-d, k)
    return idx.astype(jnp.int32), -neg


def fps_dense(pos, n_samples):
    """Farthest point sampling, deterministic start at index 0."""
    n = pos.shape[0]

    def body(i, state):
        dists, idxs = state
        last = idxs[i - 1]
        newd = jnp.sum((pos - pos[last]) ** 2, axis=-1)
        dists = jnp.minimum(dists, newd)
        nxt = jnp.argmax(dists).astype(jnp.int32)
        return dists, idxs.at[i].set(nxt)

    idxs = jnp.zeros((n_samples,), jnp.int32)
    dists = jnp.full((n,), jnp.inf, jnp.float32)
    _, idxs = jax.lax.fori_loop(1, n_samples, body, (dists, idxs))
    return idxs


# ----------------------------------------------------------------------------
# Parameter init (deterministic, synthetic). bn=True folds eval-mode BatchNorm.
# ----------------------------------------------------------------------------
def _dense(key, cin, cout, bias=True, bn=False):
    kw, kb = jax.random.split(key)
    w = jax.random.normal(kw, (cin, cout), jnp.float32) / math.sqrt(cin)
    b = (jax.random.normal(kb, (1, cout), jnp.float32) * 0.02) if bias \
        else jnp.zeros((1, cout), jnp.float32)
    if bn:  # fold eval-mode BatchNorm1d (running mean 0, var 1, affine 1/0) into the layer
        w = w * BN_SCALE
        b = b * BN_SCALE
    return {'w': w, 'b': b}


def _transformer_block_params(key, c):
    ks = jax.random.split(key, 9)
    lin = _dense(ks[2], c, c, bias=False)
    lin_src = _dense(ks[3], c, c, bias=False)
    lin_dst = _dense(ks[4], c, c, bias=False)
    return {
        'lin_in': _dense(ks[0], c, c),
        'lin_out': _dense(ks[1], c, c),
        # lin / lin_src / lin_dst fused along the output axis: one (C, 3C) matmul
        'lin_fused': {'w': jnp.concatenate([lin['w'], lin_src['w'], lin_dst['w']], axis=1)},
        'pos_nn': [_dense(ks[5], 3, 64), _dense(ks[6], 64, c)],
        'attn_nn': [_dense(ks[7], c, 64), _dense(ks[8], 64, c)],
    }


def init_point_transformer_params(key, in_channels, out_channels, dim_model):
    in_channels = max(in_channels, 1)
    n_levels = len(dim_model) - 1
    ks = iter(jax.random.split(key, 6 + 4 * n_levels))
    params = {
        'mlp_input': _dense(next(ks), in_channels, dim_model[0], bn=True),
        'transformer_input': _transformer_block_params(next(ks), dim_model[0]),
        'transition_down': [],
        'transformers_down': [],
        'transition_up': [],
        'transformers_up': [],
        'mlp_summit': _dense(next(ks), dim_model[-1], dim_model[-1]),
        'transformer_summit': _transformer_block_params(next(ks), dim_model[-1]),
        'mlp_out1': _dense(next(ks), dim_model[0], 64),
        'mlp_out2': _dense(next(ks), 64, out_channels),
    }
    for i in range(n_levels):
        params['transition_down'].append(
            _dense(next(ks), dim_model[i], dim_model[i + 1], bn=True))
        params['transformers_down'].append(
            _transformer_block_params(next(ks), dim_model[i + 1]))
        k1, k2 = jax.random.split(next(ks))
        params['transition_up'].append({
            'mlp_sub': _dense(k1, dim_model[i + 1], dim_model[i], bn=True),
            'mlp': _dense(k2, dim_model[i], dim_model[i], bn=True),
        })
        params['transformers_up'].append(
            _transformer_block_params(next(ks), dim_model[i]))
    return params


# ----------------------------------------------------------------------------
# Model forward (mirrors PointTransformer.forward)
# ----------------------------------------------------------------------------
def point_transformer_conv(p, x, pos, nbr_idx):
    n, _ = nbr_idx.shape
    c = p['lin_fused']['w'].shape[1] // 3
    fused = pallas_linear(x, p['lin_fused']['w'])          # [lin | lin_src | lin_dst], no bias
    x_lin = fused[:, :c]
    a_src = fused[:, c:2 * c]
    a_dst = fused[:, 2 * c:]
    # knn_graph edges (j -> i) plus self-loops (PointTransformerConv add_self_loops=True),
    # laid out neighbour-major: (K+1, N)
    nbr_t = jnp.concatenate(
        [nbr_idx, jnp.arange(n, dtype=jnp.int32)[:, None]], axis=1).T
    xj_t = x_lin[nbr_t]                                    # (K+1, N, C)
    asrcj_t = a_src[nbr_t]                                 # (K+1, N, C)
    rel_t = pos[None, :, :] - pos[nbr_t]                   # pos_i - pos_j  (K+1, N, 3)
    return pallas_pt_attention(rel_t, xj_t, asrcj_t, a_dst, p['pos_nn'], p['attn_nn'])


def transformer_block(p, x, pos, nbr_idx):
    x = pallas_linear(x, p['lin_in']['w'], p['lin_in']['b'], relu=True)
    x = point_transformer_conv(p, x, pos, nbr_idx)
    x = pallas_linear(x, p['lin_out']['w'], p['lin_out']['b'], relu=True)
    return x


def point_transformer_forward(params, x, pos, k=4, ratio=0.25):
    # mlp_input: Linear + BatchNorm(eval, folded) + ReLU
    x = pallas_linear(x, params['mlp_input']['w'], params['mlp_input']['b'], relu=True)
    nbr = knn_graph_dense(pos, k)
    x = transformer_block(params['transformer_input'], x, pos, nbr)

    out_x, out_pos, out_nbr = [x], [pos], [nbr]
    n_levels = len(params['transformers_down'])

    # encoder
    for i in range(n_levels):
        n_sub = max(int(math.ceil(ratio * pos.shape[0])), 1)
        idc = fps_dense(pos, n_sub)
        knn_idx, _ = knn_dense(pos, pos[idc], k)                 # k-NN of each cluster centre
        td = params['transition_down'][i]
        x_feat = pallas_linear(x, td['w'], td['b'], relu=True)   # Linear+BN(folded)+ReLU
        x = pallas_neighbor_max(x_feat[knn_idx.T])               # scatter(..., reduce='max')
        pos = pos[idc]
        nbr = knn_graph_dense(pos, k)
        x = transformer_block(params['transformers_down'][i], x, pos, nbr)
        out_x.append(x); out_pos.append(pos); out_nbr.append(nbr)

    # summit
    x = pallas_linear(x, params['mlp_summit']['w'], params['mlp_summit']['b'], relu=True)
    x = transformer_block(params['transformer_summit'], x, out_pos[-1], out_nbr[-1])

    # decoder
    for i in range(n_levels):
        tu = params['transition_up'][-i - 1]
        x_skip = out_x[-i - 2]
        pos_hi, pos_lo = out_pos[-i - 2], out_pos[-i - 1]
        x_sub = pallas_linear(x, tu['mlp_sub']['w'], tu['mlp_sub']['b'], relu=True)
        idx3, d2 = knn_dense(pos_lo, pos_hi, 3)                  # knn_interpolate, k=3
        w = 1.0 / jnp.maximum(d2, 1e-16)
        x_interp = pallas_knn_interpolate_reduce(x_sub[idx3.T], w.T)
        x = pallas_linear(x_skip, tu['mlp']['w'], tu['mlp']['b'], relu=True) + x_interp
        x = transformer_block(params['transformers_up'][-i - 1], x, pos_hi, out_nbr[-i - 2])

    # mlp_output: Linear + ReLU + Linear, then log_softmax (last Linear fused with softmax)
    h = pallas_linear(x, params['mlp_out1']['w'], params['mlp_out1']['b'], relu=True)
    return pallas_linear_log_softmax(h, params['mlp_out2']['w'], params['mlp_out2']['b'])


# ----------------------------------------------------------------------------
if __name__ == "__main__":
    key = jax.random.PRNGKey(0)
    kx, kp, kparam = jax.random.split(key, 3)

    N = 64
    in_channels, out_channels = 3, 6
    dim_model = [32, 64]
    k = 4

    x = jax.random.normal(kx, (N, in_channels), jnp.float32)
    pos = jax.random.normal(kp, (N, 3), jnp.float32)

    params = init_point_transformer_params(kparam, in_channels, out_channels, dim_model)

    fwd = jax.jit(partial(point_transformer_forward, k=k, ratio=0.25))
    out = fwd(params, x, pos)
    out = jax.block_until_ready(out)

    assert out.shape == (N, out_channels), out.shape
    assert bool(jnp.all(jnp.isfinite(out)))
    print("KERNEL_OK")
</pallas_src>

<mosaic_0001>
module attributes {stable_mosaic.version = 11 : i64} {
  func.func @_linear_kernel(%arg0: i32, %arg1: memref<64x3xf32, #tpu.memory_space<vmem>>, %arg2: memref<3x32xf32, #tpu.memory_space<vmem>>, %arg3: memref<1x32xf32, #tpu.memory_space<vmem>>, %arg4: memref<64x32xf32, #tpu.memory_space<vmem>>) attributes {dimension_semantics = [#tpu.dimension_semantics<parallel>], iteration_bounds = array<i64: 1>, scalar_prefetch = 0 : i64, scratch_operands = 0 : i64, tpu.core_type = #tpu.core_type<tc>, window_params = [{transform_indices = @transform_0, window_bounds = array<i64: 64, 3>}, {pipeline_mode = #tpu.pipeline_mode<synchronous>, transform_indices = @transform_1, window_bounds = array<i64: 3, 32>}, {pipeline_mode = #tpu.pipeline_mode<synchronous>, transform_indices = @transform_2, window_bounds = array<i64: 1, 32>}, {transform_indices = @transform_3, window_bounds = array<i64: 64, 32>}]} {
    %c0 = arith.constant 0 : index
    %c0_0 = arith.constant 0 : index
    %0 = vector.load %arg1[%c0, %c0_0] : memref<64x3xf32, #tpu.memory_space<vmem>>, vector<64x3xf32>
    %1 = arith.truncf %0 : vector<64x3xf32> to vector<64x3xbf16>
    %c0_1 = arith.constant 0 : index
    %c0_2 = arith.constant 0 : index
    %2 = vector.load %arg2[%c0_1, %c0_2] : memref<3x32xf32, #tpu.memory_space<vmem>>, vector<3x32xf32>
    %3 = arith.truncf %2 : vector<3x32xf32> to vector<3x32xbf16>
    %cst = arith.constant dense<0.000000e+00> : vector<64x32xf32>
    %4 = tpu.matmul %1, %3, %cst {dimension_numbers = #tpu.dot_dimension_numbers<[1], [0], [0], [1], [0, 0, 1, 1], [], []>} : vector<64x3xbf16>, vector<3x32xbf16>, vector<64x32xf32> -> vector<64x32xf32>
    %c0_3 = arith.constant 0 : index
    %c0_4 = arith.constant 0 : index
    %5 = vector.load %arg3[%c0_3, %c0_4] : memref<1x32xf32, #tpu.memory_space<vmem>>, vector<1x32xf32>
    %6 = vector.broadcast %5 : vector<1x32xf32> to vector<64x32xf32>
    %7 = arith.addf %4, %6 : vector<64x32xf32>
    %cst_5 = arith.constant 0.000000e+00 : f32
    %8 = vector.broadcast %cst_5 : f32 to vector<64x32xf32>
    %9 = arith.maximumf %7, %8 : vector<64x32xf32>
    %c0_6 = arith.constant 0 : index
    %c0_7 = arith.constant 0 : index
    %10 = vector.load %arg4[%c0_6, %c0_7] : memref<64x32xf32, #tpu.memory_space<vmem>>, vector<64x32xf32>
    tpu.vector_store %arg4[%c0_6, %c0_7], %9 {strides = array<i32>} : memref<64x32xf32, #tpu.memory_space<vmem>>, vector<64x32xf32>,
    return
  }
  func.func @transform_0(%arg0: i32) -> (i32, i32) {
    %c0_i32 = arith.constant 0 : i32
    %c0_i32_0 = arith.constant 0 : i32
    return %arg0, %c0_i32 : i32, i32
  }
  func.func @transform_1(%arg0: i32) -> (i32, i32) {
    %c0_i32 = arith.constant 0 : i32
    %c0_i32_0 = arith.constant 0 : i32
    %c0_i32_1 = arith.constant 0 : i32
    return %c0_i32, %c0_i32_0 : i32, i32
  }
  func.func @transform_2(%arg0: i32) -> (i32, i32) {
    %c0_i32 = arith.constant 0 : i32
    %c0_i32_0 = arith.constant 0 : i32
    %c0_i32_1 = arith.constant 0 : i32
    return %c0_i32, %c0_i32_0 : i32, i32
  }
  func.func @transform_3(%arg0: i32) -> (i32, i32) {
    %c0_i32 = arith.constant 0 : i32
    %c0_i32_0 = arith.constant 0 : i32
    return %arg0, %c0_i32 : i32, i32
  }
}

module attributes {stable_mosaic.version = 11 : i64} {
  func.func @_linear_kernel(%arg0: i32, %arg1: memref<64x32xf32, #tpu.memory_space<vmem>>, %arg2: memref<32x32xf32, #tpu.memory_space<vmem>>, %arg3: memref<1x32xf32, #tpu.memory_space<vmem>>, %arg4: memref<64x32xf32, #tpu.memory_space<vmem>>) attributes {dimension_semantics = [#tpu.dimension_semantics<parallel>], iteration_bounds = array<i64: 1>, scalar_prefetch = 0 : i64, scratch_operands = 0 : i64, tpu.core_type = #tpu.core_type<tc>, window_params = [{transform_indices = @transform_0, window_bounds = array<i64: 64, 32>}, {pipeline_mode = #tpu.pipeline_mode<synchronous>, transform_indices = @transform_1, window_bounds = array<i64: 32, 32>}, {pipeline_mode = #tpu.pipeline_mode<synchronous>, transform_indices = @transform_2, window_bounds = array<i64: 1, 32>}, {transform_indices = @transform_3, window_bounds = array<i64: 64, 32>}]} {
    %c0 = arith.constant 0 : index
    %c0_0 = arith.constant 0 : index
    %0 = vector.load %arg1[%c0, %c0_0] : memref<64x32xf32, #tpu.memory_space<vmem>>, vector<64x32xf32>
    %1 = arith.truncf %0 : vector<64x32xf32> to vector<64x32xbf16>
    %c0_1 = arith.constant 0 : index
    %c0_2 = arith.constant 0 : index
    %2 = vector.load %arg2[%c0_1, %c0_2] : memref<32x32xf32, #tpu.memory_space<vmem>>, vector<32x32xf32>
    %3 = arith.truncf %2 : vector<32x32xf32> to vector<32x32xbf16>
    %cst = arith.constant dense<0.000000e+00> : vector<64x32xf32>
    %4 = tpu.matmul %1, %3, %cst {dimension_numbers = #tpu.dot_dimension_numbers<[1], [0], [0], [1], [0, 0, 1, 1], [], []>} : vector<64x32xbf16>, vector<32x32xbf16>, vector<64x32xf32> -> vector<64x32xf32>
    %c0_3 = arith.constant 0 : index
    %c0_4 = arith.constant 0 : index
    %5 = vector.load %arg3[%c0_3, %c0_4] : memref<1x32xf32, #tpu.memory_space<vmem>>, vector<1x32xf32>
    %6 = vector.broadcast %5 : vector<1x32xf32> to vector<64x32xf32>
    %7 = arith.addf %4, %6 : vector<64x32xf32>
    %cst_5 = arith.constant 0.000000e+00 : f32
    %8 = vector.broadcast %cst_5 : f32 to vector<64x32xf32>
    %9 = arith.maximumf %7, %8 : vector<64x32xf32>
    %c0_6 = arith.constant 0 : index
    %c0_7 = arith.constant 0 : index
    %10 = vector.load %arg4[%c0_6, %c0_7] : memref<64x32xf32, #tpu.memory_space<vmem>>, vector<64x32xf32>
    tpu.vector_store %arg4[%c0_6, %c0_7], %9 {strides = array<i32>} : memref<64x32xf32, #tpu.memory_space<vmem>>, vector<64x32xf32>,
    return
  }
  func.func @transform_0(%arg0: i32) -> (i32, i32) {
    %c0_i32 = arith.constant 0 : i32
    %c0_i32_0 = arith.constant 0 : i32
    return %arg0, %c0_i32 : i32, i32
  }
  func.func @transform_1(%arg0: i32) -> (i32, i32) {
    %c0_i32 = arith.constant 0 : i32
    %c0_i32_0 = arith.constant 0 : i32
    %c0_i32_1 = arith.constant 0 : i32
    return %c0_i32, %c0_i32_0 : i32, i32
  }
  func.func @transform_2(%arg0: i32) -> (i32, i32) {
    %c0_i32 = arith.constant 0 : i32
    %c0_i32_0 = arith.constant 0 : i32
    %c0_i32_1 = arith.constant 0 : i32
    return %c0_i32, %c0_i32_0 : i32, i32
  }
  func.func @transform_3(%arg0: i32) -> (i32, i32) {
    %c0_i32 = arith.constant 0 : i32
    %c0_i32_0 = arith.constant 0 : i32
    return %arg0, %c0_i32 : i32, i32
  }
}

module attributes {stable_mosaic.version = 11 : i64} {
  func.func @_linear_kernel(%arg0: i32, %arg1: memref<64x32xf32, #tpu.memory_space<vmem>>, %arg2: memref<32x96xf32, #tpu.memory_space<vmem>>, %arg3: memref<1x96xf32, #tpu.memory_space<vmem>>, %arg4: memref<64x96xf32, #tpu.memory_space<vmem>>) attributes {dimension_semantics = [#tpu.dimension_semantics<parallel>], iteration_bounds = array<i64: 1>, scalar_prefetch = 0 : i64, scratch_operands = 0 : i64, tpu.core_type = #tpu.core_type<tc>, window_params = [{transform_indices = @transform_0, window_bounds = array<i64: 64, 32>}, {pipeline_mode = #tpu.pipeline_mode<synchronous>, transform_indices = @transform_1, window_bounds = array<i64: 32, 96>}, {pipeline_mode = #tpu.pipeline_mode<synchronous>, transform_indices = @transform_2, window_bounds = array<i64: 1, 96>}, {transform_indices = @transform_3, window_bounds = array<i64: 64, 96>}]} {
    %c0 = arith.constant 0 : index
    %c0_0 = arith.constant 0 : index
    %0 = vector.load %arg1[%c0, %c0_0] : memref<64x32xf32, #tpu.memory_space<vmem>>, vector<64x32xf32>
    %1 = arith.truncf %0 : vector<64x32xf32> to vector<64x32xbf16>
    %c0_1 = arith.constant 0 : index
    %c0_2 = arith.constant 0 : index
    %2 = vector.load %arg2[%c0_1, %c0_2] : memref<32x96xf32, #tpu.memory_space<vmem>>, vector<32x96xf32>
    %3 = arith.truncf %2 : vector<32x96xf32> to vector<32x96xbf16>
    %cst = arith.constant dense<0.000000e+00> : vector<64x96xf32>
    %4 = tpu.matmul %1, %3, %cst {dimension_numbers = #tpu.dot_dimension_numbers<[1], [0], [0], [1], [0, 0, 1, 1], [], []>} : vector<64x32xbf16>, vector<32x96xbf16>, vector<64x96xf32> -> vector<64x96xf32>
    %c0_3 = arith.constant 0 : index
    %c0_4 = arith.constant 0 : index
    %5 = vector.load %arg3[%c0_3, %c0_4] : memref<1x96xf32, #tpu.memory_space<vmem>>, vector<1x96xf32>
    %6 = vector.broadcast %5 : vector<1x96xf32> to vector<64x96xf32>
    %7 = arith.addf %4, %6 : vector<64x96xf32>
    %c0_5 = arith.constant 0 : index
    %c0_6 = arith.constant 0 : index
    %8 = vector.load %arg4[%c0_5, %c0_6] : memref<64x96xf32, #tpu.memory_space<vmem>>, vector<64x96xf32>
    tpu.vector_store %arg4[%c0_5, %c0_6], %7 {strides = array<i32>} : memref<64x96xf32, #tpu.memory_space<vmem>>, vector<64x96xf32>,
    return
  }
  func.func @transform_0(%arg0: i32) -> (i32, i32) {
    %c0_i32 = arith.constant 0 : i32
    %c0_i32_0 = arith.constant 0 : i32
    return %arg0, %c0_i32 : i32, i32
  }
  func.func @transform_1(%arg0: i32) -> (i32, i32) {
    %c0_i32 = arith.constant 0 : i32
    %c0_i32_0 = arith.constant 0 : i32
    %c0_i32_1 = arith.constant 0 : i32
    return %c0_i32, %c0_i32_0 : i32, i32
  }
  func.func @transform_2(%arg0: i32) -> (i32, i32) {
    %c0_i32 = arith.constant 0 : i32
    %c0_i32_0 = arith.constant 0 : i32
    %c0_i32_1 = arith.constant 0 : i32
    return %c0_i32, %c0_i32_0 : i32, i32
  }
  func.func @transform_3(%arg0: i32) -> (i32, i32) {
    %c0_i32 = arith.constant 0 : i32
    %c0_i32_0 = arith.constant 0 : i32
    return %arg0, %c0_i32 : i32, i32
  }
}

module attributes {stable_mosaic.version = 11 : i64} {
  func.func @_pt_attn_kernel(%arg0: i32, %arg1: memref<5x64x3xf32, #tpu.memory_space<vmem>>, %arg2: memref<5x64x32xf32, #tpu.memory_space<vmem>>, %arg3: memref<5x64x32xf32, #tpu.memory_space<vmem>>, %arg4: memref<64x32xf32, #tpu.memory_space<vmem>>, %arg5: memref<3x64xf32, #tpu.memory_space<vmem>>, %arg6: memref<1x64xf32, #tpu.memory_space<vmem>>, %arg7: memref<64x32xf32, #tpu.memory_space<vmem>>, %arg8: memref<1x32xf32, #tpu.memory_space<vmem>>, %arg9: memref<32x64xf32, #tpu.memory_space<vmem>>, %arg10: memref<1x64xf32, #tpu.memory_space<vmem>>, %arg11: memref<64x32xf32, #tpu.memory_space<vmem>>, %arg12: memref<1x32xf32, #tpu.memory_space<vmem>>, %arg13: memref<64x32xf32, #tpu.memory_space<vmem>>) attributes {dimension_semantics = [#tpu.dimension_semantics<parallel>], iteration_bounds = array<i64: 1>, scalar_prefetch = 0 : i64, scratch_operands = 0 : i64, tpu.core_type = #tpu.core_type<tc>, window_params = [{transform_indices = @transform_0, window_bounds = array<i64: 5, 64, 3>}, {transform_indices = @transform_1, window_bounds = array<i64: 5, 64, 32>}, {transform_indices = @transform_2, window_bounds = array<i64: 5, 64, 32>}, {transform_indices = @transform_3, window_bounds = array<i64: 64, 32>}, {pipeline_mode = #tpu.pipeline_mode<synchronous>, transform_indices = @transform_4, window_bounds = array<i64: 3, 64>}, {pipeline_mode = #tpu.pipeline_mode<synchronous>, transform_indices = @transform_5, window_bounds = array<i64: 1, 64>}, {pipeline_mode = #tpu.pipeline_mode<synchronous>, transform_indices = @transform_6, window_bounds = array<i64: 64, 32>}, {pipeline_mode = #tpu.pipeline_mode<synchronous>, transform_indices = @transform_7, window_bounds = array<i64: 1, 32>}, {pipeline_mode = #tpu.pipeline_mode<synchronous>, transform_indices = @transform_8, window_bounds = array<i64: 32, 64>}, {pipeline_mode = #tpu.pipeline_mode<synchronous>, transform_indices = @transform_9, window_bounds = array<i64: 1, 64>}, {pipeline_mode = #tpu.pipeline_mode<synchronous>, transform_indices = @transform_10, window_bounds = array<i64: 64, 32>}, {pipeline_mode = #tpu.pipeline_mode<synchronous>, transform_indices = @transform_11, window_bounds = array<i64: 1, 32>}, {transform_indices = @transform_12, window_bounds = array<i64: 64, 32>}]} {
    %c0 = arith.constant 0 : index
    %c0_0 = arith.constant 0 : index
    %0 = vector.load %arg4[%c0, %c0_0] : memref<64x32xf32, #tpu.memory_space<vmem>>, vector<64x32xf32>
    %c0_1 = arith.constant 0 : index
    %c0_2 = arith.constant 0 : index
    %1 = vector.load %arg5[%c0_1, %c0_2] : memref<3x64xf32, #tpu.memory_space<vmem>>, vector<3x64xf32>
    %2 = arith.truncf %1 : vector<3x64xf32> to vector<3x64xbf16>
    %c0_3 = arith.constant 0 : index
    %c0_4 = arith.constant 0 : index
    %3 = vector.load %arg6[%c0_3, %c0_4] : memref<1x64xf32, #tpu.memory_space<vmem>>, vector<1x64xf32>
    %c0_5 = arith.constant 0 : index
    %c0_6 = arith.constant 0 : index
    %4 = vector.load %arg7[%c0_5, %c0_6] : memref<64x32xf32, #tpu.memory_space<vmem>>, vector<64x32xf32>
    %5 = arith.truncf %4 : vector<64x32xf32> to vector<64x32xbf16>
    %c0_7 = arith.constant 0 : index
    %c0_8 = arith.constant 0 : index
    %6 = vector.load %arg8[%c0_7, %c0_8] : memref<1x32xf32, #tpu.memory_space<vmem>>, vector<1x32xf32>
    %c0_9 = arith.constant 0 : index
    %c0_10 = arith.constant 0 : index
    %7 = vector.load %arg9[%c0_9, %c0_10] : memref<32x64xf32, #tpu.memory_space<vmem>>, vector<32x64xf32>
    %8 = arith.truncf %7 : vector<32x64xf32> to vector<32x64xbf16>
    %c0_11 = arith.constant 0 : index
    %c0_12 = arith.constant 0 : index
    %9 = vector.load %arg10[%c0_11, %c0_12] : memref<1x64xf32, #tpu.memory_space<vmem>>, vector<1x64xf32>
    %c0_13 = arith.constant 0 : index
    %c0_14 = arith.constant 0 : index
    %10 = vector.load %arg11[%c0_13, %c0_14] : memref<64x32xf32, #tpu.memory_space<vmem>>, vector<64x32xf32>
    %11 = arith.truncf %10 : vector<64x32xf32> to vector<64x32xbf16>
    %c0_15 = arith.constant 0 : index
    %c0_16 = arith.constant 0 : index
    %12 = vector.load %arg12[%c0_15, %c0_16] : memref<1x32xf32, #tpu.memory_space<vmem>>, vector<1x32xf32>
    %cst = arith.constant 0.000000e+00 : f32
    %13 = vector.broadcast %cst : f32 to vector<64x32xf32>
    %cst_17 = arith.constant 0.000000e+00 : f32
    %14 = vector.broadcast %cst_17 : f32 to vector<64x32xf32>
    %cst_18 = arith.constant 0.000000e+00 : f32
    %15 = vector.broadcast %cst_18 : f32 to vector<64x32xf32>
    %c0_19 = arith.constant 0 : index
    %c0_20 = arith.constant 0 : index
    %c0_21 = arith.constant 0 : index
    %16 = vector.load %arg1[%c0_19, %c0_20, %c0_21] : memref<5x64x3xf32, #tpu.memory_space<vmem>>, vector<1x64x3xf32>
    %17 = vector.shape_cast %16 : vector<1x64x3xf32> to vector<64x3xf32>
    %18 = arith.truncf %17 : vector<64x3xf32> to vector<64x3xbf16>
    %cst_22 = arith.constant dense<0.000000e+00> : vector<64x64xf32>
    %19 = tpu.matmul %18, %2, %cst_22 {dimension_numbers = #tpu.dot_dimension_numbers<[1], [0], [0], [1], [0, 0, 1, 1], [], []>} : vector<64x3xbf16>, vector<3x64xbf16>, vector<64x64xf32> -> vector<64x64xf32>
    %20 = vector.broadcast %3 : vector<1x64xf32> to vector<64x64xf32>
    %21 = arith.addf %19, %20 : vector<64x64xf32>
    %cst_23 = arith.constant 0.000000e+00 : f32
    %22 = vector.broadcast %cst_23 : f32 to vector<64x64xf32>
    %23 = arith.maximumf %21, %22 : vector<64x64xf32>
    %24 = arith.truncf %23 : vector<64x64xf32> to vector<64x64xbf16>
    %cst_24 = arith.constant dense<0.000000e+00> : vector<64x32xf32>
    %25 = tpu.matmul %24, %5, %cst_24 {dimension_numbers = #tpu.dot_dimension_numbers<[1], [0], [0], [1], [0, 0, 1, 1], [], []>} : vector<64x64xbf16>, vector<64x32xbf16>, vector<64x32xf32> -> vector<64x32xf32>
    %26 = vector.broadcast %6 : vector<1x32xf32> to vector<64x32xf32>
    %27 = arith.addf %25, %26 : vector<64x32xf32>
    %cst_25 = arith.constant 0.000000e+00 : f32
    %28 = vector.broadcast %cst_25 : f32 to vector<64x32xf32>
    %29 = arith.maximumf %27, %28 : vector<64x32xf32>
    %c0_26 = arith.constant 0 : index
    %c0_27 = arith.constant 0 : index
    %c0_28 = arith.constant 0 : index
    %30 = vector.load %arg3[%c0_26, %c0_27, %c0_28] : memref<5x64x32xf32, #tpu.memory_space<vmem>>, vector<1x64x32xf32>
    %31 = vector.shape_cast %30 : vector<1x64x32xf32> to vector<64x32xf32>
    %32 = arith.subf %0, %31 : vector<64x32xf32>
    %33 = arith.addf %32, %29 : vector<64x32xf32>
    %34 = arith.truncf %33 : vector<64x32xf32> to vector<64x32xbf16>
    %cst_29 = arith.constant dense<0.000000e+00> : vector<64x64xf32>
    %35 = tpu.matmul %34, %8, %cst_29 {dimension_numbers = #tpu.dot_dimension_numbers<[1], [0], [0], [1], [0, 0, 1, 1], [], []>} : vector<64x32xbf16>, vector<32x64xbf16>, vector<64x64xf32> -> vector<64x64xf32>
    %36 = vector.broadcast %9 : vector<1x64xf32> to vector<64x64xf32>
    %37 = arith.addf %35, %36 : vector<64x64xf32>
    %cst_30 = arith.constant 0.000000e+00 : f32
    %38 = vector.broadcast %cst_30 : f32 to vector<64x64xf32>
    %39 = arith.maximumf %37, %38 : vector<64x64xf32>
    %40 = arith.truncf %39 : vector<64x64xf32> to vector<64x64xbf16>
    %cst_31 = arith.constant dense<0.000000e+00> : vector<64x32xf32>
    %41 = tpu.matmul %40, %11, %cst_31 {dimension_numbers = #tpu.dot_dimension_numbers<[1], [0], [0], [1], [0, 0, 1, 1], [], []>} : vector<64x64xbf16>, vector<64x32xbf16>, vector<64x32xf32> -> vector<64x32xf32>
    %42 = vector.broadcast %12 : vector<1x32xf32> to vector<64x32xf32>
    %43 = arith.addf %41, %42 : vector<64x32xf32>
    %cst_32 = arith.constant 0.000000e+00 : f32
    %44 = vector.broadcast %cst_32 : f32 to vector<64x32xf32>
    %45 = arith.maximumf %43, %44 : vector<64x32xf32>
    %46 = arith.maximumf %13, %45 : vector<64x32xf32>
    %47 = arith.subf %13, %46 : vector<64x32xf32>
    %48 = math.exp %47 : vector<64x32xf32>
    %49 = arith.subf %45, %46 : vector<64x32xf32>
    %50 = math.exp %49 : vector<64x32xf32>
    %51 = arith.mulf %14, %48 : vector<64x32xf32>
    %52 = arith.addf %51, %50 : vector<64x32xf32>
    %53 = arith.mulf %15, %48 : vector<64x32xf32>
    %c0_33 = arith.constant 0 : index
    %c0_34 = arith.constant 0 : index
    %c0_35 = arith.constant 0 : index
    %54 = vector.load %arg2[%c0_33, %c0_34, %c0_35] : memref<5x64x32xf32, #tpu.memory_space<vmem>>, vector<1x64x32xf32>
    %55 = vector.shape_cast %54 : vector<1x64x32xf32> to vector<64x32xf32>
    %56 = arith.addf %55, %29 : vector<64x32xf32>
    %57 = arith.mulf %50, %56 : vector<64x32xf32>
    %58 = arith.addf %53, %57 : vector<64x32xf32>
    %c1 = arith.constant 1 : index
    %c0_36 = arith.constant 0 : index
    %c0_37 = arith.constant 0 : index
    %59 = vector.load %arg1[%c1, %c0_36, %c0_37] : memref<5x64x3xf32, #tpu.memory_space<vmem>>, vector<1x64x3xf32>
    %60 = vector.shape_cast %59 : vector<1x64x3xf32> to vector<64x3xf32>
    %61 = arith.truncf %60 : vector<64x3xf32> to vector<64x3xbf16>
    %cst_38 = arith.constant dense<0.000000e+00> : vector<64x64xf32>
    %62 = tpu.matmul %61, %2, %cst_38 {dimension_numbers = #tpu.dot_dimension_numbers<[1], [0], [0], [1], [0, 0, 1, 1], [], []>} : vector<64x3xbf16>, vector<3x64xbf16>, vector<64x64xf32> -> vector<64x64xf32>
    %63 = vector.broadcast %3 : vector<1x64xf32> to vector<64x64xf32>
    %64 = arith.addf %62, %63 : vector<64x64xf32>
    %cst_39 = arith.constant 0.000000e+00 : f32
    %65 = vector.broadcast %cst_39 : f32 to vector<64x64xf32>
    %66 = arith.maximumf %64, %65 : vector<64x64xf32>
    %67 = arith.truncf %66 : vector<64x64xf32> to vector<64x64xbf16>
    %cst_40 = arith.constant dense<0.000000e+00> : vector<64x32xf32>
    %68 = tpu.matmul %67, %5, %cst_40 {dimension_numbers = #tpu.dot_dimension_numbers<[1], [0], [0], [1], [0, 0, 1, 1], [], []>} : vector<64x64xbf16>, vector<64x32xbf16>, vector<64x32xf32> -> vector<64x32xf32>
    %69 = vector.broadcast %6 : vector<1x32xf32> to vector<64x32xf32>
    %70 = arith.addf %68, %69 : vector<64x32xf32>
    %cst_41 = arith.constant 0.000000e+00 : f32
    %71 = vector.broadcast %cst_41 : f32 to vector<64x32xf32>
    %72 = arith.maximumf %70, %71 : vector<64x32xf32>
    %c1_42 = arith.constant 1 : index
    %c0_43 = arith.constant 0 : index
    %c0_44 = arith.constant 0 : index
    %73 = vector.load %arg3[%c1_42, %c0_43, %c0_44] : memref<5x64x32xf32, #tpu.memory_space<vmem>>, vector<1x64x32xf32>
    %74 = vector.shape_cast %73 : vector<1x64x32xf32> to vector<64x32xf32>
    %75 = arith.subf %0, %74 : vector<64x32xf32>
    %76 = arith.addf %75, %72 : vector<64x32xf32>
    %77 = arith.truncf %76 : vector<64x32xf32> to vector<64x32xbf16>
    %cst_45 = arith.constant dense<0.000000e+00> : vector<64x64xf32>
    %78 = tpu.matmul %77, %8, %cst_45 {dimension_numbers = #tpu.dot_dimension_numbers<[1], [0], [0], [1], [0, 0, 1, 1], [], []>} : vector<64x32xbf16>, vector<32x64xbf16>, vector<64x64xf32> -> vector<64x64xf32>
    %79 = vector.broadcast %9 : vector<1x64xf32> to vector<64x64xf32>
    %80 = arith.addf %78, %79 : vector<64x64xf32>
    %cst_46 = arith.constant 0.000000e+00 : f32
    %81 = vector.broadcast %cst_46 : f32 to vector<64x64xf32>
    %82 = arith.maximumf %80, %81 : vector<64x64xf32>
    %83 = arith.truncf %82 : vector<64x64xf32> to vector<64x64xbf16>
    %cst_47 = arith.constant dense<0.000000e+00> : vector<64x32xf32>
    %84 = tpu.matmul %83, %11, %cst_47 {dimension_numbers = #tpu.dot_dimension_numbers<[1], [0], [0], [1], [0, 0, 1, 1], [], []>} : vector<64x64xbf16>, vector<64x32xbf16>, vector<64x32xf32> -> vector<64x32xf32>
    %85 = vector.broadcast %12 : vector<1x32xf32> to vector<64x32xf32>
    %86 = arith.addf %84, %85 : vector<64x32xf32>
    %cst_48 = arith.constant 0.000000e+00 : f32
    %87 = vector.broadcast %cst_48 : f32 to vector<64x32xf32>
    %88 = arith.maximumf %86, %87 : vector<64x32xf32>
    %89 = arith.maximumf %46, %88 : vector<64x32xf32>
    %90 = arith.subf %46, %89 : vector<64x32xf32>
    %91 = math.exp %90 : vector<64x32xf32>
    %92 = arith.subf %88, %89 : vector<64x32xf32>
    %93 = math.exp %92 : vector<64x32xf32>
    %94 = arith.mulf %52, %91 : vector<64x32xf32>
    %95 = arith.addf %94, %93 : vector<64x32xf32>
    %96 = arith.mulf %58, %91 : vector<64x32xf32>
    %c1_49 = arith.constant 1 : index
    %c0_50 = arith.constant 0 : index
    %c0_51 = arith.constant 0 : index
    %97 = vector.load %arg2[%c1_49, %c0_50, %c0_51] : memref<5x64x32xf32, #tpu.memory_space<vmem>>, vector<1x64x32xf32>
    %98 = vector.shape_cast %97 : vector<1x64x32xf32> to vector<64x32xf32>
    %99 = arith.addf %98, %72 : vector<64x32xf32>
    %100 = arith.mulf %93, %99 : vector<64x32xf32>
    %101 = arith.addf %96, %100 : vector<64x32xf32>
    %c2 = arith.constant 2 : index
    %c0_52 = arith.constant 0 : index
    %c0_53 = arith.constant 0 : index
    %102 = vector.load %arg1[%c2, %c0_52, %c0_53] : memref<5x64x3xf32, #tpu.memory_space<vmem>>, vector<1x64x3xf32>
    %103 = vector.shape_cast %102 : vector<1x64x3xf32> to vector<64x3xf32>
    %104 = arith.truncf %103 : vector<64x3xf32> to vector<64x3xbf16>
    %cst_54 = arith.constant dense<0.000000e+00> : vector<64x64xf32>
    %105 = tpu.matmul %104, %2, %cst_54 {dimension_numbers = #tpu.dot_dimension_numbers<[1], [0], [0], [1], [0, 0, 1, 1], [], []>} : vector<64x3xbf16>, vector<3x64xbf16>, vector<64x64xf32> -> vector<64x64xf32>
    %106 = vector.broadcast %3 : vector<1x64xf32> to vector<64x64xf32>
    %107 = arith.addf %105, %106 : vector<64x64xf32>
    %cst_55 = arith.constant 0.000000e+00 : f32
    %108 = vector.broadcast %cst_55 : f32 to vector<64x64xf32>
    %109 = arith.maximumf %107, %108 : vector<64x64xf32>
    %110 = arith.truncf %109 : vector<64x64xf32> to vector<64x64xbf16>
    %cst_56 = arith.constant dense<0.000000e+00> : vector<64x32xf32>
    %111 = tpu.matmul %110, %5, %cst_56 {dimension_numbers = #tpu.dot_dimension_numbers<[1], [0], [0], [1], [0, 0, 1, 1], [], []>} : vector<64x64xbf16>, vector<64x32xbf16>, vector<64x32xf32> -> vector<64x32xf32>
    %112 = vector.broadcast %6 : vector<1x32xf32> to vector<64x32xf32>
    %113 = arith.addf %111, %112 : vector<64x32xf32>
    %cst_57 = arith.constant 0.000000e+00 : f32
    %114 = vector.broadcast %cst_57 : f32 to vector<64x32xf32>
    %115 = arith.maximumf %113, %114 : vector<64x32xf32>
    %c2_58 = arith.constant 2 : index
    %c0_59 = arith.constant 0 : index
    %c0_60 = arith.constant 0 : index
    %116 = vector.load %arg3[%c2_58, %c0_59, %c0_60] : memref<5x64x32xf32, #tpu.memory_space<vmem>>, vector<1x64x32xf32>
    %117 = vector.shape_cast %116 : vector<1x64x32xf32> to vector<64x32xf32>
    %118 = arith.subf %0, %117 : vector<64x32xf32>
    %119 = arith.addf %118, %115 : vector<64x32xf32>
    %120 = arith.truncf %119 : vector<64x32xf32> to vector<64x32xbf16>
    %cst_61 = arith.constant dense<0.000000e+00> : vector<64x64xf32>
    %121 = tpu.matmul %120, %8, %cst_61 {dimension_numbers = #tpu.dot_dimension_numbers<[1], [0], [0], [1], [0, 0, 1, 1], [], []>} : vector<64x32xbf16>, vector<32x64xbf16>, vector<64x64xf32> -> vector<64x64xf32>
    %122 = vector.broadcast %9 : vector<1x64xf32> to vector<64x64xf32>
    %123 = arith.addf %121, %122 : vector<64x64xf32>
    %cst_62 = arith.constant 0.000000e+00 : f32
    %124 = vector.broadcast %cst_62 : f32 to vector<64x64xf32>
    %125 = arith.maximumf %123, %124 : vector<64x64xf32>
    %126 = arith.truncf %125 : vector<64x64xf32> to vector<64x64xbf16>
    %cst_63 = arith.constant dense<0.000000e+00> : vector<64x32xf32>
    %127 = tpu.matmul %126, %11, %cst_63 {dimension_numbers = #tpu.dot_dimension_numbers<[1], [0], [0], [1], [0, 0, 1, 1], [], []>} : vector<64x64xbf16>, vector<64x32xbf16>, vector<64x32xf32> -> vector<64x32xf32>
    %128 = vector.broadcast %12 : vector<1x32xf32> to vector<64x32xf32>
    %129 = arith.addf %127, %128 : vector<64x32xf32>
    %cst_64 = arith.constant 0.000000e+00 : f32
    %130 = vector.broadcast %cst_64 : f32 to vector<64x32xf32>
    %131 = arith.maximumf %129, %130 : vector<64x32xf32>
    %132 = arith.maximumf %89, %131 : vector<64x32xf32>
    %133 = arith.subf %89, %132 : vector<64x32xf32>
    %134 = math.exp %133 : vector<64x32xf32>
    %135 = arith.subf %131, %132 : vector<64x32xf32>
    %136 = math.exp %135 : vector<64x32xf32>
    %137 = arith.mulf %95, %134 : vector<64x32xf32>
    %138 = arith.addf %137, %136 : vector<64x32xf32>
    %139 = arith.mulf %101, %134 : vector<64x32xf32>
    %c2_65 = arith.constant 2 : index
    %c0_66 = arith.constant 0 : index
    %c0_67 = arith.constant 0 : index
    %140 = vector.load %arg2[%c2_65, %c0_66, %c0_67] : memref<5x64x32xf32, #tpu.memory_space<vmem>>, vector<1x64x32xf32>
    %141 = vector.shape_cast %140 : vector<1x64x32xf32> to vector<64x32xf32>
    %142 = arith.addf %141, %115 : vector<64x32xf32>
    %143 = arith.mulf %136, %142 : vector<64x32xf32>
    %144 = arith.addf %139, %143 : vector<64x32xf32>
    %c3 = arith.constant 3 : index
    %c0_68 = arith.constant 0 : index
    %c0_69 = arith.constant 0 : index
    %145 = vector.load %arg1[%c3, %c0_68, %c0_69] : memref<5x64x3xf32, #tpu.memory_space<vmem>>, vector<1x64x3xf32>
    %146 = vector.shape_cast %145 : vector<1x64x3xf32> to vector<64x3xf32>
    %147 = arith.truncf %146 : vector<64x3xf32> to vector<64x3xbf16>
    %cst_70 = arith.constant dense<0.000000e+00> : vector<64x64xf32>
    %148 = tpu.matmul %147, %2, %cst_70 {dimension_numbers = #tpu.dot_dimension_numbers<[1], [0], [0], [1], [0, 0, 1, 1], [], []>} : vector<64x3xbf16>, vector<3x64xbf16>, vector<64x64xf32> -> vector<64x64xf32>
    %149 = vector.broadcast %3 : vector<1x64xf32> to vector<64x64xf32>
    %150 = arith.addf %148, %149 : vector<64x64xf32>
    %cst_71 = arith.constant 0.000000e+00 : f32
    %151 = vector.broadcast %cst_71 : f32 to vector<64x64xf32>
    %152 = arith.maximumf %150, %151 : vector<64x64xf32>
    %153 = arith.truncf %152 : vector<64x64xf32> to vector<64x64xbf16>
    %cst_72 = arith.constant dense<0.000000e+00> : vector<64x32xf32>
    %154 = tpu.matmul %153, %5, %cst_72 {dimension_numbers = #tpu.dot_dimension_numbers<[1], [0], [0], [1], [0, 0, 1, 1], [], []>} : vector<64x64xbf16>, vector<64x32xbf16>, vector<64x32xf32> -> vector<64x32xf32>
    %155 = vector.broadcast %6 : vector<1x32xf32> to vector<64x32xf32>
    %156 = arith.addf %154, %155 : vector<64x32xf32>
    %cst_73 = arith.constant 0.000000e+00 : f32
    %157 = vector.broadcast %cst_73 : f32 to vector<64x32xf32>
    %158 = arith.maximumf %156, %157 : vector<64x32xf32>
    %c3_74 = arith.constant 3 : index
    %c0_75 = arith.constant 0 : index
    %c0_76 = arith.constant 0 : index
    %159 = vector.load %arg3[%c3_74, %c0_75, %c0_76] : memref<5x64x32xf32, #tpu.memory_space<vmem>>, vector<1x64x32xf32>
    %160 = vector.shape_cast %159 : vector<1x64x32xf32> to vector<64x32xf32>
    %161 = arith.subf %0, %160 : vector<64x32xf32>
    %162 = arith.addf %161, %158 : vector<64x32xf32>
    %163 = arith.truncf %162 : vector<64x32xf32> to vector<64x32xbf16>
    %cst_77 = arith.constant dense<0.000000e+00> : vector<64x64xf32>
    %164 = tpu.matmul %163, %8, %cst_77 {dimension_numbers = #tpu.dot_dimension_numbers<[1], [0], [0], [1], [0, 0, 1, 1], [], []>} : vector<64x32xbf16>, vector<32x64xbf16>, vector<64x64xf32> -> vector<64x64xf32>
    %165 = vector.broadcast %9 : vector<1x64xf32> to vector<64x64xf32>
    %166 = arith.addf %164, %165 : vector<64x64xf32>
    %cst_78 = arith.constant 0.000000e+00 : f32
    %167 = vector.broadcast %cst_78 : f32 to vector<64x64xf32>
    %168 = arith.maximumf %166, %167 : vector<64x64xf32>
    %169 = arith.truncf %168 : vector<64x64xf32> to vector<64x64xbf16>
    %cst_79 = arith.constant dense<0.000000e+00> : vector<64x32xf32>
    %170 = tpu.matmul %169, %11, %cst_79 {dimension_numbers = #tpu.dot_dimension_numbers<[1], [0], [0], [1], [0, 0, 1, 1], [], []>} : vector<64x64xbf16>, vector<64x32xbf16>, vector<64x32xf32> -> vector<64x32xf32>
    %171 = vector.broadcast %12 : vector<1x32xf32> to vector<64x32xf32>
    %172 = arith.addf %170, %171 : vector<64x32xf32>
    %cst_80 = arith.constant 0.000000e+00 : f32
    %173 = vector.broadcast %cst_80 : f32 to vector<64x32xf32>
    %174 = arith.maximumf %172, %173 : vector<64x32xf32>
    %175 = arith.maximumf %132, %174 : vector<64x32xf32>
    %176 = arith.subf %132, %175 : vector<64x32xf32>
    %177 = math.exp %176 : vector<64x32xf32>
    %178 = arith.subf %174, %175 : vector<64x32xf32>
    %179 = math.exp %178 : vector<64x32xf32>
    %180 = arith.mulf %138, %177 : vector<64x32xf32>
    %181 = arith.addf %180, %179 : vector<64x32xf32>
    %182 = arith.mulf %144, %177 : vector<64x32xf32>
    %c3_81 = arith.constant 3 : index
    %c0_82 = arith.constant 0 : index
    %c0_83 = arith.constant 0 : index
    %183 = vector.load %arg2[%c3_81, %c0_82, %c0_83] : memref<5x64x32xf32, #tpu.memory_space<vmem>>, vector<1x64x32xf32>
    %184 = vector.shape_cast %183 : vector<1x64x32xf32> to vector<64x32xf32>
    %185 = arith.addf %184, %158 : vector<64x32xf32>
    %186 = arith.mulf %179, %185 : vector<64x32xf32>
    %187 = arith.addf %182, %186 : vector<64x32xf32>
    %c4 = arith.constant 4 : index
    %c0_84 = arith.constant 0 : index
    %c0_85 = arith.constant 0 : index
    %188 = vector.load %arg1[%c4, %c0_84, %c0_85] : memref<5x64x3xf32, #tpu.memory_space<vmem>>, vector<1x64x3xf32>
    %189 = vector.shape_cast %188 : vector<1x64x3xf32> to vector<64x3xf32>
    %190 = arith.truncf %189 : vector<64x3xf32> to vector<64x3xbf16>
    %cst_86 = arith.constant dense<0.000000e+00> : vector<64x64xf32>
    %191 = tpu.matmul %190, %2, %cst_86 {dimension_numbers = #tpu.dot_dimension_numbers<[1], [0], [0], [1], [0, 0, 1, 1], [], []>} : vector<64x3xbf16>, vector<3x64xbf16>, vector<64x64xf32> -> vector<64x64xf32>
    %192 = vector.broadcast %3 : vector<1x64xf32> to vector<64x64xf32>
    %193 = arith.addf %191, %192 : vector<64x64xf32>
    %cst_87 = arith.constant 0.000000e+00 : f32
    %194 = vector.broadcast %cst_87 : f32 to vector<64x64xf32>
    %195 = arith.maximumf %193, %194 : vector<64x64xf32>
    %196 = arith.truncf %195 : vector<64x64xf32> to vector<64x64xbf16>
    %cst_88 = arith.constant dense<0.000000e+00> : vector<64x32xf32>
    %197 = tpu.matmul %196, %5, %cst_88 {dimension_numbers = #tpu.dot_dimension_numbers<[1], [0], [0], [1], [0, 0, 1, 1], [], []>} : vector<64x64xbf16>, vector<64x32xbf16>, vector<64x32xf32> -> vector<64x32xf32>
    %198 = vector.broadcast %6 : vector<1x32xf32> to vector<64x32xf32>
    %199 = arith.addf %197, %198 : vector<64x32xf32>
    %cst_89 = arith.constant 0.000000e+00 : f32
    %200 = vector.broadcast %cst_89 : f32 to vector<64x32xf32>
    %201 = arith.maximumf %199, %200 : vector<64x32xf32>
    %c4_90 = arith.constant 4 : index
    %c0_91 = arith.constant 0 : index
    %c0_92 = arith.constant 0 : index
    %202 = vector.load %arg3[%c4_90, %c0_91, %c0_92] : memref<5x64x32xf32, #tpu.memory_space<vmem>>, vector<1x64x32xf32>
    %203 = vector.shape_cast %202 : vector<1x64x32xf32> to vector<64x32xf32>
    %204 = arith.subf %0, %203 : vector<64x32xf32>
    %205 = arith.addf %204, %201 : vector<64x32xf32>
    %206 = arith.truncf %205 : vector<64x32xf32> to vector<64x32xbf16>
    %cst_93 = arith.constant dense<0.000000e+00> : vector<64x64xf32>
    %207 = tpu.matmul %206, %8, %cst_93 {dimension_numbers = #tpu.dot_dimension_numbers<[1], [0], [0], [1], [0, 0, 1, 1], [], []>} : vector<64x32xbf16>, vector<32x64xbf16>, vector<64x64xf32> -> vector<64x64xf32>
    %208 = vector.broadcast %9 : vector<1x64xf32> to vector<64x64xf32>
    %209 = arith.addf %207, %208 : vector<64x64xf32>
    %cst_94 = arith.constant 0.000000e+00 : f32
    %210 = vector.broadcast %cst_94 : f32 to vector<64x64xf32>
    %211 = arith.maximumf %209, %210 : vector<64x64xf32>
    %212 = arith.truncf %211 : vector<64x64xf32> to vector<64x64xbf16>
    %cst_95 = arith.constant dense<0.000000e+00> : vector<64x32xf32>
    %213 = tpu.matmul %212, %11, %cst_95 {dimension_numbers = #tpu.dot_dimension_numbers<[1], [0], [0], [1], [0, 0, 1, 1], [], []>} : vector<64x64xbf16>, vector<64x32xbf16>, vector<64x32xf32> -> vector<64x32xf32>
    %214 = vector.broadcast %12 : vector<1x32xf32> to vector<64x32xf32>
    %215 = arith.addf %213, %214 : vector<64x32xf32>
    %cst_96 = arith.constant 0.000000e+00 : f32
    %216 = vector.broadcast %cst_96 : f32 to vector<64x32xf32>
    %217 = arith.maximumf %215, %216 : vector<64x32xf32>
    %218 = arith.maximumf %175, %217 : vector<64x32xf32>
    %219 = arith.subf %175, %218 : vector<64x32xf32>
    %220 = math.exp %219 : vector<64x32xf32>
    %221 = arith.subf %217, %218 : vector<64x32xf32>
    %222 = math.exp %221 : vector<64x32xf32>
    %223 = arith.mulf %181, %220 : vector<64x32xf32>
    %224 = arith.addf %223, %222 : vector<64x32xf32>
    %225 = arith.mulf %187, %220 : vector<64x32xf32>
    %c4_97 = arith.constant 4 : index
    %c0_98 = arith.constant 0 : index
    %c0_99 = arith.constant 0 : index
    %226 = vector.load %arg2[%c4_97, %c0_98, %c0_99] : memref<5x64x32xf32, #tpu.memory_space<vmem>>, vector<1x64x32xf32>
    %227 = vector.shape_cast %226 : vector<1x64x32xf32> to vector<64x32xf32>
    %228 = arith.addf %227, %201 : vector<64x32xf32>
    %229 = arith.mulf %222, %228 : vector<64x32xf32>
    %230 = arith.addf %225, %229 : vector<64x32xf32>
    %231 = tpu.reciprocal %224 {approx = true} : vector<64x32xf32> -> vector<64x32xf32>
    %232 = arith.mulf %230, %231 : vector<64x32xf32>
    %c0_100 = arith.constant 0 : index
    %c0_101 = arith.constant 0 : index
    %233 = vector.load %arg13[%c0_100, %c0_101] : memref<64x32xf32, #tpu.memory_space<vmem>>, vector<64x32xf32>
    tpu.vector_store %arg13[%c0_100, %c0_101], %232 {strides = array<i32>} : memref<64x32xf32, #tpu.memory_space<vmem>>, vector<64x32xf32>,
    return
  }
  func.func @transform_0(%arg0: i32) -> (i32, i32, i32) {
    %c0_i32 = arith.constant 0 : i32
    %c0_i32_0 = arith.constant 0 : i32
    %c0_i32_1 = arith.constant 0 : i32
    return %c0_i32, %arg0, %c0_i32_0 : i32, i32, i32
  }
  func.func @transform_1(%arg0: i32) -> (i32, i32, i32) {
    %c0_i32 = arith.constant 0 : i32
    %c0_i32_0 = arith.constant 0 : i32
    %c0_i32_1 = arith.constant 0 : i32
    return %c0_i32, %arg0, %c0_i32_0 : i32, i32, i32
  }
  func.func @transform_2(%arg0: i32) -> (i32, i32, i32) {
    %c0_i32 = arith.constant 0 : i32
    %c0_i32_0 = arith.constant 0 : i32
    %c0_i32_1 = arith.constant 0 : i32
    return %c0_i32, %arg0, %c0_i32_0 : i32, i32, i32
  }
  func.func @transform_3(%arg0: i32) -> (i32, i32) {
    %c0_i32 = arith.constant 0 : i32
    %c0_i32_0 = arith.constant 0 : i32
    return %arg0, %c0_i32 : i32, i32
  }
  func.func @transform_4(%arg0: i32) -> (i32, i32) {
    %c0_i32 = arith.constant 0 : i32
    %c0_i32_0 = arith.constant 0 : i32
    %c0_i32_1 = arith.constant 0 : i32
    return %c0_i32, %c0_i32_0 : i32, i32
  }
  func.func @transform_5(%arg0: i32) -> (i32, i32) {
    %c0_i32 = arith.constant 0 : i32
    %c0_i32_0 = arith.constant 0 : i32
    %c0_i32_1 = arith.constant 0 : i32
    return %c0_i32, %c0_i32_0 : i32, i32
  }
  func.func @transform_6(%arg0: i32) -> (i32, i32) {
    %c0_i32 = arith.constant 0 : i32
    %c0_i32_0 = arith.constant 0 : i32
    %c0_i32_1 = arith.constant 0 : i32
    return %c0_i32, %c0_i32_0 : i32, i32
  }
  func.func @transform_7(%arg0: i32) -> (i32, i32) {
    %c0_i32 = arith.constant 0 : i32
    %c0_i32_0 = arith.constant 0 : i32
    %c0_i32_1 = arith.constant 0 : i32
    return %c0_i32, %c0_i32_0 : i32, i32
  }
  func.func @transform_8(%arg0: i32) -> (i32, i32) {
    %c0_i32 = arith.constant 0 : i32
    %c0_i32_0 = arith.constant 0 : i32
    %c0_i32_1 = arith.constant 0 : i32
    return %c0_i32, %c0_i32_0 : i32, i32
  }
  func.func @transform_9(%arg0: i32) -> (i32, i32) {
    %c0_i32 = arith.constant 0 : i32
    %c0_i32_0 = arith.constant 0 : i32
    %c0_i32_1 = arith.constant 0 : i32
    return %c0_i32, %c0_i32_0 : i32, i32
  }
  func.func @transform_10(%arg0: i32) -> (i32, i32) {
    %c0_i32 = arith.constant 0 : i32
    %c0_i32_0 = arith.constant 0 : i32
    %c0_i32_1 = arith.constant 0 : i32
    return %c0_i32, %c0_i32_0 : i32, i32
  }
  func.func @transform_11(%arg0: i32) -> (i32, i32) {
    %c0_i32 = arith.constant 0 : i32
    %c0_i32_0 = arith.constant 0 : i32
    %c0_i32_1 = arith.constant 0 : i32
    return %c0_i32, %c0_i32_0 : i32, i32
  }
  func.func @transform_12(%arg0: i32) -> (i32, i32) {
    %c0_i32 = arith.constant 0 : i32
    %c0_i32_0 = arith.constant 0 : i32
    return %arg0, %c0_i32 : i32, i32
  }
}

module attributes {stable_mosaic.version = 11 : i64} {
  func.func @_linear_kernel(%arg0: i32, %arg1: memref<64x32xf32, #tpu.memory_space<vmem>>, %arg2: memref<32x64xf32, #tpu.memory_space<vmem>>, %arg3: memref<1x64xf32, #tpu.memory_space<vmem>>, %arg4: memref<64x64xf32, #tpu.memory_space<vmem>>) attributes {dimension_semantics = [#tpu.dimension_semantics<parallel>], iteration_bounds = array<i64: 1>, scalar_prefetch = 0 : i64, scratch_operands = 0 : i64, tpu.core_type = #tpu.core_type<tc>, window_params = [{transform_indices = @transform_0, window_bounds = array<i64: 64, 32>}, {pipeline_mode = #tpu.pipeline_mode<synchronous>, transform_indices = @transform_1, window_bounds = array<i64: 32, 64>}, {pipeline_mode = #tpu.pipeline_mode<synchronous>, transform_indices = @transform_2, window_bounds = array<i64: 1, 64>}, {transform_indices = @transform_3, window_bounds = array<i64: 64, 64>}]} {
    %c0 = arith.constant 0 : index
    %c0_0 = arith.constant 0 : index
    %0 = vector.load %arg1[%c0, %c0_0] : memref<64x32xf32, #tpu.memory_space<vmem>>, vector<64x32xf32>
    %1 = arith.truncf %0 : vector<64x32xf32> to vector<64x32xbf16>
    %c0_1 = arith.constant 0 : index
    %c0_2 = arith.constant 0 : index
    %2 = vector.load %arg2[%c0_1, %c0_2] : memref<32x64xf32, #tpu.memory_space<vmem>>, vector<32x64xf32>
    %3 = arith.truncf %2 : vector<32x64xf32> to vector<32x64xbf16>
    %cst = arith.constant dense<0.000000e+00> : vector<64x64xf32>
    %4 = tpu.matmul %1, %3, %cst {dimension_numbers = #tpu.dot_dimension_numbers<[1], [0], [0], [1], [0, 0, 1, 1], [], []>} : vector<64x32xbf16>, vector<32x64xbf16>, vector<64x64xf32> -> vector<64x64xf32>
    %c0_3 = arith.constant 0 : index
    %c0_4 = arith.constant 0 : index
    %5 = vector.load %arg3[%c0_3, %c0_4] : memref<1x64xf32, #tpu.memory_space<vmem>>, vector<1x64xf32>
    %6 = vector.broadcast %5 : vector<1x64xf32> to vector<64x64xf32>
    %7 = arith.addf %4, %6 : vector<64x64xf32>
    %cst_5 = arith.constant 0.000000e+00 : f32
    %8 = vector.broadcast %cst_5 : f32 to vector<64x64xf32>
    %9 = arith.maximumf %7, %8 : vector<64x64xf32>
    %c0_6 = arith.constant 0 : index
    %c0_7 = arith.constant 0 : index
    %10 = vector.load %arg4[%c0_6, %c0_7] : memref<64x64xf32, #tpu.memory_space<vmem>>, vector<64x64xf32>
    tpu.vector_store %arg4[%c0_6, %c0_7], %9 {strides = array<i32>} : memref<64x64xf32, #tpu.memory_space<vmem>>, vector<64x64xf32>,
    return
  }
  func.func @transform_0(%arg0: i32) -> (i32, i32) {
    %c0_i32 = arith.constant 0 : i32
    %c0_i32_0 = arith.constant 0 : i32
    return %arg0, %c0_i32 : i32, i32
  }
  func.func @transform_1(%arg0: i32) -> (i32, i32) {
    %c0_i32 = arith.constant 0 : i32
    %c0_i32_0 = arith.constant 0 : i32
    %c0_i32_1 = arith.constant 0 : i32
    return %c0_i32, %c0_i32_0 : i32, i32
  }
  func.func @transform_2(%arg0: i32) -> (i32, i32) {
    %c0_i32 = arith.constant 0 : i32
    %c0_i32_0 = arith.constant 0 : i32
    %c0_i32_1 = arith.constant 0 : i32
    return %c0_i32, %c0_i32_0 : i32, i32
  }
  func.func @transform_3(%arg0: i32) -> (i32, i32) {
    %c0_i32 = arith.constant 0 : i32
    %c0_i32_0 = arith.constant 0 : i32
    return %arg0, %c0_i32 : i32, i32
  }
}

module attributes {stable_mosaic.version = 11 : i64} {
  func.func @_neighbor_max_kernel(%arg0: i32, %arg1: memref<4x16x64xf32, #tpu.memory_space<vmem>>, %arg2: memref<16x64xf32, #tpu.memory_space<vmem>>) attributes {dimension_semantics = [#tpu.dimension_semantics<parallel>], iteration_bounds = array<i64: 1>, scalar_prefetch = 0 : i64, scratch_operands = 0 : i64, tpu.core_type = #tpu.core_type<tc>, window_params = [{transform_indices = @transform_0, window_bounds = array<i64: 4, 16, 64>}, {transform_indices = @transform_1, window_bounds = array<i64: 16, 64>}]} {
    %c0 = arith.constant 0 : index
    %c0_0 = arith.constant 0 : index
    %c0_1 = arith.constant 0 : index
    %0 = vector.load %arg1[%c0, %c0_0, %c0_1] : memref<4x16x64xf32, #tpu.memory_space<vmem>>, vector<1x16x64xf32>
    %1 = vector.shape_cast %0 : vector<1x16x64xf32> to vector<16x64xf32>
    %c1 = arith.constant 1 : index
    %c0_2 = arith.constant 0 : index
    %c0_3 = arith.constant 0 : index
    %2 = vector.load %arg1[%c1, %c0_2, %c0_3] : memref<4x16x64xf32, #tpu.memory_space<vmem>>, vector<1x16x64xf32>
    %3 = vector.shape_cast %2 : vector<1x16x64xf32> to vector<16x64xf32>
    %4 = arith.maximumf %1, %3 : vector<16x64xf32>
    %c2 = arith.constant 2 : index
    %c0_4 = arith.constant 0 : index
    %c0_5 = arith.constant 0 : index
    %5 = vector.load %arg1[%c2, %c0_4, %c0_5] : memref<4x16x64xf32, #tpu.memory_space<vmem>>, vector<1x16x64xf32>
    %6 = vector.shape_cast %5 : vector<1x16x64xf32> to vector<16x64xf32>
    %7 = arith.maximumf %4, %6 : vector<16x64xf32>
    %c3 = arith.constant 3 : index
    %c0_6 = arith.constant 0 : index
    %c0_7 = arith.constant 0 : index
    %8 = vector.load %arg1[%c3, %c0_6, %c0_7] : memref<4x16x64xf32, #tpu.memory_space<vmem>>, vector<1x16x64xf32>
    %9 = vector.shape_cast %8 : vector<1x16x64xf32> to vector<16x64xf32>
    %10 = arith.maximumf %7, %9 : vector<16x64xf32>
    %c0_8 = arith.constant 0 : index
    %c0_9 = arith.constant 0 : index
    %11 = vector.load %arg2[%c0_8, %c0_9] : memref<16x64xf32, #tpu.memory_space<vmem>>, vector<16x64xf32>
    tpu.vector_store %arg2[%c0_8, %c0_9], %10 {strides = array<i32>} : memref<16x64xf32, #tpu.memory_space<vmem>>, vector<16x64xf32>,
    return
  }
  func.func @transform_0(%arg0: i32) -> (i32, i32, i32) {
    %c0_i32 = arith.constant 0 : i32
    %c0_i32_0 = arith.constant 0 : i32
    %c0_i32_1 = arith.constant 0 : i32
    return %c0_i32, %arg0, %c0_i32_0 : i32, i32, i32
  }
  func.func @transform_1(%arg0: i32) -> (i32, i32) {
    %c0_i32 = arith.constant 0 : i32
    %c0_i32_0 = arith.constant 0 : i32
    return %arg0, %c0_i32 : i32, i32
  }
}

module attributes {stable_mosaic.version = 11 : i64} {
  func.func @_linear_kernel(%arg0: i32, %arg1: memref<16x64xf32, #tpu.memory_space<vmem>>, %arg2: memref<64x64xf32, #tpu.memory_space<vmem>>, %arg3: memref<1x64xf32, #tpu.memory_space<vmem>>, %arg4: memref<16x64xf32, #tpu.memory_space<vmem>>) attributes {dimension_semantics = [#tpu.dimension_semantics<parallel>], iteration_bounds = array<i64: 1>, scalar_prefetch = 0 : i64, scratch_operands = 0 : i64, tpu.core_type = #tpu.core_type<tc>, window_params = [{transform_indices = @transform_0, window_bounds = array<i64: 16, 64>}, {pipeline_mode = #tpu.pipeline_mode<synchronous>, transform_indices = @transform_1, window_bounds = array<i64: 64, 64>}, {pipeline_mode = #tpu.pipeline_mode<synchronous>, transform_indices = @transform_2, window_bounds = array<i64: 1, 64>}, {transform_indices = @transform_3, window_bounds = array<i64: 16, 64>}]} {
    %c0 = arith.constant 0 : index
    %c0_0 = arith.constant 0 : index
    %0 = vector.load %arg1[%c0, %c0_0] : memref<16x64xf32, #tpu.memory_space<vmem>>, vector<16x64xf32>
    %1 = arith.truncf %0 : vector<16x64xf32> to vector<16x64xbf16>
    %c0_1 = arith.constant 0 : index
    %c0_2 = arith.constant 0 : index
    %2 = vector.load %arg2[%c0_1, %c0_2] : memref<64x64xf32, #tpu.memory_space<vmem>>, vector<64x64xf32>
    %3 = arith.truncf %2 : vector<64x64xf32> to vector<64x64xbf16>
    %cst = arith.constant dense<0.000000e+00> : vector<16x64xf32>
    %4 = tpu.matmul %1, %3, %cst {dimension_numbers = #tpu.dot_dimension_numbers<[1], [0], [0], [1], [0, 0, 1, 1], [], []>} : vector<16x64xbf16>, vector<64x64xbf16>, vector<16x64xf32> -> vector<16x64xf32>
    %c0_3 = arith.constant 0 : index
    %c0_4 = arith.constant 0 : index
    %5 = vector.load %arg3[%c0_3, %c0_4] : memref<1x64xf32, #tpu.memory_space<vmem>>, vector<1x64xf32>
    %6 = vector.broadcast %5 : vector<1x64xf32> to vector<16x64xf32>
    %7 = arith.addf %4, %6 : vector<16x64xf32>
    %cst_5 = arith.constant 0.000000e+00 : f32
    %8 = vector.broadcast %cst_5 : f32 to vector<16x64xf32>
    %9 = arith.maximumf %7, %8 : vector<16x64xf32>
    %c0_6 = arith.constant 0 : index
    %c0_7 = arith.constant 0 : index
    %10 = vector.load %arg4[%c0_6, %c0_7] : memref<16x64xf32, #tpu.memory_space<vmem>>, vector<16x64xf32>
    tpu.vector_store %arg4[%c0_6, %c0_7], %9 {strides = array<i32>} : memref<16x64xf32, #tpu.memory_space<vmem>>, vector<16x64xf32>,
    return
  }
  func.func @transform_0(%arg0: i32) -> (i32, i32) {
    %c0_i32 = arith.constant 0 : i32
    %c0_i32_0 = arith.constant 0 : i32
    return %arg0, %c0_i32 : i32, i32
  }
  func.func @transform_1(%arg0: i32) -> (i32, i32) {
    %c0_i32 = arith.constant 0 : i32
    %c0_i32_0 = arith.constant 0 : i32
    %c0_i32_1 = arith.constant 0 : i32
    return %c0_i32, %c0_i32_0 : i32, i32
  }
  func.func @transform_2(%arg0: i32) -> (i32, i32) {
    %c0_i32 = arith.constant 0 : i32
    %c0_i32_0 = arith.constant 0 : i32
    %c0_i32_1 = arith.constant 0 : i32
    return %c0_i32, %c0_i32_0 : i32, i32
  }
  func.func @transform_3(%arg0: i32) -> (i32, i32) {
    %c0_i32 = arith.constant 0 : i32
    %c0_i32_0 = arith.constant 0 : i32
    return %arg0, %c0_i32 : i32, i32
  }
}

module attributes {stable_mosaic.version = 11 : i64} {
  func.func @_linear_kernel(%arg0: i32, %arg1: memref<16x64xf32, #tpu.memory_space<vmem>>, %arg2: memref<64x192xf32, #tpu.memory_space<vmem>>, %arg3: memref<1x192xf32, #tpu.memory_space<vmem>>, %arg4: memref<16x192xf32, #tpu.memory_space<vmem>>) attributes {dimension_semantics = [#tpu.dimension_semantics<parallel>], iteration_bounds = array<i64: 1>, scalar_prefetch = 0 : i64, scratch_operands = 0 : i64, tpu.core_type = #tpu.core_type<tc>, window_params = [{transform_indices = @transform_0, window_bounds = array<i64: 16, 64>}, {pipeline_mode = #tpu.pipeline_mode<synchronous>, transform_indices = @transform_1, window_bounds = array<i64: 64, 192>}, {pipeline_mode = #tpu.pipeline_mode<synchronous>, transform_indices = @transform_2, window_bounds = array<i64: 1, 192>}, {transform_indices = @transform_3, window_bounds = array<i64: 16, 192>}]} {
    %c0 = arith.constant 0 : index
    %c0_0 = arith.constant 0 : index
    %0 = vector.load %arg1[%c0, %c0_0] : memref<16x64xf32, #tpu.memory_space<vmem>>, vector<16x64xf32>
    %1 = arith.truncf %0 : vector<16x64xf32> to vector<16x64xbf16>
    %c0_1 = arith.constant 0 : index
    %c0_2 = arith.constant 0 : index
    %2 = vector.load %arg2[%c0_1, %c0_2] : memref<64x192xf32, #tpu.memory_space<vmem>>, vector<64x192xf32>
    %3 = arith.truncf %2 : vector<64x192xf32> to vector<64x192xbf16>
    %cst = arith.constant dense<0.000000e+00> : vector<16x192xf32>
    %4 = tpu.matmul %1, %3, %cst {dimension_numbers = #tpu.dot_dimension_numbers<[1], [0], [0], [1], [0, 0, 1, 1], [], []>} : vector<16x64xbf16>, vector<64x192xbf16>, vector<16x192xf32> -> vector<16x192xf32>
    %c0_3 = arith.constant 0 : index
    %c0_4 = arith.constant 0 : index
    %5 = vector.load %arg3[%c0_3, %c0_4] : memref<1x192xf32, #tpu.memory_space<vmem>>, vector<1x192xf32>
    %6 = vector.broadcast %5 : vector<1x192xf32> to vector<16x192xf32>
    %7 = arith.addf %4, %6 : vector<16x192xf32>
    %c0_5 = arith.constant 0 : index
    %c0_6 = arith.constant 0 : index
    %8 = vector.load %arg4[%c0_5, %c0_6] : memref<16x192xf32, #tpu.memory_space<vmem>>, vector<16x192xf32>
    tpu.vector_store %arg4[%c0_5, %c0_6], %7 {strides = array<i32>} : memref<16x192xf32, #tpu.memory_space<vmem>>, vector<16x192xf32>,
    return
  }
  func.func @transform_0(%arg0: i32) -> (i32, i32) {
    %c0_i32 = arith.constant 0 : i32
    %c0_i32_0 = arith.constant 0 : i32
    return %arg0, %c0_i32 : i32, i32
  }
  func.func @transform_1(%arg0: i32) -> (i32, i32) {
    %c0_i32 = arith.constant 0 : i32
    %c0_i32_0 = arith.constant 0 : i32
    %c0_i32_1 = arith.constant 0 : i32
    return %c0_i32, %c0_i32_0 : i32, i32
  }
  func.func @transform_2(%arg0: i32) -> (i32, i32) {
    %c0_i32 = arith.constant 0 : i32
    %c0_i32_0 = arith.constant 0 : i32
    %c0_i32_1 = arith.constant 0 : i32
    return %c0_i32, %c0_i32_0 : i32, i32
  }
  func.func @transform_3(%arg0: i32) -> (i32, i32) {
    %c0_i32 = arith.constant 0 : i32
    %c0_i32_0 = arith.constant 0 : i32
    return %arg0, %c0_i32 : i32, i32
  }
}

module attributes {stable_mosaic.version = 11 : i64} {
  func.func @_linear_kernel(%arg0: i32, %arg1: memref<16x64xf32, #tpu.memory_space<vmem>>, %arg2: memref<64x32xf32, #tpu.memory_space<vmem>>, %arg3: memref<1x32xf32, #tpu.memory_space<vmem>>, %arg4: memref<16x32xf32, #tpu.memory_space<vmem>>) attributes {dimension_semantics = [#tpu.dimension_semantics<parallel>], iteration_bounds = array<i64: 1>, scalar_prefetch = 0 : i64, scratch_operands = 0 : i64, tpu.core_type = #tpu.core_type<tc>, window_params = [{transform_indices = @transform_0, window_bounds = array<i64: 16, 64>}, {pipeline_mode = #tpu.pipeline_mode<synchronous>, transform_indices = @transform_1, window_bounds = array<i64: 64, 32>}, {pipeline_mode = #tpu.pipeline_mode<synchronous>, transform_indices = @transform_2, window_bounds = array<i64: 1, 32>}, {transform_indices = @transform_3, window_bounds = array<i64: 16, 32>}]} {
    %c0 = arith.constant 0 : index
    %c0_0 = arith.constant 0 : index
    %0 = vector.load %arg1[%c0, %c0_0] : memref<16x64xf32, #tpu.memory_space<vmem>>, vector<16x64xf32>
    %1 = arith.truncf %0 : vector<16x64xf32> to vector<16x64xbf16>
    %c0_1 = arith.constant 0 : index
    %c0_2 = arith.constant 0 : index
    %2 = vector.load %arg2[%c0_1, %c0_2] : memref<64x32xf32, #tpu.memory_space<vmem>>, vector<64x32xf32>
    %3 = arith.truncf %2 : vector<64x32xf32> to vector<64x32xbf16>
    %cst = arith.constant dense<0.000000e+00> : vector<16x32xf32>
    %4 = tpu.matmul %1, %3, %cst {dimension_numbers = #tpu.dot_dimension_numbers<[1], [0], [0], [1], [0, 0, 1, 1], [], []>} : vector<16x64xbf16>, vector<64x32xbf16>, vector<16x32xf32> -> vector<16x32xf32>
    %c0_3 = arith.constant 0 : index
    %c0_4 = arith.constant 0 : index
    %5 = vector.load %arg3[%c0_3, %c0_4] : memref<1x32xf32, #tpu.memory_space<vmem>>, vector<1x32xf32>
    %6 = vector.broadcast %5 : vector<1x32xf32> to vector<16x32xf32>
    %7 = arith.addf %4, %6 : vector<16x32xf32>
    %cst_5 = arith.constant 0.000000e+00 : f32
    %8 = vector.broadcast %cst_5 : f32 to vector<16x32xf32>
    %9 = arith.maximumf %7, %8 : vector<16x32xf32>
    %c0_6 = arith.constant 0 : index
    %c0_7 = arith.constant 0 : index
    %10 = vector.load %arg4[%c0_6, %c0_7] : memref<16x32xf32, #tpu.memory_space<vmem>>, vector<16x32xf32>
    tpu.vector_store %arg4[%c0_6, %c0_7], %9 {strides = array<i32>} : memref<16x32xf32, #tpu.memory_space<vmem>>, vector<16x32xf32>,
    return
  }
  func.func @transform_0(%arg0: i32) -> (i32, i32) {
    %c0_i32 = arith.constant 0 : i32
    %c0_i32_0 = arith.constant 0 : i32
    return %arg0, %c0_i32 : i32, i32
  }
  func.func @transform_1(%arg0: i32) -> (i32, i32) {
    %c0_i32 = arith.constant 0 : i32
    %c0_i32_0 = arith.constant 0 : i32
    %c0_i32_1 = arith.constant 0 : i32
    return %c0_i32, %c0_i32_0 : i32, i32
  }
  func.func @transform_2(%arg0: i32) -> (i32, i32) {
    %c0_i32 = arith.constant 0 : i32
    %c0_i32_0 = arith.constant 0 : i32
    %c0_i32_1 = arith.constant 0 : i32
    return %c0_i32, %c0_i32_0 : i32, i32
  }
  func.func @transform_3(%arg0: i32) -> (i32, i32) {
    %c0_i32 = arith.constant 0 : i32
    %c0_i32_0 = arith.constant 0 : i32
    return %arg0, %c0_i32 : i32, i32
  }
}

module attributes {stable_mosaic.version = 11 : i64} {
  func.func @_pt_attn_kernel(%arg0: i32, %arg1: memref<5x16x3xf32, #tpu.memory_space<vmem>>, %arg2: memref<5x16x64xf32, #tpu.memory_space<vmem>>, %arg3: memref<5x16x64xf32, #tpu.memory_space<vmem>>, %arg4: memref<16x64xf32, #tpu.memory_space<vmem>>, %arg5: memref<3x64xf32, #tpu.memory_space<vmem>>, %arg6: memref<1x64xf32, #tpu.memory_space<vmem>>, %arg7: memref<64x64xf32, #tpu.memory_space<vmem>>, %arg8: memref<1x64xf32, #tpu.memory_space<vmem>>, %arg9: memref<64x64xf32, #tpu.memory_space<vmem>>, %arg10: memref<1x64xf32, #tpu.memory_space<vmem>>, %arg11: memref<64x64xf32, #tpu.memory_space<vmem>>, %arg12: memref<1x64xf32, #tpu.memory_space<vmem>>, %arg13: memref<16x64xf32, #tpu.memory_space<vmem>>) attributes {dimension_semantics = [#tpu.dimension_semantics<parallel>], iteration_bounds = array<i64: 1>, scalar_prefetch = 0 : i64, scratch_operands = 0 : i64, tpu.core_type = #tpu.core_type<tc>, window_params = [{transform_indices = @transform_0, window_bounds = array<i64: 5, 16, 3>}, {transform_indices = @transform_1, window_bounds = array<i64: 5, 16, 64>}, {transform_indices = @transform_2, window_bounds = array<i64: 5, 16, 64>}, {transform_indices = @transform_3, window_bounds = array<i64: 16, 64>}, {pipeline_mode = #tpu.pipeline_mode<synchronous>, transform_indices = @transform_4, window_bounds = array<i64: 3, 64>}, {pipeline_mode = #tpu.pipeline_mode<synchronous>, transform_indices = @transform_5, window_bounds = array<i64: 1, 64>}, {pipeline_mode = #tpu.pipeline_mode<synchronous>, transform_indices = @transform_6, window_bounds = array<i64: 64, 64>}, {pipeline_mode = #tpu.pipeline_mode<synchronous>, transform_indices = @transform_7, window_bounds = array<i64: 1, 64>}, {pipeline_mode = #tpu.pipeline_mode<synchronous>, transform_indices = @transform_8, window_bounds = array<i64: 64, 64>}, {pipeline_mode = #tpu.pipeline_mode<synchronous>, transform_indices = @transform_9, window_bounds = array<i64: 1, 64>}, {pipeline_mode = #tpu.pipeline_mode<synchronous>, transform_indices = @transform_10, window_bounds = array<i64: 64, 64>}, {pipeline_mode = #tpu.pipeline_mode<synchronous>, transform_indices = @transform_11, window_bounds = array<i64: 1, 64>}, {transform_indices = @transform_12, window_bounds = array<i64: 16, 64>}]} {
    %c0 = arith.constant 0 : index
    %c0_0 = arith.constant 0 : index
    %0 = vector.load %arg4[%c0, %c0_0] : memref<16x64xf32, #tpu.memory_space<vmem>>, vector<16x64xf32>
    %c0_1 = arith.constant 0 : index
    %c0_2 = arith.constant 0 : index
    %1 = vector.load %arg5[%c0_1, %c0_2] : memref<3x64xf32, #tpu.memory_space<vmem>>, vector<3x64xf32>
    %2 = arith.truncf %1 : vector<3x64xf32> to vector<3x64xbf16>
    %c0_3 = arith.constant 0 : index
    %c0_4 = arith.constant 0 : index
    %3 = vector.load %arg6[%c0_3, %c0_4] : memref<1x64xf32, #tpu.memory_space<vmem>>, vector<1x64xf32>
    %c0_5 = arith.constant 0 : index
    %c0_6 = arith.constant 0 : index
    %4 = vector.load %arg7[%c0_5, %c0_6] : memref<64x64xf32, #tpu.memory_space<vmem>>, vector<64x64xf32>
    %5 = arith.truncf %4 : vector<64x64xf32> to vector<64x64xbf16>
    %c0_7 = arith.constant 0 : index
    %c0_8 = arith.constant 0 : index
    %6 = vector.load %arg8[%c0_7, %c0_8] : memref<1x64xf32, #tpu.memory_space<vmem>>, vector<1x64xf32>
    %c0_9 = arith.constant 0 : index
    %c0_10 = arith.constant 0 : index
    %7 = vector.load %arg9[%c0_9, %c0_10] : memref<64x64xf32, #tpu.memory_space<vmem>>, vector<64x64xf32>
    %8 = arith.truncf %7 : vector<64x64xf32> to vector<64x64xbf16>
    %c0_11 = arith.constant 0 : index
    %c0_12 = arith.constant 0 : index
    %9 = vector.load %arg10[%c0_11, %c0_12] : memref<1x64xf32, #tpu.memory_space<vmem>>, vector<1x64xf32>
    %c0_13 = arith.constant 0 : index
    %c0_14 = arith.constant 0 : index
    %10 = vector.load %arg11[%c0_13, %c0_14] : memref<64x64xf32, #tpu.memory_space<vmem>>, vector<64x64xf32>
    %11 = arith.truncf %10 : vector<64x64xf32> to vector<64x64xbf16>
    %c0_15 = arith.constant 0 : index
    %c0_16 = arith.constant 0 : index
    %12 = vector.load %arg12[%c0_15, %c0_16] : memref<1x64xf32, #tpu.memory_space<vmem>>, vector<1x64xf32>
    %cst = arith.constant 0.000000e+00 : f32
    %13 = vector.broadcast %cst : f32 to vector<16x64xf32>
    %cst_17 = arith.constant 0.000000e+00 : f32
    %14 = vector.broadcast %cst_17 : f32 to vector<16x64xf32>
    %cst_18 = arith.constant 0.000000e+00 : f32
    %15 = vector.broadcast %cst_18 : f32 to vector<16x64xf32>
    %c0_19 = arith.constant 0 : index
    %c0_20 = arith.constant 0 : index
    %c0_21 = arith.constant 0 : index
    %16 = vector.load %arg1[%c0_19, %c0_20, %c0_21] : memref<5x16x3xf32, #tpu.memory_space<vmem>>, vector<1x16x3xf32>
    %17 = vector.shape_cast %16 : vector<1x16x3xf32> to vector<16x3xf32>
    %18 = arith.truncf %17 : vector<16x3xf32> to vector<16x3xbf16>
    %cst_22 = arith.constant dense<0.000000e+00> : vector<16x64xf32>
    %19 = tpu.matmul %18, %2, %cst_22 {dimension_numbers = #tpu.dot_dimension_numbers<[1], [0], [0], [1], [0, 0, 1, 1], [], []>} : vector<16x3xbf16>, vector<3x64xbf16>, vector<16x64xf32> -> vector<16x64xf32>
    %20 = vector.broadcast %3 : vector<1x64xf32> to vector<16x64xf32>
    %21 = arith.addf %19, %20 : vector<16x64xf32>
    %cst_23 = arith.constant 0.000000e+00 : f32
    %22 = vector.broadcast %cst_23 : f32 to vector<16x64xf32>
    %23 = arith.maximumf %21, %22 : vector<16x64xf32>
    %24 = arith.truncf %23 : vector<16x64xf32> to vector<16x64xbf16>
    %cst_24 = arith.constant dense<0.000000e+00> : vector<16x64xf32>
    %25 = tpu.matmul %24, %5, %cst_24 {dimension_numbers = #tpu.dot_dimension_numbers<[1], [0], [0], [1], [0, 0, 1, 1], [], []>} : vector<16x64xbf16>, vector<64x64xbf16>, vector<16x64xf32> -> vector<16x64xf32>
    %26 = vector.broadcast %6 : vector<1x64xf32> to vector<16x64xf32>
    %27 = arith.addf %25, %26 : vector<16x64xf32>
    %cst_25 = arith.constant 0.000000e+00 : f32
    %28 = vector.broadcast %cst_25 : f32 to vector<16x64xf32>
    %29 = arith.maximumf %27, %28 : vector<16x64xf32>
    %c0_26 = arith.constant 0 : index
    %c0_27 = arith.constant 0 : index
    %c0_28 = arith.constant 0 : index
    %30 = vector.load %arg3[%c0_26, %c0_27, %c0_28] : memref<5x16x64xf32, #tpu.memory_space<vmem>>, vector<1x16x64xf32>
    %31 = vector.shape_cast %30 : vector<1x16x64xf32> to vector<16x64xf32>
    %32 = arith.subf %0, %31 : vector<16x64xf32>
    %33 = arith.addf %32, %29 : vector<16x64xf32>
    %34 = arith.truncf %33 : vector<16x64xf32> to vector<16x64xbf16>
    %cst_29 = arith.constant dense<0.000000e+00> : vector<16x64xf32>
    %35 = tpu.matmul %34, %8, %cst_29 {dimension_numbers = #tpu.dot_dimension_numbers<[1], [0], [0], [1], [0, 0, 1, 1], [], []>} : vector<16x64xbf16>, vector<64x64xbf16>, vector<16x64xf32> -> vector<16x64xf32>
    %36 = vector.broadcast %9 : vector<1x64xf32> to vector<16x64xf32>
    %37 = arith.addf %35, %36 : vector<16x64xf32>
    %cst_30 = arith.constant 0.000000e+00 : f32
    %38 = vector.broadcast %cst_30 : f32 to vector<16x64xf32>
    %39 = arith.maximumf %37, %38 : vector<16x64xf32>
    %40 = arith.truncf %39 : vector<16x64xf32> to vector<16x64xbf16>
    %cst_31 = arith.constant dense<0.000000e+00> : vector<16x64xf32>
    %41 = tpu.matmul %40, %11, %cst_31 {dimension_numbers = #tpu.dot_dimension_numbers<[1], [0], [0], [1], [0, 0, 1, 1], [], []>} : vector<16x64xbf16>, vector<64x64xbf16>, vector<16x64xf32> -> vector<16x64xf32>
    %42 = vector.broadcast %12 : vector<1x64xf32> to vector<16x64xf32>
    %43 = arith.addf %41, %42 : vector<16x64xf32>
    %cst_32 = arith.constant 0.000000e+00 : f32
    %44 = vector.broadcast %cst_32 : f32 to vector<16x64xf32>
    %45 = arith.maximumf %43, %44 : vector<16x64xf32>
    %46 = arith.maximumf %13, %45 : vector<16x64xf32>
    %47 = arith.subf %13, %46 : vector<16x64xf32>
    %48 = math.exp %47 : vector<16x64xf32>
    %49 = arith.subf %45, %46 : vector<16x64xf32>
    %50 = math.exp %49 : vector<16x64xf32>
    %51 = arith.mulf %14, %48 : vector<16x64xf32>
    %52 = arith.addf %51, %50 : vector<16x64xf32>
    %53 = arith.mulf %15, %48 : vector<16x64xf32>
    %c0_33 = arith.constant 0 : index
    %c0_34 = arith.constant 0 : index
    %c0_35 = arith.constant 0 : index
    %54 = vector.load %arg2[%c0_33, %c0_34, %c0_35] : memref<5x16x64xf32, #tpu.memory_space<vmem>>, vector<1x16x64xf32>
    %55 = vector.shape_cast %54 : vector<1x16x64xf32> to vector<16x64xf32>
    %56 = arith.addf %55, %29 : vector<16x64xf32>
    %57 = arith.mulf %50, %56 : vector<16x64xf32>
    %58 = arith.addf %53, %57 : vector<16x64xf32>
    %c1 = arith.constant 1 : index
    %c0_36 = arith.constant 0 : index
    %c0_37 = arith.constant 0 : index
    %59 = vector.load %arg1[%c1, %c0_36, %c0_37] : memref<5x16x3xf32, #tpu.memory_space<vmem>>, vector<1x16x3xf32>
    %60 = vector.shape_cast %59 : vector<1x16x3xf32> to vector<16x3xf32>
    %61 = arith.truncf %60 : vector<16x3xf32> to vector<16x3xbf16>
    %cst_38 = arith.constant dense<0.000000e+00> : vector<16x64xf32>
    %62 = tpu.matmul %61, %2, %cst_38 {dimension_numbers = #tpu.dot_dimension_numbers<[1], [0], [0], [1], [0, 0, 1, 1], [], []>} : vector<16x3xbf16>, vector<3x64xbf16>, vector<16x64xf32> -> vector<16x64xf32>
    %63 = vector.broadcast %3 : vector<1x64xf32> to vector<16x64xf32>
    %64 = arith.addf %62, %63 : vector<16x64xf32>
    %cst_39 = arith.constant 0.000000e+00 : f32
    %65 = vector.broadcast %cst_39 : f32 to vector<16x64xf32>
    %66 = arith.maximumf %64, %65 : vector<16x64xf32>
    %67 = arith.truncf %66 : vector<16x64xf32> to vector<16x64xbf16>
    %cst_40 = arith.constant dense<0.000000e+00> : vector<16x64xf32>
    %68 = tpu.matmul %67, %5, %cst_40 {dimension_numbers = #tpu.dot_dimension_numbers<[1], [0], [0], [1], [0, 0, 1, 1], [], []>} : vector<16x64xbf16>, vector<64x64xbf16>, vector<16x64xf32> -> vector<16x64xf32>
    %69 = vector.broadcast %6 : vector<1x64xf32> to vector<16x64xf32>
    %70 = arith.addf %68, %69 : vector<16x64xf32>
    %cst_41 = arith.constant 0.000000e+00 : f32
    %71 = vector.broadcast %cst_41 : f32 to vector<16x64xf32>
    %72 = arith.maximumf %70, %71 : vector<16x64xf32>
    %c1_42 = arith.constant 1 : index
    %c0_43 = arith.constant 0 : index
    %c0_44 = arith.constant 0 : index
    %73 = vector.load %arg3[%c1_42, %c0_43, %c0_44] : memref<5x16x64xf32, #tpu.memory_space<vmem>>, vector<1x16x64xf32>
    %74 = vector.shape_cast %73 : vector<1x16x64xf32> to vector<16x64xf32>
    %75 = arith.subf %0, %74 : vector<16x64xf32>
    %76 = arith.addf %75, %72 : vector<16x64xf32>
    %77 = arith.truncf %76 : vector<16x64xf32> to vector<16x64xbf16>
    %cst_45 = arith.constant dense<0.000000e+00> : vector<16x64xf32>
    %78 = tpu.matmul %77, %8, %cst_45 {dimension_numbers = #tpu.dot_dimension_numbers<[1], [0], [0], [1], [0, 0, 1, 1], [], []>} : vector<16x64xbf16>, vector<64x64xbf16>, vector<16x64xf32> -> vector<16x64xf32>
    %79 = vector.broadcast %9 : vector<1x64xf32> to vector<16x64xf32>
    %80 = arith.addf %78, %79 : vector<16x64xf32>
    %cst_46 = arith.constant 0.000000e+00 : f32
    %81 = vector.broadcast %cst_46 : f32 to vector<16x64xf32>
    %82 = arith.maximumf %80, %81 : vector<16x64xf32>
    %83 = arith.truncf %82 : vector<16x64xf32> to vector<16x64xbf16>
    %cst_47 = arith.constant dense<0.000000e+00> : vector<16x64xf32>
    %84 = tpu.matmul %83, %11, %cst_47 {dimension_numbers = #tpu.dot_dimension_numbers<[1], [0], [0], [1], [0, 0, 1, 1], [], []>} : vector<16x64xbf16>, vector<64x64xbf16>, vector<16x64xf32> -> vector<16x64xf32>
    %85 = vector.broadcast %12 : vector<1x64xf32> to vector<16x64xf32>
    %86 = arith.addf %84, %85 : vector<16x64xf32>
    %cst_48 = arith.constant 0.000000e+00 : f32
    %87 = vector.broadcast %cst_48 : f32 to vector<16x64xf32>
    %88 = arith.maximumf %86, %87 : vector<16x64xf32>
    %89 = arith.maximumf %46, %88 : vector<16x64xf32>
    %90 = arith.subf %46, %89 : vector<16x64xf32>
    %91 = math.exp %90 : vector<16x64xf32>
    %92 = arith.subf %88, %89 : vector<16x64xf32>
    %93 = math.exp %92 : vector<16x64xf32>
    %94 = arith.mulf %52, %91 : vector<16x64xf32>
    %95 = arith.addf %94, %93 : vector<16x64xf32>
    %96 = arith.mulf %58, %91 : vector<16x64xf32>
    %c1_49 = arith.constant 1 : index
    %c0_50 = arith.constant 0 : index
    %c0_51 = arith.constant 0 : index
    %97 = vector.load %arg2[%c1_49, %c0_50, %c0_51] : memref<5x16x64xf32, #tpu.memory_space<vmem>>, vector<1x16x64xf32>
    %98 = vector.shape_cast %97 : vector<1x16x64xf32> to vector<16x64xf32>
    %99 = arith.addf %98, %72 : vector<16x64xf32>
    %100 = arith.mulf %93, %99 : vector<16x64xf32>
    %101 = arith.addf %96, %100 : vector<16x64xf32>
    %c2 = arith.constant 2 : index
    %c0_52 = arith.constant 0 : index
    %c0_53 = arith.constant 0 : index
    %102 = vector.load %arg1[%c2, %c0_52, %c0_53] : memref<5x16x3xf32, #tpu.memory_space<vmem>>, vector<1x16x3xf32>
    %103 = vector.shape_cast %102 : vector<1x16x3xf32> to vector<16x3xf32>
    %104 = arith.truncf %103 : vector<16x3xf32> to vector<16x3xbf16>
    %cst_54 = arith.constant dense<0.000000e+00> : vector<16x64xf32>
    %105 = tpu.matmul %104, %2, %cst_54 {dimension_numbers = #tpu.dot_dimension_numbers<[1], [0], [0], [1], [0, 0, 1, 1], [], []>} : vector<16x3xbf16>, vector<3x64xbf16>, vector<16x64xf32> -> vector<16x64xf32>
    %106 = vector.broadcast %3 : vector<1x64xf32> to vector<16x64xf32>
    %107 = arith.addf %105, %106 : vector<16x64xf32>
    %cst_55 = arith.constant 0.000000e+00 : f32
    %108 = vector.broadcast %cst_55 : f32 to vector<16x64xf32>
    %109 = arith.maximumf %107, %108 : vector<16x64xf32>
    %110 = arith.truncf %109 : vector<16x64xf32> to vector<16x64xbf16>
    %cst_56 = arith.constant dense<0.000000e+00> : vector<16x64xf32>
    %111 = tpu.matmul %110, %5, %cst_56 {dimension_numbers = #tpu.dot_dimension_numbers<[1], [0], [0], [1], [0, 0, 1, 1], [], []>} : vector<16x64xbf16>, vector<64x64xbf16>, vector<16x64xf32> -> vector<16x64xf32>
    %112 = vector.broadcast %6 : vector<1x64xf32> to vector<16x64xf32>
    %113 = arith.addf %111, %112 : vector<16x64xf32>
    %cst_57 = arith.constant 0.000000e+00 : f32
    %114 = vector.broadcast %cst_57 : f32 to vector<16x64xf32>
    %115 = arith.maximumf %113, %114 : vector<16x64xf32>
    %c2_58 = arith.constant 2 : index
    %c0_59 = arith.constant 0 : index
    %c0_60 = arith.constant 0 : index
    %116 = vector.load %arg3[%c2_58, %c0_59, %c0_60] : memref<5x16x64xf32, #tpu.memory_space<vmem>>, vector<1x16x64xf32>
    %117 = vector.shape_cast %116 : vector<1x16x64xf32> to vector<16x64xf32>
    %118 = arith.subf %0, %117 : vector<16x64xf32>
    %119 = arith.addf %118, %115 : vector<16x64xf32>
    %120 = arith.truncf %119 : vector<16x64xf32> to vector<16x64xbf16>
    %cst_61 = arith.constant dense<0.000000e+00> : vector<16x64xf32>
    %121 = tpu.matmul %120, %8, %cst_61 {dimension_numbers = #tpu.dot_dimension_numbers<[1], [0], [0], [1], [0, 0, 1, 1], [], []>} : vector<16x64xbf16>, vector<64x64xbf16>, vector<16x64xf32> -> vector<16x64xf32>
    %122 = vector.broadcast %9 : vector<1x64xf32> to vector<16x64xf32>
    %123 = arith.addf %121, %122 : vector<16x64xf32>
    %cst_62 = arith.constant 0.000000e+00 : f32
    %124 = vector.broadcast %cst_62 : f32 to vector<16x64xf32>
    %125 = arith.maximumf %123, %124 : vector<16x64xf32>
    %126 = arith.truncf %125 : vector<16x64xf32> to vector<16x64xbf16>
    %cst_63 = arith.constant dense<0.000000e+00> : vector<16x64xf32>
    %127 = tpu.matmul %126, %11, %cst_63 {dimension_numbers = #tpu.dot_dimension_numbers<[1], [0], [0], [1], [0, 0, 1, 1], [], []>} : vector<16x64xbf16>, vector<64x64xbf16>, vector<16x64xf32> -> vector<16x64xf32>
    %128 = vector.broadcast %12 : vector<1x64xf32> to vector<16x64xf32>
    %129 = arith.addf %127, %128 : vector<16x64xf32>
    %cst_64 = arith.constant 0.000000e+00 : f32
    %130 = vector.broadcast %cst_64 : f32 to vector<16x64xf32>
    %131 = arith.maximumf %129, %130 : vector<16x64xf32>
    %132 = arith.maximumf %89, %131 : vector<16x64xf32>
    %133 = arith.subf %89, %132 : vector<16x64xf32>
    %134 = math.exp %133 : vector<16x64xf32>
    %135 = arith.subf %131, %132 : vector<16x64xf32>
    %136 = math.exp %135 : vector<16x64xf32>
    %137 = arith.mulf %95, %134 : vector<16x64xf32>
    %138 = arith.addf %137, %136 : vector<16x64xf32>
    %139 = arith.mulf %101, %134 : vector<16x64xf32>
    %c2_65 = arith.constant 2 : index
    %c0_66 = arith.constant 0 : index
    %c0_67 = arith.constant 0 : index
    %140 = vector.load %arg2[%c2_65, %c0_66, %c0_67] : memref<5x16x64xf32, #tpu.memory_space<vmem>>, vector<1x16x64xf32>
    %141 = vector.shape_cast %140 : vector<1x16x64xf32> to vector<16x64xf32>
    %142 = arith.addf %141, %115 : vector<16x64xf32>
    %143 = arith.mulf %136, %142 : vector<16x64xf32>
    %144 = arith.addf %139, %143 : vector<16x64xf32>
    %c3 = arith.constant 3 : index
    %c0_68 = arith.constant 0 : index
    %c0_69 = arith.constant 0 : index
    %145 = vector.load %arg1[%c3, %c0_68, %c0_69] : memref<5x16x3xf32, #tpu.memory_space<vmem>>, vector<1x16x3xf32>
    %146 = vector.shape_cast %145 : vector<1x16x3xf32> to vector<16x3xf32>
    %147 = arith.truncf %146 : vector<16x3xf32> to vector<16x3xbf16>
    %cst_70 = arith.constant dense<0.000000e+00> : vector<16x64xf32>
    %148 = tpu.matmul %147, %2, %cst_70 {dimension_numbers = #tpu.dot_dimension_numbers<[1], [0], [0], [1], [0, 0, 1, 1], [], []>} : vector<16x3xbf16>, vector<3x64xbf16>, vector<16x64xf32> -> vector<16x64xf32>
    %149 = vector.broadcast %3 : vector<1x64xf32> to vector<16x64xf32>
    %150 = arith.addf %148, %149 : vector<16x64xf32>
    %cst_71 = arith.constant 0.000000e+00 : f32
    %151 = vector.broadcast %cst_71 : f32 to vector<16x64xf32>
    %152 = arith.maximumf %150, %151 : vector<16x64xf32>
    %153 = arith.truncf %152 : vector<16x64xf32> to vector<16x64xbf16>
    %cst_72 = arith.constant dense<0.000000e+00> : vector<16x64xf32>
    %154 = tpu.matmul %153, %5, %cst_72 {dimension_numbers = #tpu.dot_dimension_numbers<[1], [0], [0], [1], [0, 0, 1, 1], [], []>} : vector<16x64xbf16>, vector<64x64xbf16>, vector<16x64xf32> -> vector<16x64xf32>
    %155 = vector.broadcast %6 : vector<1x64xf32> to vector<16x64xf32>
    %156 = arith.addf %154, %155 : vector<16x64xf32>
    %cst_73 = arith.constant 0.000000e+00 : f32
    %157 = vector.broadcast %cst_73 : f32 to vector<16x64xf32>
    %158 = arith.maximumf %156, %157 : vector<16x64xf32>
    %c3_74 = arith.constant 3 : index
    %c0_75 = arith.constant 0 : index
    %c0_76 = arith.constant 0 : index
    %159 = vector.load %arg3[%c3_74, %c0_75, %c0_76] : memref<5x16x64xf32, #tpu.memory_space<vmem>>, vector<1x16x64xf32>
    %160 = vector.shape_cast %159 : vector<1x16x64xf32> to vector<16x64xf32>
    %161 = arith.subf %0, %160 : vector<16x64xf32>
    %162 = arith.addf %161, %158 : vector<16x64xf32>
    %163 = arith.truncf %162 : vector<16x64xf32> to vector<16x64xbf16>
    %cst_77 = arith.constant dense<0.000000e+00> : vector<16x64xf32>
    %164 = tpu.matmul %163, %8, %cst_77 {dimension_numbers = #tpu.dot_dimension_numbers<[1], [0], [0], [1], [0, 0, 1, 1], [], []>} : vector<16x64xbf16>, vector<64x64xbf16>, vector<16x64xf32> -> vector<16x64xf32>
    %165 = vector.broadcast %9 : vector<1x64xf32> to vector<16x64xf32>
    %166 = arith.addf %164, %165 : vector<16x64xf32>
    %cst_78 = arith.constant 0.000000e+00 : f32
    %167 = vector.broadcast %cst_78 : f32 to vector<16x64xf32>
    %168 = arith.maximumf %166, %167 : vector<16x64xf32>
    %169 = arith.truncf %168 : vector<16x64xf32> to vector<16x64xbf16>
    %cst_79 = arith.constant dense<0.000000e+00> : vector<16x64xf32>
    %170 = tpu.matmul %169, %11, %cst_79 {dimension_numbers = #tpu.dot_dimension_numbers<[1], [0], [0], [1], [0, 0, 1, 1], [], []>} : vector<16x64xbf16>, vector<64x64xbf16>, vector<16x64xf32> -> vector<16x64xf32>
    %171 = vector.broadcast %12 : vector<1x64xf32> to vector<16x64xf32>
    %172 = arith.addf %170, %171 : vector<16x64xf32>
    %cst_80 = arith.constant 0.000000e+00 : f32
    %173 = vector.broadcast %cst_80 : f32 to vector<16x64xf32>
    %174 = arith.maximumf %172, %173 : vector<16x64xf32>
    %175 = arith.maximumf %132, %174 : vector<16x64xf32>
    %176 = arith.subf %132, %175 : vector<16x64xf32>
    %177 = math.exp %176 : vector<16x64xf32>
    %178 = arith.subf %174, %175 : vector<16x64xf32>
    %179 = math.exp %178 : vector<16x64xf32>
    %180 = arith.mulf %138, %177 : vector<16x64xf32>
    %181 = arith.addf %180, %179 : vector<16x64xf32>
    %182 = arith.mulf %144, %177 : vector<16x64xf32>
    %c3_81 = arith.constant 3 : index
    %c0_82 = arith.constant 0 : index
    %c0_83 = arith.constant 0 : index
    %183 = vector.load %arg2[%c3_81, %c0_82, %c0_83] : memref<5x16x64xf32, #tpu.memory_space<vmem>>, vector<1x16x64xf32>
    %184 = vector.shape_cast %183 : vector<1x16x64xf32> to vector<16x64xf32>
    %185 = arith.addf %184, %158 : vector<16x64xf32>
    %186 = arith.mulf %179, %185 : vector<16x64xf32>
    %187 = arith.addf %182, %186 : vector<16x64xf32>
    %c4 = arith.constant 4 : index
    %c0_84 = arith.constant 0 : index
    %c0_85 = arith.constant 0 : index
    %188 = vector.load %arg1[%c4, %c0_84, %c0_85] : memref<5x16x3xf32, #tpu.memory_space<vmem>>, vector<1x16x3xf32>
    %189 = vector.shape_cast %188 : vector<1x16x3xf32> to vector<16x3xf32>
    %190 = arith.truncf %189 : vector<16x3xf32> to vector<16x3xbf16>
    %cst_86 = arith.constant dense<0.000000e+00> : vector<16x64xf32>
    %191 = tpu.matmul %190, %2, %cst_86 {dimension_numbers = #tpu.dot_dimension_numbers<[1], [0], [0], [1], [0, 0, 1, 1], [], []>} : vector<16x3xbf16>, vector<3x64xbf16>, vector<16x64xf32> -> vector<16x64xf32>
    %192 = vector.broadcast %3 : vector<1x64xf32> to vector<16x64xf32>
    %193 = arith.addf %191, %192 : vector<16x64xf32>
    %cst_87 = arith.constant 0.000000e+00 : f32
    %194 = vector.broadcast %cst_87 : f32 to vector<16x64xf32>
    %195 = arith.maximumf %193, %194 : vector<16x64xf32>
    %196 = arith.truncf %195 : vector<16x64xf32> to vector<16x64xbf16>
    %cst_88 = arith.constant dense<0.000000e+00> : vector<16x64xf32>
    %197 = tpu.matmul %196, %5, %cst_88 {dimension_numbers = #tpu.dot_dimension_numbers<[1], [0], [0], [1], [0, 0, 1, 1], [], []>} : vector<16x64xbf16>, vector<64x64xbf16>, vector<16x64xf32> -> vector<16x64xf32>
    %198 = vector.broadcast %6 : vector<1x64xf32> to vector<16x64xf32>
    %199 = arith.addf %197, %198 : vector<16x64xf32>
    %cst_89 = arith.constant 0.000000e+00 : f32
    %200 = vector.broadcast %cst_89 : f32 to vector<16x64xf32>
    %201 = arith.maximumf %199, %200 : vector<16x64xf32>
    %c4_90 = arith.constant 4 : index
    %c0_91 = arith.constant 0 : index
    %c0_92 = arith.constant 0 : index
    %202 = vector.load %arg3[%c4_90, %c0_91, %c0_92] : memref<5x16x64xf32, #tpu.memory_space<vmem>>, vector<1x16x64xf32>
    %203 = vector.shape_cast %202 : vector<1x16x64xf32> to vector<16x64xf32>
    %204 = arith.subf %0, %203 : vector<16x64xf32>
    %205 = arith.addf %204, %201 : vector<16x64xf32>
    %206 = arith.truncf %205 : vector<16x64xf32> to vector<16x64xbf16>
    %cst_93 = arith.constant dense<0.000000e+00> : vector<16x64xf32>
    %207 = tpu.matmul %206, %8, %cst_93 {dimension_numbers = #tpu.dot_dimension_numbers<[1], [0], [0], [1], [0, 0, 1, 1], [], []>} : vector<16x64xbf16>, vector<64x64xbf16>, vector<16x64xf32> -> vector<16x64xf32>
    %208 = vector.broadcast %9 : vector<1x64xf32> to vector<16x64xf32>
    %209 = arith.addf %207, %208 : vector<16x64xf32>
    %cst_94 = arith.constant 0.000000e+00 : f32
    %210 = vector.broadcast %cst_94 : f32 to vector<16x64xf32>
    %211 = arith.maximumf %209, %210 : vector<16x64xf32>
    %212 = arith.truncf %211 : vector<16x64xf32> to vector<16x64xbf16>
    %cst_95 = arith.constant dense<0.000000e+00> : vector<16x64xf32>
    %213 = tpu.matmul %212, %11, %cst_95 {dimension_numbers = #tpu.dot_dimension_numbers<[1], [0], [0], [1], [0, 0, 1, 1], [], []>} : vector<16x64xbf16>, vector<64x64xbf16>, vector<16x64xf32> -> vector<16x64xf32>
    %214 = vector.broadcast %12 : vector<1x64xf32> to vector<16x64xf32>
    %215 = arith.addf %213, %214 : vector<16x64xf32>
    %cst_96 = arith.constant 0.000000e+00 : f32
    %216 = vector.broadcast %cst_96 : f32 to vector<16x64xf32>
    %217 = arith.maximumf %215, %216 : vector<16x64xf32>
    %218 = arith.maximumf %175, %217 : vector<16x64xf32>
    %219 = arith.subf %175, %218 : vector<16x64xf32>
    %220 = math.exp %219 : vector<16x64xf32>
    %221 = arith.subf %217, %218 : vector<16x64xf32>
    %222 = math.exp %221 : vector<16x64xf32>
    %223 = arith.mulf %181, %220 : vector<16x64xf32>
    %224 = arith.addf %223, %222 : vector<16x64xf32>
    %225 = arith.mulf %187, %220 : vector<16x64xf32>
    %c4_97 = arith.constant 4 : index
    %c0_98 = arith.constant 0 : index
    %c0_99 = arith.constant 0 : index
    %226 = vector.load %arg2[%c4_97, %c0_98, %c0_99] : memref<5x16x64xf32, #tpu.memory_space<vmem>>, vector<1x16x64xf32>
    %227 = vector.shape_cast %226 : vector<1x16x64xf32> to vector<16x64xf32>
    %228 = arith.addf %227, %201 : vector<16x64xf32>
    %229 = arith.mulf %222, %228 : vector<16x64xf32>
    %230 = arith.addf %225, %229 : vector<16x64xf32>
    %231 = tpu.reciprocal %224 {approx = true} : vector<16x64xf32> -> vector<16x64xf32>
    %232 = arith.mulf %230, %231 : vector<16x64xf32>
    %c0_100 = arith.constant 0 : index
    %c0_101 = arith.constant 0 : index
    %233 = vector.load %arg13[%c0_100, %c0_101] : memref<16x64xf32, #tpu.memory_space<vmem>>, vector<16x64xf32>
    tpu.vector_store %arg13[%c0_100, %c0_101], %232 {strides = array<i32>} : memref<16x64xf32, #tpu.memory_space<vmem>>, vector<16x64xf32>,
    return
  }
  func.func @transform_0(%arg0: i32) -> (i32, i32, i32) {
    %c0_i32 = arith.constant 0 : i32
    %c0_i32_0 = arith.constant 0 : i32
    %c0_i32_1 = arith.constant 0 : i32
    return %c0_i32, %arg0, %c0_i32_0 : i32, i32, i32
  }
  func.func @transform_1(%arg0: i32) -> (i32, i32, i32) {
    %c0_i32 = arith.constant 0 : i32
    %c0_i32_0 = arith.constant 0 : i32
    %c0_i32_1 = arith.constant 0 : i32
    return %c0_i32, %arg0, %c0_i32_0 : i32, i32, i32
  }
  func.func @transform_2(%arg0: i32) -> (i32, i32, i32) {
    %c0_i32 = arith.constant 0 : i32
    %c0_i32_0 = arith.constant 0 : i32
    %c0_i32_1 = arith.constant 0 : i32
    return %c0_i32, %arg0, %c0_i32_0 : i32, i32, i32
  }
  func.func @transform_3(%arg0: i32) -> (i32, i32) {
    %c0_i32 = arith.constant 0 : i32
    %c0_i32_0 = arith.constant 0 : i32
    return %arg0, %c0_i32 : i32, i32
  }
  func.func @transform_4(%arg0: i32) -> (i32, i32) {
    %c0_i32 = arith.constant 0 : i32
    %c0_i32_0 = arith.constant 0 : i32
    %c0_i32_1 = arith.constant 0 : i32
    return %c0_i32, %c0_i32_0 : i32, i32
  }
  func.func @transform_5(%arg0: i32) -> (i32, i32) {
    %c0_i32 = arith.constant 0 : i32
    %c0_i32_0 = arith.constant 0 : i32
    %c0_i32_1 = arith.constant 0 : i32
    return %c0_i32, %c0_i32_0 : i32, i32
  }
  func.func @transform_6(%arg0: i32) -> (i32, i32) {
    %c0_i32 = arith.constant 0 : i32
    %c0_i32_0 = arith.constant 0 : i32
    %c0_i32_1 = arith.constant 0 : i32
    return %c0_i32, %c0_i32_0 : i32, i32
  }
  func.func @transform_7(%arg0: i32) -> (i32, i32) {
    %c0_i32 = arith.constant 0 : i32
    %c0_i32_0 = arith.constant 0 : i32
    %c0_i32_1 = arith.constant 0 : i32
    return %c0_i32, %c0_i32_0 : i32, i32
  }
  func.func @transform_8(%arg0: i32) -> (i32, i32) {
    %c0_i32 = arith.constant 0 : i32
    %c0_i32_0 = arith.constant 0 : i32
    %c0_i32_1 = arith.constant 0 : i32
    return %c0_i32, %c0_i32_0 : i32, i32
  }
  func.func @transform_9(%arg0: i32) -> (i32, i32) {
    %c0_i32 = arith.constant 0 : i32
    %c0_i32_0 = arith.constant 0 : i32
    %c0_i32_1 = arith.constant 0 : i32
    return %c0_i32, %c0_i32_0 : i32, i32
  }
  func.func @transform_10(%arg0: i32) -> (i32, i32) {
    %c0_i32 = arith.constant 0 : i32
    %c0_i32_0 = arith.constant 0 : i32
    %c0_i32_1 = arith.constant 0 : i32
    return %c0_i32, %c0_i32_0 : i32, i32
  }
  func.func @transform_11(%arg0: i32) -> (i32, i32) {
    %c0_i32 = arith.constant 0 : i32
    %c0_i32_0 = arith.constant 0 : i32
    %c0_i32_1 = arith.constant 0 : i32
    return %c0_i32, %c0_i32_0 : i32, i32
  }
  func.func @transform_12(%arg0: i32) -> (i32, i32) {
    %c0_i32 = arith.constant 0 : i32
    %c0_i32_0 = arith.constant 0 : i32
    return %arg0, %c0_i32 : i32, i32
  }
}

module attributes {stable_mosaic.version = 11 : i64} {
  func.func @_knn_interp_kernel(%arg0: i32, %arg1: memref<3x64x32xf32, #tpu.memory_space<vmem>>, %arg2: memref<3x64x1xf32, #tpu.memory_space<vmem>>, %arg3: memref<64x32xf32, #tpu.memory_space<vmem>>) attributes {dimension_semantics = [#tpu.dimension_semantics<parallel>], iteration_bounds = array<i64: 1>, scalar_prefetch = 0 : i64, scratch_operands = 0 : i64, tpu.core_type = #tpu.core_type<tc>, window_params = [{transform_indices = @transform_0, window_bounds = array<i64: 3, 64, 32>}, {transform_indices = @transform_1, window_bounds = array<i64: 3, 64, 1>}, {transform_indices = @transform_2, window_bounds = array<i64: 64, 32>}]} {
    %c0 = arith.constant 0 : index
    %c0_0 = arith.constant 0 : index
    %c0_1 = arith.constant 0 : index
    %0 = vector.load %arg2[%c0, %c0_0, %c0_1] : memref<3x64x1xf32, #tpu.memory_space<vmem>>, vector<1x64x1xf32>
    %1 = vector.shape_cast %0 : vector<1x64x1xf32> to vector<64x1xf32>
    %c0_2 = arith.constant 0 : index
    %c0_3 = arith.constant 0 : index
    %c0_4 = arith.constant 0 : index
    %2 = vector.load %arg1[%c0_2, %c0_3, %c0_4] : memref<3x64x32xf32, #tpu.memory_space<vmem>>, vector<1x64x32xf32>
    %3 = vector.shape_cast %2 : vector<1x64x32xf32> to vector<64x32xf32>
    %4 = vector.broadcast %1 : vector<64x1xf32> to vector<64x32xf32>
    %5 = arith.mulf %4, %3 : vector<64x32xf32>
    %c1 = arith.constant 1 : index
    %c0_5 = arith.constant 0 : index
    %c0_6 = arith.constant 0 : index
    %6 = vector.load %arg2[%c1, %c0_5, %c0_6] : memref<3x64x1xf32, #tpu.memory_space<vmem>>, vector<1x64x1xf32>
    %7 = vector.shape_cast %6 : vector<1x64x1xf32> to vector<64x1xf32>
    %c1_7 = arith.constant 1 : index
    %c0_8 = arith.constant 0 : index
    %c0_9 = arith.constant 0 : index
    %8 = vector.load %arg1[%c1_7, %c0_8, %c0_9] : memref<3x64x32xf32, #tpu.memory_space<vmem>>, vector<1x64x32xf32>
    %9 = vector.shape_cast %8 : vector<1x64x32xf32> to vector<64x32xf32>
    %10 = vector.broadcast %7 : vector<64x1xf32> to vector<64x32xf32>
    %11 = arith.mulf %10, %9 : vector<64x32xf32>
    %12 = arith.addf %5, %11 : vector<64x32xf32>
    %13 = arith.addf %1, %7 : vector<64x1xf32>
    %c2 = arith.constant 2 : index
    %c0_10 = arith.constant 0 : index
    %c0_11 = arith.constant 0 : index
    %14 = vector.load %arg2[%c2, %c0_10, %c0_11] : memref<3x64x1xf32, #tpu.memory_space<vmem>>, vector<1x64x1xf32>
    %15 = vector.shape_cast %14 : vector<1x64x1xf32> to vector<64x1xf32>
    %c2_12 = arith.constant 2 : index
    %c0_13 = arith.constant 0 : index
    %c0_14 = arith.constant 0 : index
    %16 = vector.load %arg1[%c2_12, %c0_13, %c0_14] : memref<3x64x32xf32, #tpu.memory_space<vmem>>, vector<1x64x32xf32>
    %17 = vector.shape_cast %16 : vector<1x64x32xf32> to vector<64x32xf32>
    %18 = vector.broadcast %15 : vector<64x1xf32> to vector<64x32xf32>
    %19 = arith.mulf %18, %17 : vector<64x32xf32>
    %20 = arith.addf %12, %19 : vector<64x32xf32>
    %21 = arith.addf %13, %15 : vector<64x1xf32>
    %22 = tpu.reciprocal %21 {approx = true} : vector<64x1xf32> -> vector<64x1xf32>
    %23 = vector.broadcast %22 : vector<64x1xf32> to vector<64x32xf32>
    %24 = arith.mulf %20, %23 : vector<64x32xf32>
    %c0_15 = arith.constant 0 : index
    %c0_16 = arith.constant 0 : index
    %25 = vector.load %arg3[%c0_15, %c0_16] : memref<64x32xf32, #tpu.memory_space<vmem>>, vector<64x32xf32>
    tpu.vector_store %arg3[%c0_15, %c0_16], %24 {strides = array<i32>} : memref<64x32xf32, #tpu.memory_space<vmem>>, vector<64x32xf32>,
    return
  }
  func.func @transform_0(%arg0: i32) -> (i32, i32, i32) {
    %c0_i32 = arith.constant 0 : i32
    %c0_i32_0 = arith.constant 0 : i32
    %c0_i32_1 = arith.constant 0 : i32
    return %c0_i32, %arg0, %c0_i32_0 : i32, i32, i32
  }
  func.func @transform_1(%arg0: i32) -> (i32, i32, i32) {
    %c0_i32 = arith.constant 0 : i32
    %c0_i32_0 = arith.constant 0 : i32
    %c0_i32_1 = arith.constant 0 : i32
    return %c0_i32, %arg0, %c0_i32_0 : i32, i32, i32
  }
  func.func @transform_2(%arg0: i32) -> (i32, i32) {
    %c0_i32 = arith.constant 0 : i32
    %c0_i32_0 = arith.constant 0 : i32
    return %arg0, %c0_i32 : i32, i32
  }
}

module attributes {stable_mosaic.version = 11 : i64} {
  func.func @_linear_logsoftmax_kernel(%arg0: i32, %arg1: memref<64x64xf32, #tpu.memory_space<vmem>>, %arg2: memref<64x6xf32, #tpu.memory_space<vmem>>, %arg3: memref<1x6xf32, #tpu.memory_space<vmem>>, %arg4: memref<64x6xf32, #tpu.memory_space<vmem>>) attributes {dimension_semantics = [#tpu.dimension_semantics<parallel>], iteration_bounds = array<i64: 1>, scalar_prefetch = 0 : i64, scratch_operands = 0 : i64, tpu.core_type = #tpu.core_type<tc>, window_params = [{transform_indices = @transform_0, window_bounds = array<i64: 64, 64>}, {pipeline_mode = #tpu.pipeline_mode<synchronous>, transform_indices = @transform_1, window_bounds = array<i64: 64, 6>}, {pipeline_mode = #tpu.pipeline_mode<synchronous>, transform_indices = @transform_2, window_bounds = array<i64: 1, 6>}, {transform_indices = @transform_3, window_bounds = array<i64: 64, 6>}]} {
    %c0 = arith.constant 0 : index
    %c0_0 = arith.constant 0 : index
    %0 = vector.load %arg1[%c0, %c0_0] : memref<64x64xf32, #tpu.memory_space<vmem>>, vector<64x64xf32>
    %1 = arith.truncf %0 : vector<64x64xf32> to vector<64x64xbf16>
    %c0_1 = arith.constant 0 : index
    %c0_2 = arith.constant 0 : index
    %2 = vector.load %arg2[%c0_1, %c0_2] : memref<64x6xf32, #tpu.memory_space<vmem>>, vector<64x6xf32>
    %3 = arith.truncf %2 : vector<64x6xf32> to vector<64x6xbf16>
    %cst = arith.constant dense<0.000000e+00> : vector<64x6xf32>
    %4 = tpu.matmul %1, %3, %cst {dimension_numbers = #tpu.dot_dimension_numbers<[1], [0], [0], [1], [0, 0, 1, 1], [], []>} : vector<64x64xbf16>, vector<64x6xbf16>, vector<64x6xf32> -> vector<64x6xf32>
    %c0_3 = arith.constant 0 : index
    %c0_4 = arith.constant 0 : index
    %5 = vector.load %arg3[%c0_3, %c0_4] : memref<1x6xf32, #tpu.memory_space<vmem>>, vector<1x6xf32>
    %6 = vector.broadcast %5 : vector<1x6xf32> to vector<64x6xf32>
    %7 = arith.addf %4, %6 : vector<64x6xf32>
    %cst_5 = arith.constant dense<0xFF800000> : vector<64xf32>
    %8 = vector.multi_reduction <maximumf>, %7, %cst_5 [1] : vector<64x6xf32> to vector<64xf32>
    %9 = vector.shape_cast %8 : vector<64xf32> to vector<64x1xf32>
    %10 = vector.broadcast %9 : vector<64x1xf32> to vector<64x6xf32>
    %11 = arith.subf %7, %10 : vector<64x6xf32>
    %12 = math.exp %11 : vector<64x6xf32>
    %cst_6 = arith.constant dense<0.000000e+00> : vector<64xf32>
    %13 = vector.multi_reduction <add>, %12, %cst_6 [1] : vector<64x6xf32> to vector<64xf32>
    %14 = vector.shape_cast %13 : vector<64xf32> to vector<64x1xf32>
    %15 = math.log %14 : vector<64x1xf32>
    %16 = vector.broadcast %15 : vector<64x1xf32> to vector<64x6xf32>
    %17 = arith.subf %11, %16 : vector<64x6xf32>
    %c0_7 = arith.constant 0 : index
    %c0_8 = arith.constant 0 : index
    %18 = vector.load %arg4[%c0_7, %c0_8] : memref<64x6xf32, #tpu.memory_space<vmem>>, vector<64x6xf32>
    tpu.vector_store %arg4[%c0_7, %c0_8], %17 {strides = array<i32>} : memref<64x6xf32, #tpu.memory_space<vmem>>, vector<64x6xf32>,
    return
  }
  func.func @transform_0(%arg0: i32) -> (i32, i32) {
    %c0_i32 = arith.constant 0 : i32
    %c0_i32_0 = arith.constant 0 : i32
    return %arg0, %c0_i32 : i32, i32
  }
  func.func @transform_1(%arg0: i32) -> (i32, i32) {
    %c0_i32 = arith.constant 0 : i32
    %c0_i32_0 = arith.constant 0 : i32
    %c0_i32_1 = arith.constant 0 : i32
    return %c0_i32, %c0_i32_0 : i32, i32
  }
  func.func @transform_2(%arg0: i32) -> (i32, i32) {
    %c0_i32 = arith.constant 0 : i32
    %c0_i32_0 = arith.constant 0 : i32
    %c0_i32_1 = arith.constant 0 : i32
    return %c0_i32, %c0_i32_0 : i32, i32
  }
  func.func @transform_3(%arg0: i32) -> (i32, i32) {
    %c0_i32 = arith.constant 0 : i32
    %c0_i32_0 = arith.constant 0 : i32
    return %arg0, %c0_i32 : i32, i32
  }
}

</mosaic_0001>

<llo_original>
// kernel: point_transformer_forward.26
$region0: #{point_transformer_forward.26}
  #allocation0 [shape = 'u32[]', space=smem, size = 0x4, offset = 0x4, fixed_abs, tag = 'smem constant byte address 0x4 - core index']
  #allocation1 [shape = 'u32[72,128]{1,0:T(1,128)}', space=vmem, size = 0x9000, scoped, tag = 'internal scratch']
  %s0 = inlined_call_operand.vmem [shape: f32[64,32], index: 0, kind: input, shape index: {}]
  %s1 = inlined_call_operand.vmem [shape: f32[32,32], index: 1, kind: input, shape index: {}]
  %s2 = inlined_call_operand.vmem [shape: f32[1,32], index: 2, kind: input, shape index: {}]
  %s3 = inlined_call_operand.vmem [shape: f32[64,32], index: 3, kind: output, shape index: {}]
  %s4 = sld [smem:[#allocation0]]
  $region22: #{point_transformer_forward.26} parent=0
    _
  %s6 = ssub.s32 1, %s4
  %s7 = scalar_select 0, %s6, %s4
  // Predicated region
  $region2: #{point_transformer_forward.26} parent=0 // pred_check
    _
  $region3: #{point_transformer_forward.26} parent=0 // pred_check_branch
    %9 = sbr.rel (0) target = $region5
  $region4: #{point_transformer_forward.26} parent=0 // pred_region
    _
  $region5: #{point_transformer_forward.26} parent=0 // pred_fallthru
    _
  // Predicated region
  $region6: #{point_transformer_forward.26} parent=0 // pred_check
    _
  $region7: #{point_transformer_forward.26} parent=0 // pred_check_branch
    %11 = sbr.rel (0) target = $region9
  $region8: #{point_transformer_forward.26} parent=0 // pred_region
    _
  $region9: #{point_transformer_forward.26} parent=0 // pred_fallthru
    _
  // Predicated region
  $region10: #{point_transformer_forward.26} parent=0 // pred_check
    _
  $region11: #{point_transformer_forward.26} parent=0 // pred_check_branch
    %13 = sbr.rel (0) target = $region13
  $region12: #{point_transformer_forward.26} parent=0 // pred_region
    _
  $region13: #{point_transformer_forward.26} parent=0 // pred_fallthru
    _
  %v15 = vld [vmem:[%s0] sm:$0xff]
  %v16 = vld [vmem:[%s0 + $0x8] sm:$0xff]
  %v17 = vld [vmem:[%s0 + $0x10] sm:$0xff]
  %v18 = vld [vmem:[%s0 + $0x18] sm:$0xff]
  %v19 = vld [vmem:[%s0 + $0x20] sm:$0xff]
  %v20 = vld [vmem:[%s0 + $0x28] sm:$0xff]
  %v21 = vld [vmem:[%s0 + $0x30] sm:$0xff]
  %v22 = vld [vmem:[%s0 + $0x38] sm:$0xff]
  %v23 = vpack.c.bf16 %v16, %v15
  %v24 = vpack.c.bf16 %v18, %v17
  %v25 = vpack.c.bf16 %v20, %v19
  %v26 = vpack.c.bf16 %v22, %v21
  %v27 = vld [vmem:[%s1] sm:$0xff]
  %v28 = vld [vmem:[%s1 + $0x8] sm:$0xff]
  %v29 = vld [vmem:[%s1 + $0x10] sm:$0xff]
  %v30 = vld [vmem:[%s1 + $0x18] sm:$0xff]
  %v31 = vpack.c.bf16 %v28, %v27
  %v32 = vpack.c.bf16 %v30, %v29
  %v33 = vld [vmem:[%s2] sm:$0x1]
  %v35 = vperm.slane %v33, 0
  %vm37 = vcmask 261120
  %v39 = vsel %vm37, %v23, 0
  %v42 = vsel %vm37, %v24, 0
  %v45 = vsel %vm37, %v25, 0
  %v48 = vsel %vm37, %v26, 0
  %50 = vmatpush.bf16.msra.mxu0 0
  %51 = vmatpush.bf16.msra.mxu0 0
  %52 = vmatpush.bf16.msra.mxu0 0
  %53 = vmatpush.bf16.msra.mxu0 0
  %54 = vmatpush.bf16.msra.mxu0 0
  %55 = vmatpush.bf16.msra.mxu0 0
  %56 = vmatpush.bf16.msra.mxu0 %v32
  %57 = vmatpush.bf16.msra.mxu0 %v31
  %58 = vmatmul.bf16.gmra.mxu0 %v39
  %v59 = vpop.f32.mrf.mxu0
  %v60 = vadd.f32 %v35, %v59
  %v61 = vpop.f32.mrf.mxu0
  %v62 = vadd.f32 %v35, %v61
  %63 = vmatmul.bf16.gmra.mxu0 %v42
  %v64 = vpop.f32.mrf.mxu0
  %v65 = vadd.f32 %v35, %v64
  %v66 = vpop.f32.mrf.mxu0
  %v67 = vadd.f32 %v35, %v66
  %68 = vmatmul.bf16.gmra.mxu0 %v45
  %v69 = vpop.f32.mrf.mxu0
  %v70 = vadd.f32 %v35, %v69
  %v71 = vpop.f32.mrf.mxu0
  %v72 = vadd.f32 %v35, %v71
  %73 = vmatmul.bf16.gmra.mxu0 %v48
  %v74 = vpop.f32.mrf.mxu0
  %v75 = vadd.f32 %v35, %v74
  %v76 = vpop.f32.mrf.mxu0
  %v77 = vadd.f32 %v35, %v76
  %78 = vdwg.mxu0
  %v79 = vmax.f32 %v60, 0.0
  %v80 = vmax.f32 %v62, 0.0
  %v81 = vmax.f32 %v65, 0.0
  %v82 = vmax.f32 %v67, 0.0
  %v83 = vmax.f32 %v70, 0.0
  %v84 = vmax.f32 %v72, 0.0
  %v85 = vmax.f32 %v75, 0.0
  %v86 = vmax.f32 %v77, 0.0
  %87 = vst.msk [vmem:[%s3] sm:$0xff] %vm37, %v79
  %88 = vst.msk [vmem:[%s3 + $0x8] sm:$0xff] %vm37, %v80
  %89 = vst.msk [vmem:[%s3 + $0x10] sm:$0xff] %vm37, %v81
  %90 = vst.msk [vmem:[%s3 + $0x18] sm:$0xff] %vm37, %v82
  %91 = vst.msk [vmem:[%s3 + $0x20] sm:$0xff] %vm37, %v83
  %92 = vst.msk [vmem:[%s3 + $0x28] sm:$0xff] %vm37, %v84
  %93 = vst.msk [vmem:[%s3 + $0x30] sm:$0xff] %vm37, %v85
  %94 = vst.msk [vmem:[%s3 + $0x38] sm:$0xff] %vm37, %v86
  // Predicated region
  $region14: #{point_transformer_forward.26} parent=0 // pred_check
    _
  $region15: #{point_transformer_forward.26} parent=0 // pred_check_branch
    %96 = sbr.rel (0) target = $region17
  $region16: #{point_transformer_forward.26} parent=0 // pred_region
    _
  $region17: #{point_transformer_forward.26} parent=0 // pred_fallthru
    _
  // Predicated region
  $region18: #{point_transformer_forward.26} parent=0 // pred_check
    _
  $region19: #{point_transformer_forward.26} parent=0 // pred_check_branch
    %98 = sbr.rel (0) target = $region21
  $region20: #{point_transformer_forward.26} parent=0 // pred_region
    _
  $region21: #{point_transformer_forward.26} parent=0 // pred_fallthru
    _

// kernel: point_transformer_forward.25
$region0: #{point_transformer_forward.25}
  #allocation0 [shape = 'u32[]', space=smem, size = 0x4, offset = 0x4, fixed_abs, tag = 'smem constant byte address 0x4 - core index']
  #allocation1 [shape = 'u32[72,128]{1,0:T(1,128)}', space=vmem, size = 0x9000, scoped, tag = 'internal scratch']
  %s0 = inlined_call_operand.vmem [shape: f32[64,3], index: 0, kind: input, shape index: {}]
  %s1 = inlined_call_operand.vmem [shape: f32[3,32], index: 1, kind: input, shape index: {}]
  %s2 = inlined_call_operand.vmem [shape: f32[1,32], index: 2, kind: input, shape index: {}]
  %s3 = inlined_call_operand.vmem [shape: f32[64,32], index: 3, kind: output, shape index: {}]
  %s4 = sld [smem:[#allocation0]]
  $region22: #{point_transformer_forward.25} parent=0
    _
  %s6 = ssub.s32 1, %s4
  %s7 = scalar_select 0, %s6, %s4
  // Predicated region
  $region2: #{point_transformer_forward.25} parent=0 // pred_check
    _
  $region3: #{point_transformer_forward.25} parent=0 // pred_check_branch
    %9 = sbr.rel (0) target = $region5
  $region4: #{point_transformer_forward.25} parent=0 // pred_region
    _
  $region5: #{point_transformer_forward.25} parent=0 // pred_fallthru
    _
  // Predicated region
  $region6: #{point_transformer_forward.25} parent=0 // pred_check
    _
  $region7: #{point_transformer_forward.25} parent=0 // pred_check_branch
    %11 = sbr.rel (0) target = $region9
  $region8: #{point_transformer_forward.25} parent=0 // pred_region
    _
  $region9: #{point_transformer_forward.25} parent=0 // pred_fallthru
    _
  // Predicated region
  $region10: #{point_transformer_forward.25} parent=0 // pred_check
    _
  $region11: #{point_transformer_forward.25} parent=0 // pred_check_branch
    %13 = sbr.rel (0) target = $region13
  $region12: #{point_transformer_forward.25} parent=0 // pred_region
    _
  $region13: #{point_transformer_forward.25} parent=0 // pred_fallthru
    _
  %v15 = vld [vmem:[%s0] sm:$0xff]
  %v16 = vld [vmem:[%s0 + $0x8] sm:$0xff]
  %v17 = vld [vmem:[%s0 + $0x10] sm:$0xff]
  %v18 = vld [vmem:[%s0 + $0x18] sm:$0xff]
  %v19 = vld [vmem:[%s0 + $0x20] sm:$0xff]
  %v20 = vld [vmem:[%s0 + $0x28] sm:$0xff]
  %v21 = vld [vmem:[%s0 + $0x30] sm:$0xff]
  %v22 = vld [vmem:[%s0 + $0x38] sm:$0xff]
  %v23 = vpack.c.bf16 %v16, %v15
  %v24 = vpack.c.bf16 %v18, %v17
  %v25 = vpack.c.bf16 %v20, %v19
  %v26 = vpack.c.bf16 %v22, %v21
  %v27 = vld [vmem:[%s1] sm:$0x7]
  %v28 = vpack.c.bf16 %v27, %v27
  %v29 = vld [vmem:[%s2] sm:$0x1]
  %v31 = vperm.slane %v29, 0
  %vm33 = vcmask 23552
  %v35 = vsel %vm33, %v23, 0
  %v38 = vsel %vm33, %v24, 0
  %v41 = vsel %vm33, %v25, 0
  %v44 = vsel %vm33, %v26, 0
  %vm46 = vcmask 1040384
  %vm47 = vcmask 1041408
  %v48 = vsel %vm46, 4294967295, 65535
  %v49 = vsel %vm47, %v48, 0
  %v51 = vand.u32 %v28, %v49
  %53 = vmatpush.bf16.msra.mxu0 0
  %54 = vmatpush.bf16.msra.mxu0 0
  %55 = vmatpush.bf16.msra.mxu0 0
  %56 = vmatpush.bf16.msra.mxu0 0
  %57 = vmatpush.bf16.msra.mxu0 0
  %58 = vmatpush.bf16.msra.mxu0 0
  %59 = vmatpush.bf16.msra.mxu0 0
  %60 = vmatpush.bf16.msra.mxu0 %v51
  %61 = vmatmul.bf16.gmra.mxu0 %v35
  %v62 = vpop.f32.mrf.mxu0
  %v63 = vadd.f32 %v31, %v62
  %v64 = vpop.f32.mrf.mxu0
  %v65 = vadd.f32 %v31, %v64
  %66 = vmatmul.bf16.gmra.mxu0 %v38
  %v67 = vpop.f32.mrf.mxu0
  %v68 = vadd.f32 %v31, %v67
  %v69 = vpop.f32.mrf.mxu0
  %v70 = vadd.f32 %v31, %v69
  %71 = vmatmul.bf16.gmra.mxu0 %v41
  %v72 = vpop.f32.mrf.mxu0
  %v73 = vadd.f32 %v31, %v72
  %v74 = vpop.f32.mrf.mxu0
  %v75 = vadd.f32 %v31, %v74
  %76 = vmatmul.bf16.gmra.mxu0 %v44
  %v77 = vpop.f32.mrf.mxu0
  %v78 = vadd.f32 %v31, %v77
  %v79 = vpop.f32.mrf.mxu0
  %v80 = vadd.f32 %v31, %v79
  %81 = vdwg.mxu0
  %v82 = vmax.f32 %v63, 0.0
  %v83 = vmax.f32 %v65, 0.0
  %v84 = vmax.f32 %v68, 0.0
  %v85 = vmax.f32 %v70, 0.0
  %v86 = vmax.f32 %v73, 0.0
  %v87 = vmax.f32 %v75, 0.0
  %v88 = vmax.f32 %v78, 0.0
  %v89 = vmax.f32 %v80, 0.0
  %vm90 = vcmask 261120
  %91 = vst.msk [vmem:[%s3] sm:$0xff] %vm90, %v82
  %92 = vst.msk [vmem:[%s3 + $0x8] sm:$0xff] %vm90, %v83
  %93 = vst.msk [vmem:[%s3 + $0x10] sm:$0xff] %vm90, %v84
  %94 = vst.msk [vmem:[%s3 + $0x18] sm:$0xff] %vm90, %v85
  %95 = vst.msk [vmem:[%s3 + $0x20] sm:$0xff] %vm90, %v86
  %96 = vst.msk [vmem:[%s3 + $0x28] sm:$0xff] %vm90, %v87
  %97 = vst.msk [vmem:[%s3 + $0x30] sm:$0xff] %vm90, %v88
  %98 = vst.msk [vmem:[%s3 + $0x38] sm:$0xff] %vm90, %v89
  // Predicated region
  $region14: #{point_transformer_forward.25} parent=0 // pred_check
    _
  $region15: #{point_transformer_forward.25} parent=0 // pred_check_branch
    %100 = sbr.rel (0) target = $region17
  $region16: #{point_transformer_forward.25} parent=0 // pred_region
    _
  $region17: #{point_transformer_forward.25} parent=0 // pred_fallthru
    _
  // Predicated region
  $region18: #{point_transformer_forward.25} parent=0 // pred_check
    _
  $region19: #{point_transformer_forward.25} parent=0 // pred_check_branch
    %102 = sbr.rel (0) target = $region21
  $region20: #{point_transformer_forward.25} parent=0 // pred_region
    _
  $region21: #{point_transformer_forward.25} parent=0 // pred_fallthru
    _

// kernel: point_transformer_forward.27
$region0: #{point_transformer_forward.27}
  #allocation0 [shape = 'u32[]', space=smem, size = 0x4, offset = 0x4, fixed_abs, tag = 'smem constant byte address 0x4 - core index']
  #allocation1 [shape = 'u32[72,128]{1,0:T(1,128)}', space=vmem, size = 0x9000, scoped, tag = 'internal scratch']
  %s0 = inlined_call_operand.vmem [shape: f32[64,32], index: 0, kind: input, shape index: {}]
  %s1 = inlined_call_operand.vmem [shape: f32[32,96], index: 1, kind: input, shape index: {}]
  %s2 = inlined_call_operand.vmem [shape: f32[1,96], index: 2, kind: input, shape index: {}]
  %s3 = inlined_call_operand.vmem [shape: f32[64,96], index: 3, kind: output, shape index: {}]
  %s4 = sld [smem:[#allocation0]]
  $region22: #{point_transformer_forward.27} parent=0
    _
  %s6 = ssub.s32 1, %s4
  %s7 = scalar_select 0, %s6, %s4
  // Predicated region
  $region2: #{point_transformer_forward.27} parent=0 // pred_check
    _
  $region3: #{point_transformer_forward.27} parent=0 // pred_check_branch
    %9 = sbr.rel (0) target = $region5
  $region4: #{point_transformer_forward.27} parent=0 // pred_region
    _
  $region5: #{point_transformer_forward.27} parent=0 // pred_fallthru
    _
  // Predicated region
  $region6: #{point_transformer_forward.27} parent=0 // pred_check
    _
  $region7: #{point_transformer_forward.27} parent=0 // pred_check_branch
    %11 = sbr.rel (0) target = $region9
  $region8: #{point_transformer_forward.27} parent=0 // pred_region
    _
  $region9: #{point_transformer_forward.27} parent=0 // pred_fallthru
    _
  // Predicated region
  $region10: #{point_transformer_forward.27} parent=0 // pred_check
    _
  $region11: #{point_transformer_forward.27} parent=0 // pred_check_branch
    %13 = sbr.rel (0) target = $region13
  $region12: #{point_transformer_forward.27} parent=0 // pred_region
    _
  $region13: #{point_transformer_forward.27} parent=0 // pred_fallthru
    _
  %v15 = vld [vmem:[%s0] sm:$0xff]
  %v16 = vld [vmem:[%s0 + $0x8] sm:$0xff]
  %v17 = vld [vmem:[%s0 + $0x10] sm:$0xff]
  %v18 = vld [vmem:[%s0 + $0x18] sm:$0xff]
  %v19 = vld [vmem:[%s0 + $0x20] sm:$0xff]
  %v20 = vld [vmem:[%s0 + $0x28] sm:$0xff]
  %v21 = vld [vmem:[%s0 + $0x30] sm:$0xff]
  %v22 = vld [vmem:[%s0 + $0x38] sm:$0xff]
  %v23 = vpack.c.bf16 %v16, %v15
  %v24 = vpack.c.bf16 %v18, %v17
  %v25 = vpack.c.bf16 %v20, %v19
  %v26 = vpack.c.bf16 %v22, %v21
  %v27 = vld [vmem:[%s1] sm:$0xff]
  %v28 = vld [vmem:[%s1 + $0x8] sm:$0xff]
  %v29 = vld [vmem:[%s1 + $0x10] sm:$0xff]
  %v30 = vld [vmem:[%s1 + $0x18] sm:$0xff]
  %v31 = vpack.c.bf16 %v28, %v27
  %v32 = vpack.c.bf16 %v30, %v29
  %v33 = vld [vmem:[%s2] sm:$0x1]
  %v35 = vperm.slane %v33, 0
  %vm37 = vcmask 261120
  %v39 = vsel %vm37, %v23, 0
  %v42 = vsel %vm37, %v24, 0
  %v45 = vsel %vm37, %v25, 0
  %v48 = vsel %vm37, %v26, 0
  %50 = vmatpush.bf16.msra.mxu0 0
  %51 = vmatpush.bf16.msra.mxu0 0
  %52 = vmatpush.bf16.msra.mxu0 0
  %53 = vmatpush.bf16.msra.mxu0 0
  %54 = vmatpush.bf16.msra.mxu0 0
  %55 = vmatpush.bf16.msra.mxu0 0
  %56 = vmatpush.bf16.msra.mxu0 %v32
  %57 = vmatpush.bf16.msra.mxu0 %v31
  %58 = vmatmul.bf16.gmra.mxu0 %v39
  %v59 = vpop.f32.mrf.mxu0
  %v60 = vadd.f32 %v35, %v59
  %v61 = vpop.f32.mrf.mxu0
  %v62 = vadd.f32 %v35, %v61
  %63 = vmatmul.bf16.gmra.mxu0 %v42
  %v64 = vpop.f32.mrf.mxu0
  %v65 = vadd.f32 %v35, %v64
  %v66 = vpop.f32.mrf.mxu0
  %v67 = vadd.f32 %v35, %v66
  %68 = vmatmul.bf16.gmra.mxu0 %v45
  %v69 = vpop.f32.mrf.mxu0
  %v70 = vadd.f32 %v35, %v69
  %v71 = vpop.f32.mrf.mxu0
  %v72 = vadd.f32 %v35, %v71
  %73 = vmatmul.bf16.gmra.mxu0 %v48
  %v74 = vpop.f32.mrf.mxu0
  %v75 = vadd.f32 %v35, %v74
  %v76 = vpop.f32.mrf.mxu0
  %v77 = vadd.f32 %v35, %v76
  %78 = vdwg.mxu0
  %vm79 = vcmask 785408
  %80 = vst.msk [vmem:[%s3] sm:$0xff] %vm79, %v60
  %81 = vst.msk [vmem:[%s3 + $0x8] sm:$0xff] %vm79, %v62
  %82 = vst.msk [vmem:[%s3 + $0x10] sm:$0xff] %vm79, %v65
  %83 = vst.msk [vmem:[%s3 + $0x18] sm:$0xff] %vm79, %v67
  %84 = vst.msk [vmem:[%s3 + $0x20] sm:$0xff] %vm79, %v70
  %85 = vst.msk [vmem:[%s3 + $0x28] sm:$0xff] %vm79, %v72
  %86 = vst.msk [vmem:[%s3 + $0x30] sm:$0xff] %vm79, %v75
  %87 = vst.msk [vmem:[%s3 + $0x38] sm:$0xff] %vm79, %v77
  // Predicated region
  $region14: #{point_transformer_forward.27} parent=0 // pred_check
    _
  $region15: #{point_transformer_forward.27} parent=0 // pred_check_branch
    %89 = sbr.rel (0) target = $region17
  $region16: #{point_transformer_forward.27} parent=0 // pred_region
    _
  $region17: #{point_transformer_forward.27} parent=0 // pred_fallthru
    _
  // Predicated region
  $region18: #{point_transformer_forward.27} parent=0 // pred_check
    _
  $region19: #{point_transformer_forward.27} parent=0 // pred_check_branch
    %91 = sbr.rel (0) target = $region21
  $region20: #{point_transformer_forward.27} parent=0 // pred_region
    _
  $region21: #{point_transformer_forward.27} parent=0 // pred_fallthru
    _

// kernel: custom-call
$region0: #{custom-call}
  %s0 = inlined_call_operand.vmem [shape: f32[64], index: 0, kind: output, shape index: {}]

// kernel: point_transformer_forward.30
$region0: #{point_transformer_forward.30}
  #allocation0 [shape = 'u32[]', space=smem, size = 0x4, offset = 0x4, fixed_abs, tag = 'smem constant byte address 0x4 - core index']
  #allocation1 [shape = 'u32[72,128]{1,0:T(1,128)}', space=vmem, size = 0x9000, scoped, tag = 'internal scratch']
  %s0 = inlined_call_operand.vmem [shape: f32[64,32], index: 0, kind: input, shape index: {}]
  %s1 = inlined_call_operand.vmem [shape: f32[32,64], index: 1, kind: input, shape index: {}]
  %s2 = inlined_call_operand.vmem [shape: f32[1,64], index: 2, kind: input, shape index: {}]
  %s3 = inlined_call_operand.vmem [shape: f32[64,64], index: 3, kind: output, shape index: {}]
  %s4 = sld [smem:[#allocation0]]
  $region22: #{point_transformer_forward.30} parent=0
    _
  %s6 = ssub.s32 1, %s4
  %s7 = scalar_select 0, %s6, %s4
  // Predicated region
  $region2: #{point_transformer_forward.30} parent=0 // pred_check
    _
  $region3: #{point_transformer_forward.30} parent=0 // pred_check_branch
    %9 = sbr.rel (0) target = $region5
  $region4: #{point_transformer_forward.30} parent=0 // pred_region
    _
  $region5: #{point_transformer_forward.30} parent=0 // pred_fallthru
    _
  // Predicated region
  $region6: #{point_transformer_forward.30} parent=0 // pred_check
    _
  $region7: #{point_transformer_forward.30} parent=0 // pred_check_branch
    %11 = sbr.rel (0) target = $region9
  $region8: #{point_transformer_forward.30} parent=0 // pred_region
    _
  $region9: #{point_transformer_forward.30} parent=0 // pred_fallthru
    _
  // Predicated region
  $region10: #{point_transformer_forward.30} parent=0 // pred_check
    _
  $region11: #{point_transformer_forward.30} parent=0 // pred_check_branch
    %13 = sbr.rel (0) target = $region13
  $region12: #{point_transformer_forward.30} parent=0 // pred_region
    _
  $region13: #{point_transformer_forward.30} parent=0 // pred_fallthru
    _
  %v15 = vld [vmem:[%s0] sm:$0xff]
  %v16 = vld [vmem:[%s0 + $0x8] sm:$0xff]
  %v17 = vld [vmem:[%s0 + $0x10] sm:$0xff]
  %v18 = vld [vmem:[%s0 + $0x18] sm:$0xff]
  %v19 = vld [vmem:[%s0 + $0x20] sm:$0xff]
  %v20 = vld [vmem:[%s0 + $0x28] sm:$0xff]
  %v21 = vld [vmem:[%s0 + $0x30] sm:$0xff]
  %v22 = vld [vmem:[%s0 + $0x38] sm:$0xff]
  %v23 = vpack.c.bf16 %v16, %v15
  %v24 = vpack.c.bf16 %v18, %v17
  %v25 = vpack.c.bf16 %v20, %v19
  %v26 = vpack.c.bf16 %v22, %v21
  %v27 = vld [vmem:[%s1] sm:$0xff]
  %v28 = vld [vmem:[%s1 + $0x8] sm:$0xff]
  %v29 = vld [vmem:[%s1 + $0x10] sm:$0xff]
  %v30 = vld [vmem:[%s1 + $0x18] sm:$0xff]
  %v31 = vpack.c.bf16 %v28, %v27
  %v32 = vpack.c.bf16 %v30, %v29
  %v33 = vld [vmem:[%s2] sm:$0x1]
  %v35 = vperm.slane %v33, 0
  %vm37 = vcmask 261120
  %v39 = vsel %vm37, %v23, 0
  %v42 = vsel %vm37, %v24, 0
  %v45 = vsel %vm37, %v25, 0
  %v48 = vsel %vm37, %v26, 0
  %50 = vmatpush.bf16.msra.mxu0 0
  %51 = vmatpush.bf16.msra.mxu0 0
  %52 = vmatpush.bf16.msra.mxu0 0
  %53 = vmatpush.bf16.msra.mxu0 0
  %54 = vmatpush.bf16.msra.mxu0 0
  %55 = vmatpush.bf16.msra.mxu0 0
  %56 = vmatpush.bf16.msra.mxu0 %v32
  %57 = vmatpush.bf16.msra.mxu0 %v31
  %58 = vmatmul.bf16.gmra.mxu0 %v39
  %v59 = vpop.f32.mrf.mxu0
  %v60 = vadd.f32 %v35, %v59
  %v61 = vpop.f32.mrf.mxu0
  %v62 = vadd.f32 %v35, %v61
  %63 = vmatmul.bf16.gmra.mxu0 %v42
  %v64 = vpop.f32.mrf.mxu0
  %v65 = vadd.f32 %v35, %v64
  %v66 = vpop.f32.mrf.mxu0
  %v67 = vadd.f32 %v35, %v66
  %68 = vmatmul.bf16.gmra.mxu0 %v45
  %v69 = vpop.f32.mrf.mxu0
  %v70 = vadd.f32 %v35, %v69
  %v71 = vpop.f32.mrf.mxu0
  %v72 = vadd.f32 %v35, %v71
  %73 = vmatmul.bf16.gmra.mxu0 %v48
  %v74 = vpop.f32.mrf.mxu0
  %v75 = vadd.f32 %v35, %v74
  %v76 = vpop.f32.mrf.mxu0
  %v77 = vadd.f32 %v35, %v76
  %78 = vdwg.mxu0
  %v79 = vmax.f32 %v60, 0.0
  %v80 = vmax.f32 %v62, 0.0
  %v81 = vmax.f32 %v65, 0.0
  %v82 = vmax.f32 %v67, 0.0
  %v83 = vmax.f32 %v70, 0.0
  %v84 = vmax.f32 %v72, 0.0
  %v85 = vmax.f32 %v75, 0.0
  %v86 = vmax.f32 %v77, 0.0
  %vm87 = vcmask 523264
  %88 = vst.msk [vmem:[%s3] sm:$0xff] %vm87, %v79
  %89 = vst.msk [vmem:[%s3 + $0x8] sm:$0xff] %vm87, %v80
  %90 = vst.msk [vmem:[%s3 + $0x10] sm:$0xff] %vm87, %v81
  %91 = vst.msk [vmem:[%s3 + $0x18] sm:$0xff] %vm87, %v82
  %92 = vst.msk [vmem:[%s3 + $0x20] sm:$0xff] %vm87, %v83
  %93 = vst.msk [vmem:[%s3 + $0x28] sm:$0xff] %vm87, %v84
  %94 = vst.msk [vmem:[%s3 + $0x30] sm:$0xff] %vm87, %v85
  %95 = vst.msk [vmem:[%s3 + $0x38] sm:$0xff] %vm87, %v86
  // Predicated region
  $region14: #{point_transformer_forward.30} parent=0 // pred_check
    _
  $region15: #{point_transformer_forward.30} parent=0 // pred_check_branch
    %97 = sbr.rel (0) target = $region17
  $region16: #{point_transformer_forward.30} parent=0 // pred_region
    _
  $region17: #{point_transformer_forward.30} parent=0 // pred_fallthru
    _
  // Predicated region
  $region18: #{point_transformer_forward.30} parent=0 // pred_check
    _
  $region19: #{point_transformer_forward.30} parent=0 // pred_check_branch
    %99 = sbr.rel (0) target = $region21
  $region20: #{point_transformer_forward.30} parent=0 // pred_region
    _
  $region21: #{point_transformer_forward.30} parent=0 // pred_fallthru
    _

// kernel: neg.6
$region0: #{neg.6}
  #allocation0 [shape = 's32[1]{0}', space=sflag, size = 0x4, scoped, tag = 'scoped memory for neg.6']
  %s0 = inlined_call_operand.vmem [shape: f32[16,64], index: 0, kind: input, shape index: {}]
  %s1 = inlined_call_operand.vmem [shape: f32[16,64], index: 1, kind: output, shape index: {}]
  %v2 = vld [vmem:[%s0] sm:$0xff]
  %3 = xla_tuple %v2
  %4 = xla_tuple %3
  %v5 = vxor.u32 %v2, 2147483648
  %6 = xla_tuple %v5
  %7 = vst [vmem:[%s1] sm:$0xff] %v5
  %s8 = scalar_lea.vmem %s0, 8
  %v9 = vld [vmem:[%s8] sm:$0xff]
  %10 = xla_tuple %v9
  %11 = xla_tuple %10
  %v12 = vxor.u32 %v9, 2147483648
  %13 = xla_tuple %v12
  %s14 = scalar_lea.vmem %s1, 8
  %15 = vst [vmem:[%s14] sm:$0xff] %v12

// kernel: point_transformer_forward.28
$region0: #{point_transformer_forward.28}
  #allocation0 [shape = 'u32[]', space=smem, size = 0x4, offset = 0x4, fixed_abs, tag = 'smem constant byte address 0x4 - core index']
  #allocation1 [shape = 'u32[72,128]{1,0:T(1,128)}', space=vmem, size = 0x9000, scoped, tag = 'internal scratch']
  %s0 = inlined_call_operand.vmem [shape: f32[5,64,3], index: 0, kind: input, shape index: {}]
  %s1 = inlined_call_operand.vmem [shape: f32[5,64,32], index: 1, kind: input, shape index: {}]
  %s2 = inlined_call_operand.vmem [shape: f32[5,64,32], index: 2, kind: input, shape index: {}]
  %s3 = inlined_call_operand.vmem [shape: f32[64,32], index: 3, kind: input, shape index: {}]
  %s4 = inlined_call_operand.vmem [shape: f32[3,64], index: 4, kind: input, shape index: {}]
  %s5 = inlined_call_operand.vmem [shape: f32[1,64], index: 5, kind: input, shape index: {}]
  %s6 = inlined_call_operand.vmem [shape: f32[64,32], index: 6, kind: input, shape index: {}]
  %s7 = inlined_call_operand.vmem [shape: f32[1,32], index: 7, kind: input, shape index: {}]
  %s8 = inlined_call_operand.vmem [shape: f32[32,64], index: 8, kind: input, shape index: {}]
  %s9 = inlined_call_operand.vmem [shape: f32[1,64], index: 9, kind: input, shape index: {}]
  %s10 = inlined_call_operand.vmem [shape: f32[64,32], index: 10, kind: input, shape index: {}]
  %s11 = inlined_call_operand.vmem [shape: f32[1,32], index: 11, kind: input, shape index: {}]
  %s12 = inlined_call_operand.vmem [shape: f32[64,32], index: 12, kind: output, shape index: {}]
  %s13 = sld [smem:[#allocation0]]
  $region58: #{point_transformer_forward.28} parent=0
    _
  %s15 = ssub.s32 1, %s13
  %s16 = scalar_select 0, %s15, %s13
  // Predicated region
  $region2: #{point_transformer_forward.28} parent=0 // pred_check
    _
  $region3: #{point_transformer_forward.28} parent=0 // pred_check_branch
    %18 = sbr.rel (0) target = $region5
  $region4: #{point_transformer_forward.28} parent=0 // pred_region
    _
  $region5: #{point_transformer_forward.28} parent=0 // pred_fallthru
    _
  // Predicated region
  $region6: #{point_transformer_forward.28} parent=0 // pred_check
    _
  $region7: #{point_transformer_forward.28} parent=0 // pred_check_branch
    %20 = sbr.rel (0) target = $region9
  $region8: #{point_transformer_forward.28} parent=0 // pred_region
    _
  $region9: #{point_transformer_forward.28} parent=0 // pred_fallthru
    _
  // Predicated region
  $region10: #{point_transformer_forward.28} parent=0 // pred_check
    _
  $region11: #{point_transformer_forward.28} parent=0 // pred_check_branch
    %22 = sbr.rel (0) target = $region13
  $region12: #{point_transformer_forward.28} parent=0 // pred_region
    _
  $region13: #{point_transformer_forward.28} parent=0 // pred_fallthru
    _
  // Predicated region
  $region14: #{point_transformer_forward.28} parent=0 // pred_check
    _
  $region15: #{point_transformer_forward.28} parent=0 // pred_check_branch
    %24 = sbr.rel (0) target = $region17
  $region16: #{point_transformer_forward.28} parent=0 // pred_region
    _
  $region17: #{point_transformer_forward.28} parent=0 // pred_fallthru
    _
  // Predicated region
  $region18: #{point_transformer_forward.28} parent=0 // pred_check
    _
  $region19: #{point_transformer_forward.28} parent=0 // pred_check_branch
    %26 = sbr.rel (0) target = $region21
  $region20: #{point_transformer_forward.28} parent=0 // pred_region
    _
  $region21: #{point_transformer_forward.28} parent=0 // pred_fallthru
    _
  // Predicated region
  $region22: #{point_transformer_forward.28} parent=0 // pred_check
    _
  $region23: #{point_transformer_forward.28} parent=0 // pred_check_branch
    %28 = sbr.rel (0) target = $region25
  $region24: #{point_transformer_forward.28} parent=0 // pred_region
    _
  $region25: #{point_transformer_forward.28} parent=0 // pred_fallthru
    _
  // Predicated region
  $region26: #{point_transformer_forward.28} parent=0 // pred_check
    _
  $region27: #{point_transformer_forward.28} parent=0 // pred_check_branch
    %30 = sbr.rel (0) target = $region29
  $region28: #{point_transformer_forward.28} parent=0 // pred_region
    _
  $region29: #{point_transformer_forward.28} parent=0 // pred_fallthru
    _
  // Predicated region
  $region30: #{point_transformer_forward.28} parent=0 // pred_check
    _
  $region31: #{point_transformer_forward.28} parent=0 // pred_check_branch
    %32 = sbr.rel (0) target = $region33
  $region32: #{point_transformer_forward.28} parent=0 // pred_region
    _
  $region33: #{point_transformer_forward.28} parent=0 // pred_fallthru
    _
  // Predicated region
  $region34: #{point_transformer_forward.28} parent=0 // pred_check
    _
  $region35: #{point_transformer_forward.28} parent=0 // pred_check_branch
    %34 = sbr.rel (0) target = $region37
  $region36: #{point_transformer_forward.28} parent=0 // pred_region
    _
  $region37: #{point_transformer_forward.28} parent=0 // pred_fallthru
    _
  // Predicated region
  $region38: #{point_transformer_forward.28} parent=0 // pred_check
    _
  $region39: #{point_transformer_forward.28} parent=0 // pred_check_branch
    %36 = sbr.rel (0) target = $region41
  $region40: #{point_transformer_forward.28} parent=0 // pred_region
    _
  $region41: #{point_transformer_forward.28} parent=0 // pred_fallthru
    _
  // Predicated region
  $region42: #{point_transformer_forward.28} parent=0 // pred_check
    _
  $region43: #{point_transformer_forward.28} parent=0 // pred_check_branch
    %38 = sbr.rel (0) target = $region45
  $region44: #{point_transformer_forward.28} parent=0 // pred_region
    _
  $region45: #{point_transformer_forward.28} parent=0 // pred_fallthru
    _
  // Predicated region
  $region46: #{point_transformer_forward.28} parent=0 // pred_check
    _
  $region47: #{point_transformer_forward.28} parent=0 // pred_check_branch
    %40 = sbr.rel (0) target = $region49
  $region48: #{point_transformer_forward.28} parent=0 // pred_region
    _
  $region49: #{point_transformer_forward.28} parent=0 // pred_fallthru
    _
  %v42 = vld [vmem:[%s3] sm:$0xff]
  %v43 = vld [vmem:[%s3 + $0x8] sm:$0xff]
  %v44 = vld [vmem:[%s3 + $0x10] sm:$0xff]
  %v45 = vld [vmem:[%s3 + $0x18] sm:$0xff]
  %v46 = vld [vmem:[%s3 + $0x20] sm:$0xff]
  %v47 = vld [vmem:[%s3 + $0x28] sm:$0xff]
  %v48 = vld [vmem:[%s3 + $0x30] sm:$0xff]
  %v49 = vld [vmem:[%s3 + $0x38] sm:$0xff]
  %v50 = vld [vmem:[%s4] sm:$0x7]
  %v51 = vpack.c.bf16 %v50, %v50
  %v52 = vld [vmem:[%s5] sm:$0x1]
  %v53 = vld [vmem:[%s6] sm:$0xff]
  %v54 = vld [vmem:[%s6 + $0x8] sm:$0xff]
  %v55 = vld [vmem:[%s6 + $0x10] sm:$0xff]
  %v56 = vld [vmem:[%s6 + $0x18] sm:$0xff]
  %v57 = vld [vmem:[%s6 + $0x20] sm:$0xff]
  %v58 = vld [vmem:[%s6 + $0x28] sm:$0xff]
  %v59 = vld [vmem:[%s6 + $0x30] sm:$0xff]
  %v60 = vld [vmem:[%s6 + $0x38] sm:$0xff]
  %v61 = vpack.c.bf16 %v54, %v53
  %v62 = vpack.c.bf16 %v56, %v55
  %v63 = vpack.c.bf16 %v58, %v57
  %v64 = vpack.c.bf16 %v60, %v59
  %v65 = vld [vmem:[%s7] sm:$0x1]
  %v66 = vld [vmem:[%s8] sm:$0xff]
  %v67 = vld [vmem:[%s8 + $0x8] sm:$0xff]
  %v68 = vld [vmem:[%s8 + $0x10] sm:$0xff]
  %v69 = vld [vmem:[%s8 + $0x18] sm:$0xff]
  %v70 = vpack.c.bf16 %v67, %v66
  %v71 = vpack.c.bf16 %v69, %v68
  %v72 = vld [vmem:[%s9] sm:$0x1]
  %v73 = vld [vmem:[%s10] sm:$0xff]
  %v74 = vld [vmem:[%s10 + $0x8] sm:$0xff]
  %v75 = vld [vmem:[%s10 + $0x10] sm:$0xff]
  %v76 = vld [vmem:[%s10 + $0x18] sm:$0xff]
  %v77 = vld [vmem:[%s10 + $0x20] sm:$0xff]
  %v78 = vld [vmem:[%s10 + $0x28] sm:$0xff]
  %v79 = vld [vmem:[%s10 + $0x30] sm:$0xff]
  %v80 = vld [vmem:[%s10 + $0x38] sm:$0xff]
  %v81 = vpack.c.bf16 %v74, %v73
  %v82 = vpack.c.bf16 %v76, %v75
  %v83 = vpack.c.bf16 %v78, %v77
  %v84 = vpack.c.bf16 %v80, %v79
  %v85 = vld [vmem:[%s11] sm:$0x1]
  %v86 = vld [vmem:[%s0] sm:$0xff]
  %v87 = vld [vmem:[%s0 + $0x8] sm:$0xff]
  %v88 = vld [vmem:[%s0 + $0x10] sm:$0xff]
  %v89 = vld [vmem:[%s0 + $0x18] sm:$0xff]
  %v90 = vld [vmem:[%s0 + $0x20] sm:$0xff]
  %v91 = vld [vmem:[%s0 + $0x28] sm:$0xff]
  %v92 = vld [vmem:[%s0 + $0x30] sm:$0xff]
  %v93 = vld [vmem:[%s0 + $0x38] sm:$0xff]
  %v94 = vpack.c.bf16 %v87, %v86
  %v95 = vpack.c.bf16 %v89, %v88
  %v96 = vpack.c.bf16 %v91, %v90
  %v97 = vpack.c.bf16 %v93, %v92
  %v99 = vperm.slane %v52, 0
  %vm101 = vcmask 23552
  %v103 = vsel %vm101, %v94, 0
  %v106 = vsel %vm101, %v95, 0
  %v109 = vsel %vm101, %v96, 0
  %v112 = vsel %vm101, %v97, 0
  %vm114 = vcmask 1040384
  %vm115 = vcmask 1041408
  %v116 = vsel %vm114, 4294967295, 65535
  %v117 = vsel %vm115, %v116, 0
  %v119 = vand.u32 %v51, %v117
  %121 = vmatpush.bf16.msra.mxu0 0
  %122 = vmatpush.bf16.msra.mxu0 0
  %123 = vmatpush.bf16.msra.mxu0 0
  %124 = vmatpush.bf16.msra.mxu0 0
  %125 = vmatpush.bf16.msra.mxu0 0
  %126 = vmatpush.bf16.msra.mxu0 0
  %127 = vmatpush.bf16.msra.mxu0 0
  %128 = vmatpush.bf16.msra.mxu0 %v119
  %129 = vmatmul.bf16.gmra.mxu0 %v103
  %v130 = vpop.f32.mrf.mxu0
  %v131 = vadd.f32 %v99, %v130
  %v132 = vpop.f32.mrf.mxu0
  %v133 = vadd.f32 %v99, %v132
  %134 = vmatmul.bf16.gmra.mxu0 %v106
  %v135 = vpop.f32.mrf.mxu0
  %v136 = vadd.f32 %v99, %v135
  %v137 = vpop.f32.mrf.mxu0
  %v138 = vadd.f32 %v99, %v137
  %139 = vmatmul.bf16.gmra.mxu0 %v109
  %v140 = vpop.f32.mrf.mxu0
  %v141 = vadd.f32 %v99, %v140
  %v142 = vpop.f32.mrf.mxu0
  %v143 = vadd.f32 %v99, %v142
  %144 = vmatmul.bf16.gmra.mxu0 %v112
  %v145 = vpop.f32.mrf.mxu0
  %v146 = vadd.f32 %v99, %v145
  %v147 = vpop.f32.mrf.mxu0
  %v148 = vadd.f32 %v99, %v147
  %149 = vdwg.mxu0
  %v150 = vmax.f32 %v131, 0.0
  %v151 = vmax.f32 %v133, 0.0
  %v152 = vmax.f32 %v136, 0.0
  %v153 = vmax.f32 %v138, 0.0
  %v154 = vmax.f32 %v141, 0.0
  %v155 = vmax.f32 %v143, 0.0
  %v156 = vmax.f32 %v146, 0.0
  %v157 = vmax.f32 %v148, 0.0
  %v158 = vpack.c.bf16 %v151, %v150
  %v159 = vpack.c.bf16 %v153, %v152
  %v160 = vpack.c.bf16 %v155, %v154
  %v161 = vpack.c.bf16 %v157, %v156
  %v163 = vperm.slane %v65, 0
  %vm165 = vcmask 523264
  %v167 = vsel %vm165, %v158, 0
  %v170 = vsel %vm165, %v159, 0
  %v173 = vsel %vm165, %v160, 0
  %v176 = vsel %vm165, %v161, 0
  %178 = vmatpush.bf16.msra.mxu0 0
  %179 = vmatpush.bf16.msra.mxu0 0
  %180 = vmatpush.bf16.msra.mxu0 0
  %181 = vmatpush.bf16.msra.mxu0 0
  %182 = vmatpush.bf16.msra.mxu0 %v64
  %183 = vmatpush.bf16.msra.mxu0 %v63
  %184 = vmatpush.bf16.msra.mxu0 %v62
  %185 = vmatpush.bf16.msra.mxu0 %v61
  %186 = vmatmul.bf16.gmra.mxu0 %v167
  %v187 = vpop.f32.mrf.mxu0
  %v188 = vadd.f32 %v163, %v187
  %v189 = vpop.f32.mrf.mxu0
  %v190 = vadd.f32 %v163, %v189
  %191 = vmatmul.bf16.gmra.mxu0 %v170
  %v192 = vpop.f32.mrf.mxu0
  %v193 = vadd.f32 %v163, %v192
  %v194 = vpop.f32.mrf.mxu0
  %v195 = vadd.f32 %v163, %v194
  %196 = vmatmul.bf16.gmra.mxu0 %v173
  %v197 = vpop.f32.mrf.mxu0
  %v198 = vadd.f32 %v163, %v197
  %v199 = vpop.f32.mrf.mxu0
  %v200 = vadd.f32 %v163, %v199
  %201 = vmatmul.bf16.gmra.mxu0 %v176
  %v202 = vpop.f32.mrf.mxu0
  %v203 = vadd.f32 %v163, %v202
  %v204 = vpop.f32.mrf.mxu0
  %v205 = vadd.f32 %v163, %v204
  %206 = vdwg.mxu0
  %v207 = vmax.f32 %v188, 0.0
  %v208 = vmax.f32 %v190, 0.0
  %v209 = vmax.f32 %v193, 0.0
  %v210 = vmax.f32 %v195, 0.0
  %v211 = vmax.f32 %v198, 0.0
  %v212 = vmax.f32 %v200, 0.0
  %v213 = vmax.f32 %v203, 0.0
  %v214 = vmax.f32 %v205, 0.0
  %v215 = vld [vmem:[%s2] sm:$0xff]
  %v216 = vld [vmem:[%s2 + $0x8] sm:$0xff]
  %v217 = vld [vmem:[%s2 + $0x10] sm:$0xff]
  %v218 = vld [vmem:[%s2 + $0x18] sm:$0xff]
  %v219 = vld [vmem:[%s2 + $0x20] sm:$0xff]
  %v220 = vld [vmem:[%s2 + $0x28] sm:$0xff]
  %v221 = vld [vmem:[%s2 + $0x30] sm:$0xff]
  %v222 = vld [vmem:[%s2 + $0x38] sm:$0xff]
  %v223 = vsub.f32 %v42, %v215
  %v224 = vsub.f32 %v43, %v216
  %v225 = vsub.f32 %v44, %v217
  %v226 = vsub.f32 %v45, %v218
  %v227 = vsub.f32 %v46, %v219
  %v228 = vsub.f32 %v47, %v220
  %v229 = vsub.f32 %v48, %v221
  %v230 = vsub.f32 %v49, %v222
  %v231 = vadd.f32 %v223, %v207
  %v232 = vadd.f32 %v224, %v208
  %v233 = vadd.f32 %v225, %v209
  %v234 = vadd.f32 %v226, %v210
  %v235 = vadd.f32 %v227, %v211
  %v236 = vadd.f32 %v228, %v212
  %v237 = vadd.f32 %v229, %v213
  %v238 = vadd.f32 %v230, %v214
  %v239 = vpack.c.bf16 %v232, %v231
  %v240 = vpack.c.bf16 %v234, %v233
  %v241 = vpack.c.bf16 %v236, %v235
  %v242 = vpack.c.bf16 %v238, %v237
  %v244 = vperm.slane %v72, 0
  %vm246 = vcmask 261120
  %v248 = vsel %vm246, %v239, 0
  %v251 = vsel %vm246, %v240, 0
  %v254 = vsel %vm246, %v241, 0
  %v257 = vsel %vm246, %v242, 0
  %259 = vmatpush.bf16.msra.mxu0 0
  %260 = vmatpush.bf16.msra.mxu0 0
  %261 = vmatpush.bf16.msra.mxu0 0
  %262 = vmatpush.bf16.msra.mxu0 0
  %263 = vmatpush.bf16.msra.mxu0 0
  %264 = vmatpush.bf16.msra.mxu0 0
  %265 = vmatpush.bf16.msra.mxu0 %v71
  %266 = vmatpush.bf16.msra.mxu0 %v70
  %267 = vmatmul.bf16.gmra.mxu0 %v248
  %v268 = vpop.f32.mrf.mxu0
  %v269 = vadd.f32 %v244, %v268
  %v270 = vpop.f32.mrf.mxu0
  %v271 = vadd.f32 %v244, %v270
  %272 = vmatmul.bf16.gmra.mxu0 %v251
  %v273 = vpop.f32.mrf.mxu0
  %v274 = vadd.f32 %v244, %v273
  %v275 = vpop.f32.mrf.mxu0
  %v276 = vadd.f32 %v244, %v275
  %277 = vmatmul.bf16.gmra.mxu0 %v254
  %v278 = vpop.f32.mrf.mxu0
  %v279 = vadd.f32 %v244, %v278
  %v280 = vpop.f32.mrf.mxu0
  %v281 = vadd.f32 %v244, %v280
  %282 = vmatmul.bf16.gmra.mxu0 %v257
  %v283 = vpop.f32.mrf.mxu0
  %v284 = vadd.f32 %v244, %v283
  %v285 = vpop.f32.mrf.mxu0
  %v286 = vadd.f32 %v244, %v285
  %287 = vdwg.mxu0
  %v288 = vmax.f32 %v269, 0.0
  %v289 = vmax.f32 %v271, 0.0
  %v290 = vmax.f32 %v274, 0.0
  %v291 = vmax.f32 %v276, 0.0
  %v292 = vmax.f32 %v279, 0.0
  %v293 = vmax.f32 %v281, 0.0
  %v294 = vmax.f32 %v284, 0.0
  %v295 = vmax.f32 %v286, 0.0
  %v296 = vpack.c.bf16 %v289, %v288
  %v297 = vpack.c.bf16 %v291, %v290
  %v298 = vpack.c.bf16 %v293, %v292
  %v299 = vpack.c.bf16 %v295, %v294
  %v301 = vperm.slane %v85, 0
  %v304 = vsel %vm165, %v296, 0
  %v307 = vsel %vm165, %v297, 0
  %v310 = vsel %vm165, %v298, 0
  %v313 = vsel %vm165, %v299, 0
  %315 = vmatpush.bf16.msra.mxu0 0
  %316 = vmatpush.bf16.msra.mxu0 0
  %317 = vmatpush.bf16.msra.mxu0 0
  %318 = vmatpush.bf16.msra.mxu0 0
  %319 = vmatpush.bf16.msra.mxu0 %v84
  %320 = vmatpush.bf16.msra.mxu0 %v83
  %321 = vmatpush.bf16.msra.mxu0 %v82
  %322 = vmatpush.bf16.msra.mxu0 %v81
  %323 = vmatmul.bf16.gmra.mxu0 %v304
  %v324 = vpop.f32.mrf.mxu0
  %v325 = vadd.f32 %v301, %v324
  %v326 = vpop.f32.mrf.mxu0
  %v327 = vadd.f32 %v301, %v326
  %328 = vmatmul.bf16.gmra.mxu0 %v307
  %v329 = vpop.f32.mrf.mxu0
  %v330 = vadd.f32 %v301, %v329
  %v331 = vpop.f32.mrf.mxu0
  %v332 = vadd.f32 %v301, %v331
  %333 = vmatmul.bf16.gmra.mxu0 %v310
  %v334 = vpop.f32.mrf.mxu0
  %v335 = vadd.f32 %v301, %v334
  %v336 = vpop.f32.mrf.mxu0
  %v337 = vadd.f32 %v301, %v336
  %338 = vmatmul.bf16.gmra.mxu0 %v313
  %v339 = vpop.f32.mrf.mxu0
  %v340 = vadd.f32 %v301, %v339
  %v341 = vpop.f32.mrf.mxu0
  %v342 = vadd.f32 %v301, %v341
  %343 = vdwg.mxu0
  %v344 = vmax.f32 %v325, 0.0
  %v345 = vmax.f32 %v327, 0.0
  %v346 = vmax.f32 %v330, 0.0
  %v347 = vmax.f32 %v332, 0.0
  %v348 = vmax.f32 %v335, 0.0
  %v349 = vmax.f32 %v337, 0.0
  %v350 = vmax.f32 %v340, 0.0
  %v351 = vmax.f32 %v342, 0.0
  %v352 = vmax.f32 %v344, 0.0
  %v353 = vmax.f32 %v345, 0.0
  %v354 = vmax.f32 %v346, 0.0
  %v355 = vmax.f32 %v347, 0.0
  %v356 = vmax.f32 %v348, 0.0
  %v357 = vmax.f32 %v349, 0.0
  %v358 = vmax.f32 %v350, 0.0
  %v359 = vmax.f32 %v351, 0.0
  %v360 = vsub.f32 0.0, %v352
  %v361 = vsub.f32 0.0, %v353
  %v362 = vsub.f32 0.0, %v354
  %v363 = vsub.f32 0.0, %v355
  %v364 = vsub.f32 0.0, %v356
  %v365 = vsub.f32 0.0, %v357
  %v366 = vsub.f32 0.0, %v358
  %v367 = vsub.f32 0.0, %v359
  %v368 = vmul.f32 %v360, 1.442695
  %v369 = vpow.pop %v368
  %v370 = vmul.f32 %v361, 1.442695
  %v371 = vpow.pop %v370
  %v372 = vmul.f32 %v362, 1.442695
  %v373 = vpow.pop %v372
  %v374 = vmul.f32 %v363, 1.442695
  %v375 = vpow.pop %v374
  %v376 = vmul.f32 %v364, 1.442695
  %v377 = vpow.pop %v376
  %v378 = vmul.f32 %v365, 1.442695
  %v379 = vpow.pop %v378
  %v380 = vmul.f32 %v366, 1.442695
  %v381 = vpow.pop %v380
  %v382 = vmul.f32 %v367, 1.442695
  %v383 = vpow.pop %v382
  %v384 = vsub.f32 %v344, %v352
  %v385 = vsub.f32 %v345, %v353
  %v386 = vsub.f32 %v346, %v354
  %v387 = vsub.f32 %v347, %v355
  %v388 = vsub.f32 %v348, %v356
  %v389 = vsub.f32 %v349, %v357
  %v390 = vsub.f32 %v350, %v358
  %v391 = vsub.f32 %v351, %v359
  %v392 = vmul.f32 %v384, 1.442695
  %v393 = vpow.pop %v392
  %v394 = vmul.f32 %v385, 1.442695
  %v395 = vpow.pop %v394
  %v396 = vmul.f32 %v386, 1.442695
  %v397 = vpow.pop %v396
  %v398 = vmul.f32 %v387, 1.442695
  %v399 = vpow.pop %v398
  %v400 = vmul.f32 %v388, 1.442695
  %v401 = vpow.pop %v400
  %v402 = vmul.f32 %v389, 1.442695
  %v403 = vpow.pop %v402
  %v404 = vmul.f32 %v390, 1.442695
  %v405 = vpow.pop %v404
  %v406 = vmul.f32 %v391, 1.442695
  %v407 = vpow.pop %v406
  %v408 = vmul.f32 %v369, 0.0
  %v409 = vmul.f32 %v371, 0.0
  %v410 = vmul.f32 %v373, 0.0
  %v411 = vmul.f32 %v375, 0.0
  %v412 = vmul.f32 %v377, 0.0
  %v413 = vmul.f32 %v379, 0.0
  %v414 = vmul.f32 %v381, 0.0
  %v415 = vmul.f32 %v383, 0.0
  %v416 = vadd.f32 %v408, %v393
  %v417 = vadd.f32 %v409, %v395
  %v418 = vadd.f32 %v410, %v397
  %v419 = vadd.f32 %v411, %v399
  %v420 = vadd.f32 %v412, %v401
  %v421 = vadd.f32 %v413, %v403
  %v422 = vadd.f32 %v414, %v405
  %v423 = vadd.f32 %v415, %v407
  %v424 = vld [vmem:[%s1] sm:$0xff]
  %v425 = vld [vmem:[%s1 + $0x8] sm:$0xff]
  %v426 = vld [vmem:[%s1 + $0x10] sm:$0xff]
  %v427 = vld [vmem:[%s1 + $0x18] sm:$0xff]
  %v428 = vld [vmem:[%s1 + $0x20] sm:$0xff]
  %v429 = vld [vmem:[%s1 + $0x28] sm:$0xff]
  %v430 = vld [vmem:[%s1 + $0x30] sm:$0xff]
  %v431 = vld [vmem:[%s1 + $0x38] sm:$0xff]
  %v432 = vadd.f32 %v424, %v207
  %v433 = vadd.f32 %v425, %v208
  %v434 = vadd.f32 %v426, %v209
  %v435 = vadd.f32 %v427, %v210
  %v436 = vadd.f32 %v428, %v211
  %v437 = vadd.f32 %v429, %v212
  %v438 = vadd.f32 %v430, %v213
  %v439 = vadd.f32 %v431, %v214
  %v440 = vmul.f32 %v393, %v432
  %v441 = vmul.f32 %v395, %v433
  %v442 = vmul.f32 %v397, %v434
  %v443 = vmul.f32 %v399, %v435
  %v444 = vmul.f32 %v401, %v436
  %v445 = vmul.f32 %v403, %v437
  %v446 = vmul.f32 %v405, %v438
  %v447 = vmul.f32 %v407, %v439
  %v448 = vadd.f32 %v408, %v440
  %v449 = vadd.f32 %v409, %v441
  %v450 = vadd.f32 %v410, %v442
  %v451 = vadd.f32 %v411, %v443
  %v452 = vadd.f32 %v412, %v444
  %v453 = vadd.f32 %v413, %v445
  %v454 = vadd.f32 %v414, %v446
  %v455 = vadd.f32 %v415, %v447
  %s456 = scalar_lea.vmem %s0, 64
  %v457 = vld [vmem:[%s456] sm:$0xff]
  %v458 = vld [vmem:[%s456 + $0x8] sm:$0xff]
  %v459 = vld [vmem:[%s456 + $0x10] sm:$0xff]
  %v460 = vld [vmem:[%s456 + $0x18] sm:$0xff]
  %v461 = vld [vmem:[%s456 + $0x20] sm:$0xff]
  %v462 = vld [vmem:[%s456 + $0x28] sm:$0xff]
  %v463 = vld [vmem:[%s456 + $0x30] sm:$0xff]
  %v464 = vld [vmem:[%s456 + $0x38] sm:$0xff]
  %v465 = vpack.c.bf16 %v458, %v457
  %v466 = vpack.c.bf16 %v460, %v459
  %v467 = vpack.c.bf16 %v462, %v461
  %v468 = vpack.c.bf16 %v464, %v463
  %v470 = vsel %vm101, %v465, 0
  %v473 = vsel %vm101, %v466, 0
  %v476 = vsel %vm101, %v467, 0
  %v479 = vsel %vm101, %v468, 0
  %481 = vmatpush.bf16.msra.mxu0 0
  %482 = vmatpush.bf16.msra.mxu0 0
  %483 = vmatpush.bf16.msra.mxu0 0
  %484 = vmatpush.bf16.msra.mxu0 0
  %485 = vmatpush.bf16.msra.mxu0 0
  %486 = vmatpush.bf16.msra.mxu0 0
  %487 = vmatpush.bf16.msra.mxu0 0
  %488 = vmatpush.bf16.msra.mxu0 %v119
  %489 = vmatmul.bf16.gmra.mxu0 %v470
  %v490 = vpop.f32.mrf.mxu0
  %v491 = vadd.f32 %v99, %v490
  %v492 = vpop.f32.mrf.mxu0
  %v493 = vadd.f32 %v99, %v492
  %494 = vmatmul.bf16.gmra.mxu0 %v473
  %v495 = vpop.f32.mrf.mxu0
  %v496 = vadd.f32 %v99, %v495
  %v497 = vpop.f32.mrf.mxu0
  %v498 = vadd.f32 %v99, %v497
  %499 = vmatmul.bf16.gmra.mxu0 %v476
  %v500 = vpop.f32.mrf.mxu0
  %v501 = vadd.f32 %v99, %v500
  %v502 = vpop.f32.mrf.mxu0
  %v503 = vadd.f32 %v99, %v502
  %504 = vmatmul.bf16.gmra.mxu0 %v479
  %v505 = vpop.f32.mrf.mxu0
  %v506 = vadd.f32 %v99, %v505
  %v507 = vpop.f32.mrf.mxu0
  %v508 = vadd.f32 %v99, %v507
  %509 = vdwg.mxu0
  %v510 = vmax.f32 %v491, 0.0
  %v511 = vmax.f32 %v493, 0.0
  %v512 = vmax.f32 %v496, 0.0
  %v513 = vmax.f32 %v498, 0.0
  %v514 = vmax.f32 %v501, 0.0
  %v515 = vmax.f32 %v503, 0.0
  %v516 = vmax.f32 %v506, 0.0
  %v517 = vmax.f32 %v508, 0.0
  %v518 = vpack.c.bf16 %v511, %v510
  %v519 = vpack.c.bf16 %v513, %v512
  %v520 = vpack.c.bf16 %v515, %v514
  %v521 = vpack.c.bf16 %v517, %v516
  %v523 = vsel %vm165, %v518, 0
  %v526 = vsel %vm165, %v519, 0
  %v529 = vsel %vm165, %v520, 0
  %v532 = vsel %vm165, %v521, 0
  %534 = vmatpush.bf16.msra.mxu0 0
  %535 = vmatpush.bf16.msra.mxu0 0
  %536 = vmatpush.bf16.msra.mxu0 0
  %537 = vmatpush.bf16.msra.mxu0 0
  %538 = vmatpush.bf16.msra.mxu0 %v64
  %539 = vmatpush.bf16.msra.mxu0 %v63
  %540 = vmatpush.bf16.msra.mxu0 %v62
  %541 = vmatpush.bf16.msra.mxu0 %v61
  %542 = vmatmul.bf16.gmra.mxu0 %v523
  %v543 = vpop.f32.mrf.mxu0
  %v544 = vadd.f32 %v163, %v543
  %v545 = vpop.f32.mrf.mxu0
  %v546 = vadd.f32 %v163, %v545
  %547 = vmatmul.bf16.gmra.mxu0 %v526
  %v548 = vpop.f32.mrf.mxu0
  %v549 = vadd.f32 %v163, %v548
  %v550 = vpop.f32.mrf.mxu0
  %v551 = vadd.f32 %v163, %v550
  %552 = vmatmul.bf16.gmra.mxu0 %v529
  %v553 = vpop.f32.mrf.mxu0
  %v554 = vadd.f32 %v163, %v553
  %v555 = vpop.f32.mrf.mxu0
  %v556 = vadd.f32 %v163, %v555
  %557 = vmatmul.bf16.gmra.mxu0 %v532
  %v558 = vpop.f32.mrf.mxu0
  %v559 = vadd.f32 %v163, %v558
  %v560 = vpop.f32.mrf.mxu0
  %v561 = vadd.f32 %v163, %v560
  %562 = vdwg.mxu0
  %v563 = vmax.f32 %v544, 0.0
  %v564 = vmax.f32 %v546, 0.0
  %v565 = vmax.f32 %v549, 0.0
  %v566 = vmax.f32 %v551, 0.0
  %v567 = vmax.f32 %v554, 0.0
  %v568 = vmax.f32 %v556, 0.0
  %v569 = vmax.f32 %v559, 0.0
  %v570 = vmax.f32 %v561, 0.0
  %s571 = scalar_lea.vmem %s2, 64
  %v572 = vld [vmem:[%s571] sm:$0xff]
  %v573 = vld [vmem:[%s571 + $0x8] sm:$0xff]
  %v574 = vld [vmem:[%s571 + $0x10] sm:$0xff]
  %v575 = vld [vmem:[%s571 + $0x18] sm:$0xff]
  %v576 = vld [vmem:[%s571 + $0x20] sm:$0xff]
  %v577 = vld [vmem:[%s571 + $0x28] sm:$0xff]
  %v578 = vld [vmem:[%s571 + $0x30] sm:$0xff]
  %v579 = vld [vmem:[%s571 + $0x38] sm:$0xff]
  %v580 = vsub.f32 %v42, %v572
  %v581 = vsub.f32 %v43, %v573
  %v582 = vsub.f32 %v44, %v574
  %v583 = vsub.f32 %v45, %v575
  %v584 = vsub.f32 %v46, %v576
  %v585 = vsub.f32 %v47, %v577
  %v586 = vsub.f32 %v48, %v578
  %v587 = vsub.f32 %v49, %v579
  %v588 = vadd.f32 %v580, %v563
  %v589 = vadd.f32 %v581, %v564
  %v590 = vadd.f32 %v582, %v565
  %v591 = vadd.f32 %v583, %v566
  %v592 = vadd.f32 %v584, %v567
  %v593 = vadd.f32 %v585, %v568
  %v594 = vadd.f32 %v586, %v569
  %v595 = vadd.f32 %v587, %v570
  %v596 = vpack.c.bf16 %v589, %v588
  %v597 = vpack.c.bf16 %v591, %v590
  %v598 = vpack.c.bf16 %v593, %v592
  %v599 = vpack.c.bf16 %v595, %v594
  %v601 = vsel %vm246, %v596, 0
  %v604 = vsel %vm246, %v597, 0
  %v607 = vsel %vm246, %v598, 0
  %v610 = vsel %vm246, %v599, 0
  %612 = vmatpush.bf16.msra.mxu0 0
  %613 = vmatpush.bf16.msra.mxu0 0
  %614 = vmatpush.bf16.msra.mxu0 0
  %615 = vmatpush.bf16.msra.mxu0 0
  %616 = vmatpush.bf16.msra.mxu0 0
  %617 = vmatpush.bf16.msra.mxu0 0
  %618 = vmatpush.bf16.msra.mxu0 %v71
  %619 = vmatpush.bf16.msra.mxu0 %v70
  %620 = vmatmul.bf16.gmra.mxu0 %v601
  %v621 = vpop.f32.mrf.mxu0
  %v622 = vadd.f32 %v244, %v621
  %v623 = vpop.f32.mrf.mxu0
  %v624 = vadd.f32 %v244, %v623
  %625 = vmatmul.bf16.gmra.mxu0 %v604
  %v626 = vpop.f32.mrf.mxu0
  %v627 = vadd.f32 %v244, %v626
  %v628 = vpop.f32.mrf.mxu0
  %v629 = vadd.f32 %v244, %v628
  %630 = vmatmul.bf16.gmra.mxu0 %v607
  %v631 = vpop.f32.mrf.mxu0
  %v632 = vadd.f32 %v244, %v631
  %v633 = vpop.f32.mrf.mxu0
  %v634 = vadd.f32 %v244, %v633
  %635 = vmatmul.bf16.gmra.mxu0 %v610
  %v636 = vpop.f32.mrf.mxu0
  %v637 = vadd.f32 %v244, %v636
  %v638 = vpop.f32.mrf.mxu0
  %v639 = vadd.f32 %v244, %v638
  %640 = vdwg.mxu0
  %v641 = vmax.f32 %v622, 0.0
  %v642 = vmax.f32 %v624, 0.0
  %v643 = vmax.f32 %v627, 0.0
  %v644 = vmax.f32 %v629, 0.0
  %v645 = vmax.f32 %v632, 0.0
  %v646 = vmax.f32 %v634, 0.0
  %v647 = vmax.f32 %v637, 0.0
  %v648 = vmax.f32 %v639, 0.0
  %v649 = vpack.c.bf16 %v642, %v641
  %v650 = vpack.c.bf16 %v644, %v643
  %v651 = vpack.c.bf16 %v646, %v645
  %v652 = vpack.c.bf16 %v648, %v647
  %v654 = vsel %vm165, %v649, 0
  %v657 = vsel %vm165, %v650, 0
  %v660 = vsel %vm165, %v651, 0
  %v663 = vsel %vm165, %v652, 0
  %665 = vmatpush.bf16.msra.mxu0 0
  %666 = vmatpush.bf16.msra.mxu0 0
  %667 = vmatpush.bf16.msra.mxu0 0
  %668 = vmatpush.bf16.msra.mxu0 0
  %669 = vmatpush.bf16.msra.mxu0 %v84
  %670 = vmatpush.bf16.msra.mxu0 %v83
  %671 = vmatpush.bf16.msra.mxu0 %v82
  %672 = vmatpush.bf16.msra.mxu0 %v81
  %673 = vmatmul.bf16.gmra.mxu0 %v654
  %v674 = vpop.f32.mrf.mxu0
  %v675 = vadd.f32 %v301, %v674
  %v676 = vpop.f32.mrf.mxu0
  %v677 = vadd.f32 %v301, %v676
  %678 = vmatmul.bf16.gmra.mxu0 %v657
  %v679 = vpop.f32.mrf.mxu0
  %v680 = vadd.f32 %v301, %v679
  %v681 = vpop.f32.mrf.mxu0
  %v682 = vadd.f32 %v301, %v681
  %683 = vmatmul.bf16.gmra.mxu0 %v660
  %v684 = vpop.f32.mrf.mxu0
  %v685 = vadd.f32 %v301, %v684
  %v686 = vpop.f32.mrf.mxu0
  %v687 = vadd.f32 %v301, %v686
  %688 = vmatmul.bf16.gmra.mxu0 %v663
  %v689 = vpop.f32.mrf.mxu0
  %v690 = vadd.f32 %v301, %v689
  %v691 = vpop.f32.mrf.mxu0
  %v692 = vadd.f32 %v301, %v691
  %693 = vdwg.mxu0
  %v694 = vmax.f32 %v675, 0.0
  %v695 = vmax.f32 %v677, 0.0
  %v696 = vmax.f32 %v680, 0.0
  %v697 = vmax.f32 %v682, 0.0
  %v698 = vmax.f32 %v685, 0.0
  %v699 = vmax.f32 %v687, 0.0
  %v700 = vmax.f32 %v690, 0.0
  %v701 = vmax.f32 %v692, 0.0
  %v702 = vmax.f32 %v352, %v694
  %v703 = vmax.f32 %v353, %v695
  %v704 = vmax.f32 %v354, %v696
  %v705 = vmax.f32 %v355, %v697
  %v706 = vmax.f32 %v356, %v698
  %v707 = vmax.f32 %v357, %v699
  %v708 = vmax.f32 %v358, %v700
  %v709 = vmax.f32 %v359, %v701
  %v710 = vsub.f32 %v352, %v702
  %v711 = vsub.f32 %v353, %v703
  %v712 = vsub.f32 %v354, %v704
  %v713 = vsub.f32 %v355, %v705
  %v714 = vsub.f32 %v356, %v706
  %v715 = vsub.f32 %v357, %v707
  %v716 = vsub.f32 %v358, %v708
  %v717 = vsub.f32 %v359, %v709
  %v718 = vmul.f32 %v710, 1.442695
  %v719 = vpow.pop %v718
  %v720 = vmul.f32 %v711, 1.442695
  %v721 = vpow.pop %v720
  %v722 = vmul.f32 %v712, 1.442695
  %v723 = vpow.pop %v722
  %v724 = vmul.f32 %v713, 1.442695
  %v725 = vpow.pop %v724
  %v726 = vmul.f32 %v714, 1.442695
  %v727 = vpow.pop %v726
  %v728 = vmul.f32 %v715, 1.442695
  %v729 = vpow.pop %v728
  %v730 = vmul.f32 %v716, 1.442695
  %v731 = vpow.pop %v730
  %v732 = vmul.f32 %v717, 1.442695
  %v733 = vpow.pop %v732
  %v734 = vsub.f32 %v694, %v702
  %v735 = vsub.f32 %v695, %v703
  %v736 = vsub.f32 %v696, %v704
  %v737 = vsub.f32 %v697, %v705
  %v738 = vsub.f32 %v698, %v706
  %v739 = vsub.f32 %v699, %v707
  %v740 = vsub.f32 %v700, %v708
  %v741 = vsub.f32 %v701, %v709
  %v742 = vmul.f32 %v734, 1.442695
  %v743 = vpow.pop %v742
  %v744 = vmul.f32 %v735, 1.442695
  %v745 = vpow.pop %v744
  %v746 = vmul.f32 %v736, 1.442695
  %v747 = vpow.pop %v746
  %v748 = vmul.f32 %v737, 1.442695
  %v749 = vpow.pop %v748
  %v750 = vmul.f32 %v738, 1.442695
  %v751 = vpow.pop %v750
  %v752 = vmul.f32 %v739, 1.442695
  %v753 = vpow.pop %v752
  %v754 = vmul.f32 %v740, 1.442695
  %v755 = vpow.pop %v754
  %v756 = vmul.f32 %v741, 1.442695
  %v757 = vpow.pop %v756
  %v758 = vmul.f32 %v416, %v719
  %v759 = vmul.f32 %v417, %v721
  %v760 = vmul.f32 %v418, %v723
  %v761 = vmul.f32 %v419, %v725
  %v762 = vmul.f32 %v420, %v727
  %v763 = vmul.f32 %v421, %v729
  %v764 = vmul.f32 %v422, %v731
  %v765 = vmul.f32 %v423, %v733
  %v766 = vadd.f32 %v758, %v743
  %v767 = vadd.f32 %v759, %v745
  %v768 = vadd.f32 %v760, %v747
  %v769 = vadd.f32 %v761, %v749
  %v770 = vadd.f32 %v762, %v751
  %v771 = vadd.f32 %v763, %v753
  %v772 = vadd.f32 %v764, %v755
  %v773 = vadd.f32 %v765, %v757
  %v774 = vmul.f32 %v448, %v719
  %v775 = vmul.f32 %v449, %v721
  %v776 = vmul.f32 %v450, %v723
  %v777 = vmul.f32 %v451, %v725
  %v778 = vmul.f32 %v452, %v727
  %v779 = vmul.f32 %v453, %v729
  %v780 = vmul.f32 %v454, %v731
  %v781 = vmul.f32 %v455, %v733
  %s782 = scalar_lea.vmem %s1, 64
  %v783 = vld [vmem:[%s782] sm:$0xff]
  %v784 = vld [vmem:[%s782 + $0x8] sm:$0xff]
  %v785 = vld [vmem:[%s782 + $0x10] sm:$0xff]
  %v786 = vld [vmem:[%s782 + $0x18] sm:$0xff]
  %v787 = vld [vmem:[%s782 + $0x20] sm:$0xff]
  %v788 = vld [vmem:[%s782 + $0x28] sm:$0xff]
  %v789 = vld [vmem:[%s782 + $0x30] sm:$0xff]
  %v790 = vld [vmem:[%s782 + $0x38] sm:$0xff]
  %v791 = vadd.f32 %v783, %v563
  %v792 = vadd.f32 %v784, %v564
  %v793 = vadd.f32 %v785, %v565
  %v794 = vadd.f32 %v786, %v566
  %v795 = vadd.f32 %v787, %v567
  %v796 = vadd.f32 %v788, %v568
  %v797 = vadd.f32 %v789, %v569
  %v798 = vadd.f32 %v790, %v570
  %v799 = vmul.f32 %v743, %v791
  %v800 = vmul.f32 %v745, %v792
  %v801 = vmul.f32 %v747, %v793
  %v802 = vmul.f32 %v749, %v794
  %v803 = vmul.f32 %v751, %v795
  %v804 = vmul.f32 %v753, %v796
  %v805 = vmul.f32 %v755, %v797
  %v806 = vmul.f32 %v757, %v798
  %v807 = vadd.f32 %v774, %v799
  %v808 = vadd.f32 %v775, %v800
  %v809 = vadd.f32 %v776, %v801
  %v810 = vadd.f32 %v777, %v802
  %v811 = vadd.f32 %v778, %v803
  %v812 = vadd.f32 %v779, %v804
  %v813 = vadd.f32 %v780, %v805
  %v814 = vadd.f32 %v781, %v806
  %s815 = scalar_lea.vmem %s0, 128
  %v816 = vld [vmem:[%s815] sm:$0xff]
  %v817 = vld [vmem:[%s815 + $0x8] sm:$0xff]
  %v818 = vld [vmem:[%s815 + $0x10] sm:$0xff]
  %v819 = vld [vmem:[%s815 + $0x18] sm:$0xff]
  %v820 = vld [vmem:[%s815 + $0x20] sm:$0xff]
  %v821 = vld [vmem:[%s815 + $0x28] sm:$0xff]
  %v822 = vld [vmem:[%s815 + $0x30] sm:$0xff]
  %v823 = vld [vmem:[%s815 + $0x38] sm:$0xff]
  %v824 = vpack.c.bf16 %v817, %v816
  %v825 = vpack.c.bf16 %v819, %v818
  %v826 = vpack.c.bf16 %v821, %v820
  %v827 = vpack.c.bf16 %v823, %v822
  %v829 = vsel %vm101, %v824, 0
  %v832 = vsel %vm101, %v825, 0
  %v835 = vsel %vm101, %v826, 0
  %v838 = vsel %vm101, %v827, 0
  %840 = vmatpush.bf16.msra.mxu0 0
  %841 = vmatpush.bf16.msra.mxu0 0
  %842 = vmatpush.bf16.msra.mxu0 0
  %843 = vmatpush.bf16.msra.mxu0 0
  %844 = vmatpush.bf16.msra.mxu0 0
  %845 = vmatpush.bf16.msra.mxu0 0
  %846 = vmatpush.bf16.msra.mxu0 0
  %847 = vmatpush.bf16.msra.mxu0 %v119
  %848 = vmatmul.bf16.gmra.mxu0 %v829
  %v849 = vpop.f32.mrf.mxu0
  %v850 = vadd.f32 %v99, %v849
  %v851 = vpop.f32.mrf.mxu0
  %v852 = vadd.f32 %v99, %v851
  %853 = vmatmul.bf16.gmra.mxu0 %v832
  %v854 = vpop.f32.mrf.mxu0
  %v855 = vadd.f32 %v99, %v854
  %v856 = vpop.f32.mrf.mxu0
  %v857 = vadd.f32 %v99, %v856
  %858 = vmatmul.bf16.gmra.mxu0 %v835
  %v859 = vpop.f32.mrf.mxu0
  %v860 = vadd.f32 %v99, %v859
  %v861 = vpop.f32.mrf.mxu0
  %v862 = vadd.f32 %v99, %v861
  %863 = vmatmul.bf16.gmra.mxu0 %v838
  %v864 = vpop.f32.mrf.mxu0
  %v865 = vadd.f32 %v99, %v864
  %v866 = vpop.f32.mrf.mxu0
  %v867 = vadd.f32 %v99, %v866
  %868 = vdwg.mxu0
  %v869 = vmax.f32 %v850, 0.0
  %v870 = vmax.f32 %v852, 0.0
  %v871 = vmax.f32 %v855, 0.0
  %v872 = vmax.f32 %v857, 0.0
  %v873 = vmax.f32 %v860, 0.0
  %v874 = vmax.f32 %v862, 0.0
  %v875 = vmax.f32 %v865, 0.0
  %v876 = vmax.f32 %v867, 0.0
  %v877 = vpack.c.bf16 %v870, %v869
  %v878 = vpack.c.bf16 %v872, %v871
  %v879 = vpack.c.bf16 %v874, %v873
  %v880 = vpack.c.bf16 %v876, %v875
  %v882 = vsel %vm165, %v877, 0
  %v885 = vsel %vm165, %v878, 0
  %v888 = vsel %vm165, %v879, 0
  %v891 = vsel %vm165, %v880, 0
  %893 = vmatpush.bf16.msra.mxu0 0
  %894 = vmatpush.bf16.msra.mxu0 0
  %895 = vmatpush.bf16.msra.mxu0 0
  %896 = vmatpush.bf16.msra.mxu0 0
  %897 = vmatpush.bf16.msra.mxu0 %v64
  %898 = vmatpush.bf16.msra.mxu0 %v63
  %899 = vmatpush.bf16.msra.mxu0 %v62
  %900 = vmatpush.bf16.msra.mxu0 %v61
  %901 = vmatmul.bf16.gmra.mxu0 %v882
  %v902 = vpop.f32.mrf.mxu0
  %v903 = vadd.f32 %v163, %v902
  %v904 = vpop.f32.mrf.mxu0
  %v905 = vadd.f32 %v163, %v904
  %906 = vmatmul.bf16.gmra.mxu0 %v885
  %v907 = vpop.f32.mrf.mxu0
  %v908 = vadd.f32 %v163, %v907
  %v909 = vpop.f32.mrf.mxu0
  %v910 = vadd.f32 %v163, %v909
  %911 = vmatmul.bf16.gmra.mxu0 %v888
  %v912 = vpop.f32.mrf.mxu0
  %v913 = vadd.f32 %v163, %v912
  %v914 = vpop.f32.mrf.mxu0
  %v915 = vadd.f32 %v163, %v914
  %916 = vmatmul.bf16.gmra.mxu0 %v891
  %v917 = vpop.f32.mrf.mxu0
  %v918 = vadd.f32 %v163, %v917
  %v919 = vpop.f32.mrf.mxu0
  %v920 = vadd.f32 %v163, %v919
  %921 = vdwg.mxu0
  %v922 = vmax.f32 %v903, 0.0
  %v923 = vmax.f32 %v905, 0.0
  %v924 = vmax.f32 %v908, 0.0
  %v925 = vmax.f32 %v910, 0.0
  %v926 = vmax.f32 %v913, 0.0
  %v927 = vmax.f32 %v915, 0.0
  %v928 = vmax.f32 %v918, 0.0
  %v929 = vmax.f32 %v920, 0.0
  %s930 = scalar_lea.vmem %s2, 128
  %v931 = vld [vmem:[%s930] sm:$0xff]
  %v932 = vld [vmem:[%s930 + $0x8] sm:$0xff]
  %v933 = vld [vmem:[%s930 + $0x10] sm:$0xff]
  %v934 = vld [vmem:[%s930 + $0x18] sm:$0xff]
  %v935 = vld [vmem:[%s930 + $0x20] sm:$0xff]
  %v936 = vld [vmem:[%s930 + $0x28] sm:$0xff]
  %v937 = vld [vmem:[%s930 + $0x30] sm:$0xff]
  %v938 = vld [vmem:[%s930 + $0x38] sm:$0xff]
  %v939 = vsub.f32 %v42, %v931
  %v940 = vsub.f32 %v43, %v932
  %v941 = vsub.f32 %v44, %v933
  %v942 = vsub.f32 %v45, %v934
  %v943 = vsub.f32 %v46, %v935
  %v944 = vsub.f32 %v47, %v936
  %v945 = vsub.f32 %v48, %v937
  %v946 = vsub.f32 %v49, %v938
  %v947 = vadd.f32 %v939, %v922
  %v948 = vadd.f32 %v940, %v923
  %v949 = vadd.f32 %v941, %v924
  %v950 = vadd.f32 %v942, %v925
  %v951 = vadd.f32 %v943, %v926
  %v952 = vadd.f32 %v944, %v927
  %v953 = vadd.f32 %v945, %v928
  %v954 = vadd.f32 %v946, %v929
  %v955 = vpack.c.bf16 %v948, %v947
  %v956 = vpack.c.bf16 %v950, %v949
  %v957 = vpack.c.bf16 %v952, %v951
  %v958 = vpack.c.bf16 %v954, %v953
  %v960 = vsel %vm246, %v955, 0
  %v963 = vsel %vm246, %v956, 0
  %v966 = vsel %vm246, %v957, 0
  %v969 = vsel %vm246, %v958, 0
  %971 = vmatpush.bf16.msra.mxu0 0
  %972 = vmatpush.bf16.msra.mxu0 0
  %973 = vmatpush.bf16.msra.mxu0 0
  %974 = vmatpush.bf16.msra.mxu0 0
  %975 = vmatpush.bf16.msra.mxu0 0
  %976 = vmatpush.bf16.msra.mxu0 0
  %977 = vmatpush.bf16.msra.mxu0 %v71
  %978 = vmatpush.bf16.msra.mxu0 %v70
  %979 = vmatmul.bf16.gmra.mxu0 %v960
  %v980 = vpop.f32.mrf.mxu0
  %v981 = vadd.f32 %v244, %v980
  %v982 = vpop.f32.mrf.mxu0
  %v983 = vadd.f32 %v244, %v982
  %984 = vmatmul.bf16.gmra.mxu0 %v963
  %v985 = vpop.f32.mrf.mxu0
  %v986 = vadd.f32 %v244, %v985
  %v987 = vpop.f32.mrf.mxu0
  %v988 = vadd.f32 %v244, %v987
  %989 = vmatmul.bf16.gmra.mxu0 %v966
  %v990 = vpop.f32.mrf.mxu0
  %v991 = vadd.f32 %v244, %v990
  %v992 = vpop.f32.mrf.mxu0
  %v993 = vadd.f32 %v244, %v992
  %994 = vmatmul.bf16.gmra.mxu0 %v969
  %v995 = vpop.f32.mrf.mxu0
  %v996 = vadd.f32 %v244, %v995
  %v997 = vpop.f32.mrf.mxu0
  %v998 = vadd.f32 %v244, %v997
  %999 = vdwg.mxu0
  %v1000 = vmax.f32 %v981, 0.0
  %v1001 = vmax.f32 %v983, 0.0
  %v1002 = vmax.f32 %v986, 0.0
  %v1003 = vmax.f32 %v988, 0.0
  %v1004 = vmax.f32 %v991, 0.0
  %v1005 = vmax.f32 %v993, 0.0
  %v1006 = vmax.f32 %v996, 0.0
  %v1007 = vmax.f32 %v998, 0.0
  %v1008 = vpack.c.bf16 %v1001, %v1000
  %v1009 = vpack.c.bf16 %v1003, %v1002
  %v1010 = vpack.c.bf16 %v1005, %v1004
  %v1011 = vpack.c.bf16 %v1007, %v1006
  %v1013 = vsel %vm165, %v1008, 0
  %v1016 = vsel %vm165, %v1009, 0
  %v1019 = vsel %vm165, %v1010, 0
  %v1022 = vsel %vm165, %v1011, 0
  %1024 = vmatpush.bf16.msra.mxu0 0
  %1025 = vmatpush.bf16.msra.mxu0 0
  %1026 = vmatpush.bf16.msra.mxu0 0
  %1027 = vmatpush.bf16.msra.mxu0 0
  %1028 = vmatpush.bf16.msra.mxu0 %v84
  %1029 = vmatpush.bf16.msra.mxu0 %v83
  %1030 = vmatpush.bf16.msra.mxu0 %v82
  %1031 = vmatpush.bf16.msra.mxu0 %v81
  %1032 = vmatmul.bf16.gmra.mxu0 %v1013
  %v1033 = vpop.f32.mrf.mxu0
  %v1034 = vadd.f32 %v301, %v1033
  %v1035 = vpop.f32.mrf.mxu0
  %v1036 = vadd.f32 %v301, %v1035
  %1037 = vmatmul.bf16.gmra.mxu0 %v1016
  %v1038 = vpop.f32.mrf.mxu0
  %v1039 = vadd.f32 %v301, %v1038
  %v1040 = vpop.f32.mrf.mxu0
  %v1041 = vadd.f32 %v301, %v1040
  %1042 = vmatmul.bf16.gmra.mxu0 %v1019
  %v1043 = vpop.f32.mrf.mxu0
  %v1044 = vadd.f32 %v301, %v1043
  %v1045 = vpop.f32.mrf.mxu0
  %v1046 = vadd.f32 %v301, %v1045
  %1047 = vmatmul.bf16.gmra.mxu0 %v1022
  %v1048 = vpop.f32.mrf.mxu0
  %v1049 = vadd.f32 %v301, %v1048
  %v1050 = vpop.f32.mrf.mxu0
  %v1051 = vadd.f32 %v301, %v1050
  %1052 = vdwg.mxu0
  %v1053 = vmax.f32 %v1034, 0.0
  %v1054 = vmax.f32 %v1036, 0.0
  %v1055 = vmax.f32 %v1039, 0.0
  %v1056 = vmax.f32 %v1041, 0.0
  %v1057 = vmax.f32 %v1044, 0.0
  %v1058 = vmax.f32 %v1046, 0.0
  %v1059 = vmax.f32 %v1049, 0.0
  %v1060 = vmax.f32 %v1051, 0.0
  %v1061 = vmax.f32 %v702, %v1053
  %v1062 = vmax.f32 %v703, %v1054
  %v1063 = vmax.f32 %v704, %v1055
  %v1064 = vmax.f32 %v705, %v1056
  %v1065 = vmax.f32 %v706, %v1057
  %v1066 = vmax.f32 %v707, %v1058
  %v1067 = vmax.f32 %v708, %v1059
  %v1068 = vmax.f32 %v709, %v1060
  %v1069 = vsub.f32 %v702, %v1061
  %v1070 = vsub.f32 %v703, %v1062
  %v1071 = vsub.f32 %v704, %v1063
  %v1072 = vsub.f32 %v705, %v1064
  %v1073 = vsub.f32 %v706, %v1065
  %v1074 = vsub.f32 %v707, %v1066
  %v1075 = vsub.f32 %v708, %v1067
  %v1076 = vsub.f32 %v709, %v1068
  %v1077 = vmul.f32 %v1069, 1.442695
  %v1078 = vpow.pop %v1077
  %v1079 = vmul.f32 %v1070, 1.442695
  %v1080 = vpow.pop %v1079
  %v1081 = vmul.f32 %v1071, 1.442695
  %v1082 = vpow.pop %v1081
  %v1083 = vmul.f32 %v1072, 1.442695
  %v1084 = vpow.pop %v1083
  %v1085 = vmul.f32 %v1073, 1.442695
  %v1086 = vpow.pop %v1085
  %v1087 = vmul.f32 %v1074, 1.442695
  %v1088 = vpow.pop %v1087
  %v1089 = vmul.f32 %v1075, 1.442695
  %v1090 = vpow.pop %v1089
  %v1091 = vmul.f32 %v1076, 1.442695
  %v1092 = vpow.pop %v1091
  %v1093 = vsub.f32 %v1053, %v1061
  %v1094 = vsub.f32 %v1054, %v1062
  %v1095 = vsub.f32 %v1055, %v1063
  %v1096 = vsub.f32 %v1056, %v1064
  %v1097 = vsub.f32 %v1057, %v1065
  %v1098 = vsub.f32 %v1058, %v1066
  %v1099 = vsub.f32 %v1059, %v1067
  %v1100 = vsub.f32 %v1060, %v1068
  %v1101 = vmul.f32 %v1093, 1.442695
  %v1102 = vpow.pop %v1101
  %v1103 = vmul.f32 %v1094, 1.442695
  %v1104 = vpow.pop %v1103
  %v1105 = vmul.f32 %v1095, 1.442695
  %v1106 = vpow.pop %v1105
  %v1107 = vmul.f32 %v1096, 1.442695
  %v1108 = vpow.pop %v1107
  %v1109 = vmul.f32 %v1097, 1.442695
  %v1110 = vpow.pop %v1109
  %v1111 = vmul.f32 %v1098, 1.442695
  %v1112 = vpow.pop %v1111
  %v1113 = vmul.f32 %v1099, 1.442695
  %v1114 = vpow.pop %v1113
  %v1115 = vmul.f32 %v1100, 1.442695
  %v1116 = vpow.pop %v1115
  %v1117 = vmul.f32 %v766, %v1078
  %v1118 = vmul.f32 %v767, %v1080
  %v1119 = vmul.f32 %v768, %v1082
  %v1120 = vmul.f32 %v769, %v1084
  %v1121 = vmul.f32 %v770, %v1086
  %v1122 = vmul.f32 %v771, %v1088
  %v1123 = vmul.f32 %v772, %v1090
  %v1124 = vmul.f32 %v773, %v1092
  %v1125 = vadd.f32 %v1117, %v1102
  %v1126 = vadd.f32 %v1118, %v1104
  %v1127 = vadd.f32 %v1119, %v1106
  %v1128 = vadd.f32 %v1120, %v1108
  %v1129 = vadd.f32 %v1121, %v1110
  %v1130 = vadd.f32 %v1122, %v1112
  %v1131 = vadd.f32 %v1123, %v1114
  %v1132 = vadd.f32 %v1124, %v1116
  %v1133 = vmul.f32 %v807, %v1078
  %v1134 = vmul.f32 %v808, %v1080
  %v1135 = vmul.f32 %v809, %v1082
  %v1136 = vmul.f32 %v810, %v1084
  %v1137 = vmul.f32 %v811, %v1086
  %v1138 = vmul.f32 %v812, %v1088
  %v1139 = vmul.f32 %v813, %v1090
  %v1140 = vmul.f32 %v814, %v1092
  %s1141 = scalar_lea.vmem %s1, 128
  %v1142 = vld [vmem:[%s1141] sm:$0xff]
  %v1143 = vld [vmem:[%s1141 + $0x8] sm:$0xff]
  %v1144 = vld [vmem:[%s1141 + $0x10] sm:$0xff]
  %v1145 = vld [vmem:[%s1141 + $0x18] sm:$0xff]
  %v1146 = vld [vmem:[%s1141 + $0x20] sm:$0xff]
  %v1147 = vld [vmem:[%s1141 + $0x28] sm:$0xff]
  %v1148 = vld [vmem:[%s1141 + $0x30] sm:$0xff]
  %v1149 = vld [vmem:[%s1141 + $0x38] sm:$0xff]
  %v1150 = vadd.f32 %v1142, %v922
  %v1151 = vadd.f32 %v1143, %v923
  %v1152 = vadd.f32 %v1144, %v924
  %v1153 = vadd.f32 %v1145, %v925
  %v1154 = vadd.f32 %v1146, %v926
  %v1155 = vadd.f32 %v1147, %v927
  %v1156 = vadd.f32 %v1148, %v928
  %v1157 = vadd.f32 %v1149, %v929
  %v1158 = vmul.f32 %v1102, %v1150
  %v1159 = vmul.f32 %v1104, %v1151
  %v1160 = vmul.f32 %v1106, %v1152
  %v1161 = vmul.f32 %v1108, %v1153
  %v1162 = vmul.f32 %v1110, %v1154
  %v1163 = vmul.f32 %v1112, %v1155
  %v1164 = vmul.f32 %v1114, %v1156
  %v1165 = vmul.f32 %v1116, %v1157
  %v1166 = vadd.f32 %v1133, %v1158
  %v1167 = vadd.f32 %v1134, %v1159
  %v1168 = vadd.f32 %v1135, %v1160
  %v1169 = vadd.f32 %v1136, %v1161
  %v1170 = vadd.f32 %v1137, %v1162
  %v1171 = vadd.f32 %v1138, %v1163
  %v1172 = vadd.f32 %v1139, %v1164
  %v1173 = vadd.f32 %v1140, %v1165
  %s1174 = scalar_lea.vmem %s0, 192
  %v1175 = vld [vmem:[%s1174] sm:$0xff]
  %v1176 = vld [vmem:[%s1174 + $0x8] sm:$0xff]
  %v1177 = vld [vmem:[%s1174 + $0x10] sm:$0xff]
  %v1178 = vld [vmem:[%s1174 + $0x18] sm:$0xff]
  %v1179 = vld [vmem:[%s1174 + $0x20] sm:$0xff]
  %v1180 = vld [vmem:[%s1174 + $0x28] sm:$0xff]
  %v1181 = vld [vmem:[%s1174 + $0x30] sm:$0xff]
  %v1182 = vld [vmem:[%s1174 + $0x38] sm:$0xff]
  %v1183 = vpack.c.bf16 %v1176, %v1175
  %v1184 = vpack.c.bf16 %v1178, %v1177
  %v1185 = vpack.c.bf16 %v1180, %v1179
  %v1186 = vpack.c.bf16 %v1182, %v1181
  %v1188 = vsel %vm101, %v1183, 0
  %v1191 = vsel %vm101, %v1184, 0
  %v1194 = vsel %vm101, %v1185, 0
  %v1197 = vsel %vm101, %v1186, 0
  %1199 = vmatpush.bf16.msra.mxu0 0
  %1200 = vmatpush.bf16.msra.mxu0 0
  %1201 = vmatpush.bf16.msra.mxu0 0
  %1202 = vmatpush.bf16.msra.mxu0 0
  %1203 = vmatpush.bf16.msra.mxu0 0
  %1204 = vmatpush.bf16.msra.mxu0 0
  %1205 = vmatpush.bf16.msra.mxu0 0
  %1206 = vmatpush.bf16.msra.mxu0 %v119
  %1207 = vmatmul.bf16.gmra.mxu0 %v1188
  %v1208 = vpop.f32.mrf.mxu0
  %v1209 = vadd.f32 %v99, %v1208
  %v1210 = vpop.f32.mrf.mxu0
  %v1211 = vadd.f32 %v99, %v1210
  %1212 = vmatmul.bf16.gmra.mxu0 %v1191
  %v1213 = vpop.f32.mrf.mxu0
  %v1214 = vadd.f32 %v99, %v1213
  %v1215 = vpop.f32.mrf.mxu0
  %v1216 = vadd.f32 %v99, %v1215
  %1217 = vmatmul.bf16.gmra.mxu0 %v1194
  %v1218 = vpop.f32.mrf.mxu0
  %v1219 = vadd.f32 %v99, %v1218
  %v1220 = vpop.f32.mrf.mxu0
  %v1221 = vadd.f32 %v99, %v1220
  %1222 = vmatmul.bf16.gmra.mxu0 %v1197
  %v1223 = vpop.f32.mrf.mxu0
  %v1224 = vadd.f32 %v99, %v1223
  %v1225 = vpop.f32.mrf.mxu0
  %v1226 = vadd.f32 %v99, %v1225
  %1227 = vdwg.mxu0
  %v1228 = vmax.f32 %v1209, 0.0
  %v1229 = vmax.f32 %v1211, 0.0
  %v1230 = vmax.f32 %v1214, 0.0
  %v1231 = vmax.f32 %v1216, 0.0
  %v1232 = vmax.f32 %v1219, 0.0
  %v1233 = vmax.f32 %v1221, 0.0
  %v1234 = vmax.f32 %v1224, 0.0
  %v1235 = vmax.f32 %v1226, 0.0
  %v1236 = vpack.c.bf16 %v1229, %v1228
  %v1237 = vpack.c.bf16 %v1231, %v1230
  %v1238 = vpack.c.bf16 %v1233, %v1232
  %v1239 = vpack.c.bf16 %v1235, %v1234
  %v1241 = vsel %vm165, %v1236, 0
  %v1244 = vsel %vm165, %v1237, 0
  %v1247 = vsel %vm165, %v1238, 0
  %v1250 = vsel %vm165, %v1239, 0
  %1252 = vmatpush.bf16.msra.mxu0 0
  %1253 = vmatpush.bf16.msra.mxu0 0
  %1254 = vmatpush.bf16.msra.mxu0 0
  %1255 = vmatpush.bf16.msra.mxu0 0
  %1256 = vmatpush.bf16.msra.mxu0 %v64
  %1257 = vmatpush.bf16.msra.mxu0 %v63
  %1258 = vmatpush.bf16.msra.mxu0 %v62
  %1259 = vmatpush.bf16.msra.mxu0 %v61
  %1260 = vmatmul.bf16.gmra.mxu0 %v1241
  %v1261 = vpop.f32.mrf.mxu0
  %v1262 = vadd.f32 %v163, %v1261
  %v1263 = vpop.f32.mrf.mxu0
  %v1264 = vadd.f32 %v163, %v1263
  %1265 = vmatmul.bf16.gmra.mxu0 %v1244
  %v1266 = vpop.f32.mrf.mxu0
  %v1267 = vadd.f32 %v163, %v1266
  %v1268 = vpop.f32.mrf.mxu0
  %v1269 = vadd.f32 %v163, %v1268
  %1270 = vmatmul.bf16.gmra.mxu0 %v1247
  %v1271 = vpop.f32.mrf.mxu0
  %v1272 = vadd.f32 %v163, %v1271
  %v1273 = vpop.f32.mrf.mxu0
  %v1274 = vadd.f32 %v163, %v1273
  %1275 = vmatmul.bf16.gmra.mxu0 %v1250
  %v1276 = vpop.f32.mrf.mxu0
  %v1277 = vadd.f32 %v163, %v1276
  %v1278 = vpop.f32.mrf.mxu0
  %v1279 = vadd.f32 %v163, %v1278
  %1280 = vdwg.mxu0
  %v1281 = vmax.f32 %v1262, 0.0
  %v1282 = vmax.f32 %v1264, 0.0
  %v1283 = vmax.f32 %v1267, 0.0
  %v1284 = vmax.f32 %v1269, 0.0
  %v1285 = vmax.f32 %v1272, 0.0
  %v1286 = vmax.f32 %v1274, 0.0
  %v1287 = vmax.f32 %v1277, 0.0
  %v1288 = vmax.f32 %v1279, 0.0
  %s1289 = scalar_lea.vmem %s2, 192
  %v1290 = vld [vmem:[%s1289] sm:$0xff]
  %v1291 = vld [vmem:[%s1289 + $0x8] sm:$0xff]
  %v1292 = vld [vmem:[%s1289 + $0x10] sm:$0xff]
  %v1293 = vld [vmem:[%s1289 + $0x18] sm:$0xff]
  %v1294 = vld [vmem:[%s1289 + $0x20] sm:$0xff]
  %v1295 = vld [vmem:[%s1289 + $0x28] sm:$0xff]
  %v1296 = vld [vmem:[%s1289 + $0x30] sm:$0xff]
  %v1297 = vld [vmem:[%s1289 + $0x38] sm:$0xff]
  %v1298 = vsub.f32 %v42, %v1290
  %v1299 = vsub.f32 %v43, %v1291
  %v1300 = vsub.f32 %v44, %v1292
  %v1301 = vsub.f32 %v45, %v1293
  %v1302 = vsub.f32 %v46, %v1294
  %v1303 = vsub.f32 %v47, %v1295
  %v1304 = vsub.f32 %v48, %v1296
  %v1305 = vsub.f32 %v49, %v1297
  %v1306 = vadd.f32 %v1298, %v1281
  %v1307 = vadd.f32 %v1299, %v1282
  %v1308 = vadd.f32 %v1300, %v1283
  %v1309 = vadd.f32 %v1301, %v1284
  %v1310 = vadd.f32 %v1302, %v1285
  %v1311 = vadd.f32 %v1303, %v1286
  %v1312 = vadd.f32 %v1304, %v1287
  %v1313 = vadd.f32 %v1305, %v1288
  %v1314 = vpack.c.bf16 %v1307, %v1306
  %v1315 = vpack.c.bf16 %v1309, %v1308
  %v1316 = vpack.c.bf16 %v1311, %v1310
  %v1317 = vpack.c.bf16 %v1313, %v1312
  %v1319 = vsel %vm246, %v1314, 0
  %v1322 = vsel %vm246, %v1315, 0
  %v1325 = vsel %vm246, %v1316, 0
  %v1328 = vsel %vm246, %v1317, 0
  %1330 = vmatpush.bf16.msra.mxu0 0
  %1331 = vmatpush.bf16.msra.mxu0 0
  %1332 = vmatpush.bf16.msra.mxu0 0
  %1333 = vmatpush.bf16.msra.mxu0 0
  %1334 = vmatpush.bf16.msra.mxu0 0
  %1335 = vmatpush.bf16.msra.mxu0 0
  %1336 = vmatpush.bf16.msra.mxu0 %v71
  %1337 = vmatpush.bf16.msra.mxu0 %v70
  %1338 = vmatmul.bf16.gmra.mxu0 %v1319
  %v1339 = vpop.f32.mrf.mxu0
  %v1340 = vadd.f32 %v244, %v1339
  %v1341 = vpop.f32.mrf.mxu0
  %v1342 = vadd.f32 %v244, %v1341
  %1343 = vmatmul.bf16.gmra.mxu0 %v1322
  %v1344 = vpop.f32.mrf.mxu0
  %v1345 = vadd.f32 %v244, %v1344
  %v1346 = vpop.f32.mrf.mxu0
  %v1347 = vadd.f32 %v244, %v1346
  %1348 = vmatmul.bf16.gmra.mxu0 %v1325
  %v1349 = vpop.f32.mrf.mxu0
  %v1350 = vadd.f32 %v244, %v1349
  %v1351 = vpop.f32.mrf.mxu0
  %v1352 = vadd.f32 %v244, %v1351
  %1353 = vmatmul.bf16.gmra.mxu0 %v1328
  %v1354 = vpop.f32.mrf.mxu0
  %v1355 = vadd.f32 %v244, %v1354
  %v1356 = vpop.f32.mrf.mxu0
  %v1357 = vadd.f32 %v244, %v1356
  %1358 = vdwg.mxu0
  %v1359 = vmax.f32 %v1340, 0.0
  %v1360 = vmax.f32 %v1342, 0.0
  %v1361 = vmax.f32 %v1345, 0.0
  %v1362 = vmax.f32 %v1347, 0.0
  %v1363 = vmax.f32 %v1350, 0.0
  %v1364 = vmax.f32 %v1352, 0.0
  %v1365 = vmax.f32 %v1355, 0.0
  %v1366 = vmax.f32 %v1357, 0.0
  %v1367 = vpack.c.bf16 %v1360, %v1359
  %v1368 = vpack.c.bf16 %v1362, %v1361
  %v1369 = vpack.c.bf16 %v1364, %v1363
  %v1370 = vpack.c.bf16 %v1366, %v1365
  %v1372 = vsel %vm165, %v1367, 0
  %v1375 = vsel %vm165, %v1368, 0
  %v1378 = vsel %vm165, %v1369, 0
  %v1381 = vsel %vm165, %v1370, 0
  %1383 = vmatpush.bf16.msra.mxu0 0
  %1384 = vmatpush.bf16.msra.mxu0 0
  %1385 = vmatpush.bf16.msra.mxu0 0
  %1386 = vmatpush.bf16.msra.mxu0 0
  %1387 = vmatpush.bf16.msra.mxu0 %v84
  %1388 = vmatpush.bf16.msra.mxu0 %v83
  %1389 = vmatpush.bf16.msra.mxu0 %v82
  %1390 = vmatpush.bf16.msra.mxu0 %v81
  %1391 = vmatmul.bf16.gmra.mxu0 %v1372
  %v1392 = vpop.f32.mrf.mxu0
  %v1393 = vadd.f32 %v301, %v1392
  %v1394 = vpop.f32.mrf.mxu0
  %v1395 = vadd.f32 %v301, %v1394
  %1396 = vmatmul.bf16.gmra.mxu0 %v1375
  %v1397 = vpop.f32.mrf.mxu0
  %v1398 = vadd.f32 %v301, %v1397
  %v1399 = vpop.f32.mrf.mxu0
  %v1400 = vadd.f32 %v301, %v1399
  %1401 = vmatmul.bf16.gmra.mxu0 %v1378
  %v1402 = vpop.f32.mrf.mxu0
  %v1403 = vadd.f32 %v301, %v1402
  %v1404 = vpop.f32.mrf.mxu0
  %v1405 = vadd.f32 %v301, %v1404
  %1406 = vmatmul.bf16.gmra.mxu0 %v1381
  %v1407 = vpop.f32.mrf.mxu0
  %v1408 = vadd.f32 %v301, %v1407
  %v1409 = vpop.f32.mrf.mxu0
  %v1410 = vadd.f32 %v301, %v1409
  %1411 = vdwg.mxu0
  %v1412 = vmax.f32 %v1393, 0.0
  %v1413 = vmax.f32 %v1395, 0.0
  %v1414 = vmax.f32 %v1398, 0.0
  %v1415 = vmax.f32 %v1400, 0.0
  %v1416 = vmax.f32 %v1403, 0.0
  %v1417 = vmax.f32 %v1405, 0.0
  %v1418 = vmax.f32 %v1408, 0.0
  %v1419 = vmax.f32 %v1410, 0.0
  %v1420 = vmax.f32 %v1061, %v1412
  %v1421 = vmax.f32 %v1062, %v1413
  %v1422 = vmax.f32 %v1063, %v1414
  %v1423 = vmax.f32 %v1064, %v1415
  %v1424 = vmax.f32 %v1065, %v1416
  %v1425 = vmax.f32 %v1066, %v1417
  %v1426 = vmax.f32 %v1067, %v1418
  %v1427 = vmax.f32 %v1068, %v1419
  %v1428 = vsub.f32 %v1061, %v1420
  %v1429 = vsub.f32 %v1062, %v1421
  %v1430 = vsub.f32 %v1063, %v1422
  %v1431 = vsub.f32 %v1064, %v1423
  %v1432 = vsub.f32 %v1065, %v1424
  %v1433 = vsub.f32 %v1066, %v1425
  %v1434 = vsub.f32 %v1067, %v1426
  %v1435 = vsub.f32 %v1068, %v1427
  %v1436 = vmul.f32 %v1428, 1.442695
  %v1437 = vpow.pop %v1436
  %v1438 = vmul.f32 %v1429, 1.442695
  %v1439 = vpow.pop %v1438
  %v1440 = vmul.f32 %v1430, 1.442695
  %v1441 = vpow.pop %v1440
  %v1442 = vmul.f32 %v1431, 1.442695
  %v1443 = vpow.pop %v1442
  %v1444 = vmul.f32 %v1432, 1.442695
  %v1445 = vpow.pop %v1444
  %v1446 = vmul.f32 %v1433, 1.442695
  %v1447 = vpow.pop %v1446
  %v1448 = vmul.f32 %v1434, 1.442695
  %v1449 = vpow.pop %v1448
  %v1450 = vmul.f32 %v1435, 1.442695
  %v1451 = vpow.pop %v1450
  %v1452 = vsub.f32 %v1412, %v1420
  %v1453 = vsub.f32 %v1413, %v1421
  %v1454 = vsub.f32 %v1414, %v1422
  %v1455 = vsub.f32 %v1415, %v1423
  %v1456 = vsub.f32 %v1416, %v1424
  %v1457 = vsub.f32 %v1417, %v1425
  %v1458 = vsub.f32 %v1418, %v1426
  %v1459 = vsub.f32 %v1419, %v1427
  %v1460 = vmul.f32 %v1452, 1.442695
  %v1461 = vpow.pop %v1460
  %v1462 = vmul.f32 %v1453, 1.442695
  %v1463 = vpow.pop %v1462
  %v1464 = vmul.f32 %v1454, 1.442695
  %v1465 = vpow.pop %v1464
  %v1466 = vmul.f32 %v1455, 1.442695
  %v1467 = vpow.pop %v1466
  %v1468 = vmul.f32 %v1456, 1.442695
  %v1469 = vpow.pop %v1468
  %v1470 = vmul.f32 %v1457, 1.442695
  %v1471 = vpow.pop %v1470
  %v1472 = vmul.f32 %v1458, 1.442695
  %v1473 = vpow.pop %v1472
  %v1474 = vmul.f32 %v1459, 1.442695
  %v1475 = vpow.pop %v1474
  %v1476 = vmul.f32 %v1125, %v1437
  %v1477 = vmul.f32 %v1126, %v1439
  %v1478 = vmul.f32 %v1127, %v1441
  %v1479 = vmul.f32 %v1128, %v1443
  %v1480 = vmul.f32 %v1129, %v1445
  %v1481 = vmul.f32 %v1130, %v1447
  %v1482 = vmul.f32 %v1131, %v1449
  %v1483 = vmul.f32 %v1132, %v1451
  %v1484 = vadd.f32 %v1476, %v1461
  %v1485 = vadd.f32 %v1477, %v1463
  %v1486 = vadd.f32 %v1478, %v1465
  %v1487 = vadd.f32 %v1479, %v1467
  %v1488 = vadd.f32 %v1480, %v1469
  %v1489 = vadd.f32 %v1481, %v1471
  %v1490 = vadd.f32 %v1482, %v1473
  %v1491 = vadd.f32 %v1483, %v1475
  %v1492 = vmul.f32 %v1166, %v1437
  %v1493 = vmul.f32 %v1167, %v1439
  %v1494 = vmul.f32 %v1168, %v1441
  %v1495 = vmul.f32 %v1169, %v1443
  %v1496 = vmul.f32 %v1170, %v1445
  %v1497 = vmul.f32 %v1171, %v1447
  %v1498 = vmul.f32 %v1172, %v1449
  %v1499 = vmul.f32 %v1173, %v1451
  %s1500 = scalar_lea.vmem %s1, 192
  %v1501 = vld [vmem:[%s1500] sm:$0xff]
  %v1502 = vld [vmem:[%s1500 + $0x8] sm:$0xff]
  %v1503 = vld [vmem:[%s1500 + $0x10] sm:$0xff]
  %v1504 = vld [vmem:[%s1500 + $0x18] sm:$0xff]
  %v1505 = vld [vmem:[%s1500 + $0x20] sm:$0xff]
  %v1506 = vld [vmem:[%s1500 + $0x28] sm:$0xff]
  %v1507 = vld [vmem:[%s1500 + $0x30] sm:$0xff]
  %v1508 = vld [vmem:[%s1500 + $0x38] sm:$0xff]
  %v1509 = vadd.f32 %v1501, %v1281
  %v1510 = vadd.f32 %v1502, %v1282
  %v1511 = vadd.f32 %v1503, %v1283
  %v1512 = vadd.f32 %v1504, %v1284
  %v1513 = vadd.f32 %v1505, %v1285
  %v1514 = vadd.f32 %v1506, %v1286
  %v1515 = vadd.f32 %v1507, %v1287
  %v1516 = vadd.f32 %v1508, %v1288
  %v1517 = vmul.f32 %v1461, %v1509
  %v1518 = vmul.f32 %v1463, %v1510
  %v1519 = vmul.f32 %v1465, %v1511
  %v1520 = vmul.f32 %v1467, %v1512
  %v1521 = vmul.f32 %v1469, %v1513
  %v1522 = vmul.f32 %v1471, %v1514
  %v1523 = vmul.f32 %v1473, %v1515
  %v1524 = vmul.f32 %v1475, %v1516
  %v1525 = vadd.f32 %v1492, %v1517
  %v1526 = vadd.f32 %v1493, %v1518
  %v1527 = vadd.f32 %v1494, %v1519
  %v1528 = vadd.f32 %v1495, %v1520
  %v1529 = vadd.f32 %v1496, %v1521
  %v1530 = vadd.f32 %v1497, %v1522
  %v1531 = vadd.f32 %v1498, %v1523
  %v1532 = vadd.f32 %v1499, %v1524
  %s1533 = scalar_lea.vmem %s0, 256
  %v1534 = vld [vmem:[%s1533] sm:$0xff]
  %v1535 = vld [vmem:[%s1533 + $0x8] sm:$0xff]
  %v1536 = vld [vmem:[%s1533 + $0x10] sm:$0xff]
  %v1537 = vld [vmem:[%s1533 + $0x18] sm:$0xff]
  %v1538 = vld [vmem:[%s1533 + $0x20] sm:$0xff]
  %v1539 = vld [vmem:[%s1533 + $0x28] sm:$0xff]
  %v1540 = vld [vmem:[%s1533 + $0x30] sm:$0xff]
  %v1541 = vld [vmem:[%s1533 + $0x38] sm:$0xff]
  %v1542 = vpack.c.bf16 %v1535, %v1534
  %v1543 = vpack.c.bf16 %v1537, %v1536
  %v1544 = vpack.c.bf16 %v1539, %v1538
  %v1545 = vpack.c.bf16 %v1541, %v1540
  %v1547 = vsel %vm101, %v1542, 0
  %v1550 = vsel %vm101, %v1543, 0
  %v1553 = vsel %vm101, %v1544, 0
  %v1556 = vsel %vm101, %v1545, 0
  %1558 = vmatpush.bf16.msra.mxu0 0
  %1559 = vmatpush.bf16.msra.mxu0 0
  %1560 = vmatpush.bf16.msra.mxu0 0
  %1561 = vmatpush.bf16.msra.mxu0 0
  %1562 = vmatpush.bf16.msra.mxu0 0
  %1563 = vmatpush.bf16.msra.mxu0 0
  %1564 = vmatpush.bf16.msra.mxu0 0
  %1565 = vmatpush.bf16.msra.mxu0 %v119
  %1566 = vmatmul.bf16.gmra.mxu0 %v1547
  %v1567 = vpop.f32.mrf.mxu0
  %v1568 = vadd.f32 %v99, %v1567
  %v1569 = vpop.f32.mrf.mxu0
  %v1570 = vadd.f32 %v99, %v1569
  %1571 = vmatmul.bf16.gmra.mxu0 %v1550
  %v1572 = vpop.f32.mrf.mxu0
  %v1573 = vadd.f32 %v99, %v1572
  %v1574 = vpop.f32.mrf.mxu0
  %v1575 = vadd.f32 %v99, %v1574
  %1576 = vmatmul.bf16.gmra.mxu0 %v1553
  %v1577 = vpop.f32.mrf.mxu0
  %v1578 = vadd.f32 %v99, %v1577
  %v1579 = vpop.f32.mrf.mxu0
  %v1580 = vadd.f32 %v99, %v1579
  %1581 = vmatmul.bf16.gmra.mxu0 %v1556
  %v1582 = vpop.f32.mrf.mxu0
  %v1583 = vadd.f32 %v99, %v1582
  %v1584 = vpop.f32.mrf.mxu0
  %v1585 = vadd.f32 %v99, %v1584
  %1586 = vdwg.mxu0
  %v1587 = vmax.f32 %v1568, 0.0
  %v1588 = vmax.f32 %v1570, 0.0
  %v1589 = vmax.f32 %v1573, 0.0
  %v1590 = vmax.f32 %v1575, 0.0
  %v1591 = vmax.f32 %v1578, 0.0
  %v1592 = vmax.f32 %v1580, 0.0
  %v1593 = vmax.f32 %v1583, 0.0
  %v1594 = vmax.f32 %v1585, 0.0
  %v1595 = vpack.c.bf16 %v1588, %v1587
  %v1596 = vpack.c.bf16 %v1590, %v1589
  %v1597 = vpack.c.bf16 %v1592, %v1591
  %v1598 = vpack.c.bf16 %v1594, %v1593
  %v1600 = vsel %vm165, %v1595, 0
  %v1603 = vsel %vm165, %v1596, 0
  %v1606 = vsel %vm165, %v1597, 0
  %v1609 = vsel %vm165, %v1598, 0
  %1611 = vmatpush.bf16.msra.mxu0 0
  %1612 = vmatpush.bf16.msra.mxu0 0
  %1613 = vmatpush.bf16.msra.mxu0 0
  %1614 = vmatpush.bf16.msra.mxu0 0
  %1615 = vmatpush.bf16.msra.mxu0 %v64
  %1616 = vmatpush.bf16.msra.mxu0 %v63
  %1617 = vmatpush.bf16.msra.mxu0 %v62
  %1618 = vmatpush.bf16.msra.mxu0 %v61
  %1619 = vmatmul.bf16.gmra.mxu0 %v1600
  %v1620 = vpop.f32.mrf.mxu0
  %v1621 = vadd.f32 %v163, %v1620
  %v1622 = vpop.f32.mrf.mxu0
  %v1623 = vadd.f32 %v163, %v1622
  %1624 = vmatmul.bf16.gmra.mxu0 %v1603
  %v1625 = vpop.f32.mrf.mxu0
  %v1626 = vadd.f32 %v163, %v1625
  %v1627 = vpop.f32.mrf.mxu0
  %v1628 = vadd.f32 %v163, %v1627
  %1629 = vmatmul.bf16.gmra.mxu0 %v1606
  %v1630 = vpop.f32.mrf.mxu0
  %v1631 = vadd.f32 %v163, %v1630
  %v1632 = vpop.f32.mrf.mxu0
  %v1633 = vadd.f32 %v163, %v1632
  %1634 = vmatmul.bf16.gmra.mxu0 %v1609
  %v1635 = vpop.f32.mrf.mxu0
  %v1636 = vadd.f32 %v163, %v1635
  %v1637 = vpop.f32.mrf.mxu0
  %v1638 = vadd.f32 %v163, %v1637
  %1639 = vdwg.mxu0
  %v1640 = vmax.f32 %v1621, 0.0
  %v1641 = vmax.f32 %v1623, 0.0
  %v1642 = vmax.f32 %v1626, 0.0
  %v1643 = vmax.f32 %v1628, 0.0
  %v1644 = vmax.f32 %v1631, 0.0
  %v1645 = vmax.f32 %v1633, 0.0
  %v1646 = vmax.f32 %v1636, 0.0
  %v1647 = vmax.f32 %v1638, 0.0
  %s1648 = scalar_lea.vmem %s2, 256
  %v1649 = vld [vmem:[%s1648] sm:$0xff]
  %v1650 = vld [vmem:[%s1648 + $0x8] sm:$0xff]
  %v1651 = vld [vmem:[%s1648 + $0x10] sm:$0xff]
  %v1652 = vld [vmem:[%s1648 + $0x18] sm:$0xff]
  %v1653 = vld [vmem:[%s1648 + $0x20] sm:$0xff]
  %v1654 = vld [vmem:[%s1648 + $0x28] sm:$0xff]
  %v1655 = vld [vmem:[%s1648 + $0x30] sm:$0xff]
  %v1656 = vld [vmem:[%s1648 + $0x38] sm:$0xff]
  %v1657 = vsub.f32 %v42, %v1649
  %v1658 = vsub.f32 %v43, %v1650
  %v1659 = vsub.f32 %v44, %v1651
  %v1660 = vsub.f32 %v45, %v1652
  %v1661 = vsub.f32 %v46, %v1653
  %v1662 = vsub.f32 %v47, %v1654
  %v1663 = vsub.f32 %v48, %v1655
  %v1664 = vsub.f32 %v49, %v1656
  %v1665 = vadd.f32 %v1657, %v1640
  %v1666 = vadd.f32 %v1658, %v1641
  %v1667 = vadd.f32 %v1659, %v1642
  %v1668 = vadd.f32 %v1660, %v1643
  %v1669 = vadd.f32 %v1661, %v1644
  %v1670 = vadd.f32 %v1662, %v1645
  %v1671 = vadd.f32 %v1663, %v1646
  %v1672 = vadd.f32 %v1664, %v1647
  %v1673 = vpack.c.bf16 %v1666, %v1665
  %v1674 = vpack.c.bf16 %v1668, %v1667
  %v1675 = vpack.c.bf16 %v1670, %v1669
  %v1676 = vpack.c.bf16 %v1672, %v1671
  %v1678 = vsel %vm246, %v1673, 0
  %v1681 = vsel %vm246, %v1674, 0
  %v1684 = vsel %vm246, %v1675, 0
  %v1687 = vsel %vm246, %v1676, 0
  %1689 = vmatpush.bf16.msra.mxu0 0
  %1690 = vmatpush.bf16.msra.mxu0 0
  %1691 = vmatpush.bf16.msra.mxu0 0
  %1692 = vmatpush.bf16.msra.mxu0 0
  %1693 = vmatpush.bf16.msra.mxu0 0
  %1694 = vmatpush.bf16.msra.mxu0 0
  %1695 = vmatpush.bf16.msra.mxu0 %v71
  %1696 = vmatpush.bf16.msra.mxu0 %v70
  %1697 = vmatmul.bf16.gmra.mxu0 %v1678
  %v1698 = vpop.f32.mrf.mxu0
  %v1699 = vadd.f32 %v244, %v1698
  %v1700 = vpop.f32.mrf.mxu0
  %v1701 = vadd.f32 %v244, %v1700
  %1702 = vmatmul.bf16.gmra.mxu0 %v1681
  %v1703 = vpop.f32.mrf.mxu0
  %v1704 = vadd.f32 %v244, %v1703
  %v1705 = vpop.f32.mrf.mxu0
  %v1706 = vadd.f32 %v244, %v1705
  %1707 = vmatmul.bf16.gmra.mxu0 %v1684
  %v1708 = vpop.f32.mrf.mxu0
  %v1709 = vadd.f32 %v244, %v1708
  %v1710 = vpop.f32.mrf.mxu0
  %v1711 = vadd.f32 %v244, %v1710
  %1712 = vmatmul.bf16.gmra.mxu0 %v1687
  %v1713 = vpop.f32.mrf.mxu0
  %v1714 = vadd.f32 %v244, %v1713
  %v1715 = vpop.f32.mrf.mxu0
  %v1716 = vadd.f32 %v244, %v1715
  %1717 = vdwg.mxu0
  %v1718 = vmax.f32 %v1699, 0.0
  %v1719 = vmax.f32 %v1701, 0.0
  %v1720 = vmax.f32 %v1704, 0.0
  %v1721 = vmax.f32 %v1706, 0.0
  %v1722 = vmax.f32 %v1709, 0.0
  %v1723 = vmax.f32 %v1711, 0.0
  %v1724 = vmax.f32 %v1714, 0.0
  %v1725 = vmax.f32 %v1716, 0.0
  %v1726 = vpack.c.bf16 %v1719, %v1718
  %v1727 = vpack.c.bf16 %v1721, %v1720
  %v1728 = vpack.c.bf16 %v1723, %v1722
  %v1729 = vpack.c.bf16 %v1725, %v1724
  %v1731 = vsel %vm165, %v1726, 0
  %v1734 = vsel %vm165, %v1727, 0
  %v1737 = vsel %vm165, %v1728, 0
  %v1740 = vsel %vm165, %v1729, 0
  %1742 = vmatpush.bf16.msra.mxu0 0
  %1743 = vmatpush.bf16.msra.mxu0 0
  %1744 = vmatpush.bf16.msra.mxu0 0
  %1745 = vmatpush.bf16.msra.mxu0 0
  %1746 = vmatpush.bf16.msra.mxu0 %v84
  %1747 = vmatpush.bf16.msra.mxu0 %v83
  %1748 = vmatpush.bf16.msra.mxu0 %v82
  %1749 = vmatpush.bf16.msra.mxu0 %v81
  %1750 = vmatmul.bf16.gmra.mxu0 %v1731
  %v1751 = vpop.f32.mrf.mxu0
  %v1752 = vadd.f32 %v301, %v1751
  %v1753 = vpop.f32.mrf.mxu0
  %v1754 = vadd.f32 %v301, %v1753
  %1755 = vmatmul.bf16.gmra.mxu0 %v1734
  %v1756 = vpop.f32.mrf.mxu0
  %v1757 = vadd.f32 %v301, %v1756
  %v1758 = vpop.f32.mrf.mxu0
  %v1759 = vadd.f32 %v301, %v1758
  %1760 = vmatmul.bf16.gmra.mxu0 %v1737
  %v1761 = vpop.f32.mrf.mxu0
  %v1762 = vadd.f32 %v301, %v1761
  %v1763 = vpop.f32.mrf.mxu0
  %v1764 = vadd.f32 %v301, %v1763
  %1765 = vmatmul.bf16.gmra.mxu0 %v1740
  %v1766 = vpop.f32.mrf.mxu0
  %v1767 = vadd.f32 %v301, %v1766
  %v1768 = vpop.f32.mrf.mxu0
  %v1769 = vadd.f32 %v301, %v1768
  %1770 = vdwg.mxu0
  %v1771 = vmax.f32 %v1752, 0.0
  %v1772 = vmax.f32 %v1754, 0.0
  %v1773 = vmax.f32 %v1757, 0.0
  %v1774 = vmax.f32 %v1759, 0.0
  %v1775 = vmax.f32 %v1762, 0.0
  %v1776 = vmax.f32 %v1764, 0.0
  %v1777 = vmax.f32 %v1767, 0.0
  %v1778 = vmax.f32 %v1769, 0.0
  %v1779 = vmax.f32 %v1420, %v1771
  %v1780 = vmax.f32 %v1421, %v1772
  %v1781 = vmax.f32 %v1422, %v1773
  %v1782 = vmax.f32 %v1423, %v1774
  %v1783 = vmax.f32 %v1424, %v1775
  %v1784 = vmax.f32 %v1425, %v1776
  %v1785 = vmax.f32 %v1426, %v1777
  %v1786 = vmax.f32 %v1427, %v1778
  %v1787 = vsub.f32 %v1420, %v1779
  %v1788 = vsub.f32 %v1421, %v1780
  %v1789 = vsub.f32 %v1422, %v1781
  %v1790 = vsub.f32 %v1423, %v1782
  %v1791 = vsub.f32 %v1424, %v1783
  %v1792 = vsub.f32 %v1425, %v1784
  %v1793 = vsub.f32 %v1426, %v1785
  %v1794 = vsub.f32 %v1427, %v1786
  %v1795 = vmul.f32 %v1787, 1.442695
  %v1796 = vpow.pop %v1795
  %v1797 = vmul.f32 %v1788, 1.442695
  %v1798 = vpow.pop %v1797
  %v1799 = vmul.f32 %v1789, 1.442695
  %v1800 = vpow.pop %v1799
  %v1801 = vmul.f32 %v1790, 1.442695
  %v1802 = vpow.pop %v1801
  %v1803 = vmul.f32 %v1791, 1.442695
  %v1804 = vpow.pop %v1803
  %v1805 = vmul.f32 %v1792, 1.442695
  %v1806 = vpow.pop %v1805
  %v1807 = vmul.f32 %v1793, 1.442695
  %v1808 = vpow.pop %v1807
  %v1809 = vmul.f32 %v1794, 1.442695
  %v1810 = vpow.pop %v1809
  %v1811 = vsub.f32 %v1771, %v1779
  %v1812 = vsub.f32 %v1772, %v1780
  %v1813 = vsub.f32 %v1773, %v1781
  %v1814 = vsub.f32 %v1774, %v1782
  %v1815 = vsub.f32 %v1775, %v1783
  %v1816 = vsub.f32 %v1776, %v1784
  %v1817 = vsub.f32 %v1777, %v1785
  %v1818 = vsub.f32 %v1778, %v1786
  %v1819 = vmul.f32 %v1811, 1.442695
  %v1820 = vpow.pop %v1819
  %v1821 = vmul.f32 %v1812, 1.442695
  %v1822 = vpow.pop %v1821
  %v1823 = vmul.f32 %v1813, 1.442695
  %v1824 = vpow.pop %v1823
  %v1825 = vmul.f32 %v1814, 1.442695
  %v1826 = vpow.pop %v1825
  %v1827 = vmul.f32 %v1815, 1.442695
  %v1828 = vpow.pop %v1827
  %v1829 = vmul.f32 %v1816, 1.442695
  %v1830 = vpow.pop %v1829
  %v1831 = vmul.f32 %v1817, 1.442695
  %v1832 = vpow.pop %v1831
  %v1833 = vmul.f32 %v1818, 1.442695
  %v1834 = vpow.pop %v1833
  %v1835 = vmul.f32 %v1484, %v1796
  %v1836 = vmul.f32 %v1485, %v1798
  %v1837 = vmul.f32 %v1486, %v1800
  %v1838 = vmul.f32 %v1487, %v1802
  %v1839 = vmul.f32 %v1488, %v1804
  %v1840 = vmul.f32 %v1489, %v1806
  %v1841 = vmul.f32 %v1490, %v1808
  %v1842 = vmul.f32 %v1491, %v1810
  %v1843 = vadd.f32 %v1835, %v1820
  %v1844 = vadd.f32 %v1836, %v1822
  %v1845 = vadd.f32 %v1837, %v1824
  %v1846 = vadd.f32 %v1838, %v1826
  %v1847 = vadd.f32 %v1839, %v1828
  %v1848 = vadd.f32 %v1840, %v1830
  %v1849 = vadd.f32 %v1841, %v1832
  %v1850 = vadd.f32 %v1842, %v1834
  %v1851 = vmul.f32 %v1525, %v1796
  %v1852 = vmul.f32 %v1526, %v1798
  %v1853 = vmul.f32 %v1527, %v1800
  %v1854 = vmul.f32 %v1528, %v1802
  %v1855 = vmul.f32 %v1529, %v1804
  %v1856 = vmul.f32 %v1530, %v1806
  %v1857 = vmul.f32 %v1531, %v1808
  %v1858 = vmul.f32 %v1532, %v1810
  %s1859 = scalar_lea.vmem %s1, 256
  %v1860 = vld [vmem:[%s1859] sm:$0xff]
  %v1861 = vld [vmem:[%s1859 + $0x8] sm:$0xff]
  %v1862 = vld [vmem:[%s1859 + $0x10] sm:$0xff]
  %v1863 = vld [vmem:[%s1859 + $0x18] sm:$0xff]
  %v1864 = vld [vmem:[%s1859 + $0x20] sm:$0xff]
  %v1865 = vld [vmem:[%s1859 + $0x28] sm:$0xff]
  %v1866 = vld [vmem:[%s1859 + $0x30] sm:$0xff]
  %v1867 = vld [vmem:[%s1859 + $0x38] sm:$0xff]
  %v1868 = vadd.f32 %v1860, %v1640
  %v1869 = vadd.f32 %v1861, %v1641
  %v1870 = vadd.f32 %v1862, %v1642
  %v1871 = vadd.f32 %v1863, %v1643
  %v1872 = vadd.f32 %v1864, %v1644
  %v1873 = vadd.f32 %v1865, %v1645
  %v1874 = vadd.f32 %v1866, %v1646
  %v1875 = vadd.f32 %v1867, %v1647
  %v1876 = vmul.f32 %v1820, %v1868
  %v1877 = vmul.f32 %v1822, %v1869
  %v1878 = vmul.f32 %v1824, %v1870
  %v1879 = vmul.f32 %v1826, %v1871
  %v1880 = vmul.f32 %v1828, %v1872
  %v1881 = vmul.f32 %v1830, %v1873
  %v1882 = vmul.f32 %v1832, %v1874
  %v1883 = vmul.f32 %v1834, %v1875
  %v1884 = vadd.f32 %v1851, %v1876
  %v1885 = vadd.f32 %v1852, %v1877
  %v1886 = vadd.f32 %v1853, %v1878
  %v1887 = vadd.f32 %v1854, %v1879
  %v1888 = vadd.f32 %v1855, %v1880
  %v1889 = vadd.f32 %v1856, %v1881
  %v1890 = vadd.f32 %v1857, %v1882
  %v1891 = vadd.f32 %v1858, %v1883
  %v1892 = vrcp.pop %v1843
  %v1893 = vrcp.pop %v1844
  %v1894 = vrcp.pop %v1845
  %v1895 = vrcp.pop %v1846
  %v1896 = vrcp.pop %v1847
  %v1897 = vrcp.pop %v1848
  %v1898 = vrcp.pop %v1849
  %v1899 = vrcp.pop %v1850
  %v1900 = vmul.f32 %v1884, %v1892
  %v1901 = vmul.f32 %v1885, %v1893
  %v1902 = vmul.f32 %v1886, %v1894
  %v1903 = vmul.f32 %v1887, %v1895
  %v1904 = vmul.f32 %v1888, %v1896
  %v1905 = vmul.f32 %v1889, %v1897
  %v1906 = vmul.f32 %v1890, %v1898
  %v1907 = vmul.f32 %v1891, %v1899
  %1908 = vst.msk [vmem:[%s12] sm:$0xff] %vm246, %v1900
  %1909 = vst.msk [vmem:[%s12 + $0x8] sm:$0xff] %vm246, %v1901
  %1910 = vst.msk [vmem:[%s12 + $0x10] sm:$0xff] %vm246, %v1902
  %1911 = vst.msk [vmem:[%s12 + $0x18] sm:$0xff] %vm246, %v1903
  %1912 = vst.msk [vmem:[%s12 + $0x20] sm:$0xff] %vm246, %v1904
  %1913 = vst.msk [vmem:[%s12 + $0x28] sm:$0xff] %vm246, %v1905
  %1914 = vst.msk [vmem:[%s12 + $0x30] sm:$0xff] %vm246, %v1906
  %1915 = vst.msk [vmem:[%s12 + $0x38] sm:$0xff] %vm246, %v1907
  // Predicated region
  $region50: #{point_transformer_forward.28} parent=0 // pred_check
    _
  $region51: #{point_transformer_forward.28} parent=0 // pred_check_branch
    %1917 = sbr.rel (0) target = $region53
  $region52: #{point_transformer_forward.28} parent=0 // pred_region
    _
  $region53: #{point_transformer_forward.28} parent=0 // pred_fallthru
    _
  // Predicated region
  $region54: #{point_transformer_forward.28} parent=0 // pred_check
    _
  $region55: #{point_transformer_forward.28} parent=0 // pred_check_branch
    %1919 = sbr.rel (0) target = $region57
  $region56: #{point_transformer_forward.28} parent=0 // pred_region
    _
  $region57: #{point_transformer_forward.28} parent=0 // pred_fallthru
    _

// kernel: point_transformer_forward.31
$region0: #{point_transformer_forward.31}
  #allocation0 [shape = 'u32[]', space=smem, size = 0x4, offset = 0x4, fixed_abs, tag = 'smem constant byte address 0x4 - core index']
  #allocation1 [shape = 'u32[72,128]{1,0:T(1,128)}', space=vmem, size = 0x9000, scoped, tag = 'internal scratch']
  %s0 = inlined_call_operand.vmem [shape: f32[4,16,64], index: 0, kind: input, shape index: {}]
  %s1 = inlined_call_operand.vmem [shape: f32[16,64], index: 1, kind: output, shape index: {}]
  %s2 = sld [smem:[#allocation0]]
  $region14: #{point_transformer_forward.31} parent=0
    _
  %s4 = ssub.s32 1, %s2
  %s5 = scalar_select 0, %s4, %s2
  // Predicated region
  $region2: #{point_transformer_forward.31} parent=0 // pred_check
    _
  $region3: #{point_transformer_forward.31} parent=0 // pred_check_branch
    %7 = sbr.rel (0) target = $region5
  $region4: #{point_transformer_forward.31} parent=0 // pred_region
    _
  $region5: #{point_transformer_forward.31} parent=0 // pred_fallthru
    _
  %v8 = vld [vmem:[%s0] sm:$0xff]
  %v9 = vld [vmem:[%s0 + $0x8] sm:$0xff]
  %s10 = scalar_lea.vmem %s0, 16
  %v11 = vld [vmem:[%s10] sm:$0xff]
  %v12 = vld [vmem:[%s10 + $0x8] sm:$0xff]
  %v13 = vmax.f32 %v8, %v11
  %v14 = vmax.f32 %v9, %v12
  %s15 = scalar_lea.vmem %s0, 32
  %v16 = vld [vmem:[%s15] sm:$0xff]
  %v17 = vld [vmem:[%s15 + $0x8] sm:$0xff]
  %v18 = vmax.f32 %v13, %v16
  %v19 = vmax.f32 %v14, %v17
  %s20 = scalar_lea.vmem %s0, 48
  %v21 = vld [vmem:[%s20] sm:$0xff]
  %v22 = vld [vmem:[%s20 + $0x8] sm:$0xff]
  %v23 = vmax.f32 %v18, %v21
  %v24 = vmax.f32 %v19, %v22
  %vm25 = vcmask 523264
  %26 = vst.msk [vmem:[%s1] sm:$0xff] %vm25, %v23
  %27 = vst.msk [vmem:[%s1 + $0x8] sm:$0xff] %vm25, %v24
  // Predicated region
  $region6: #{point_transformer_forward.31} parent=0 // pred_check
    _
  $region7: #{point_transformer_forward.31} parent=0 // pred_check_branch
    %29 = sbr.rel (0) target = $region9
  $region8: #{point_transformer_forward.31} parent=0 // pred_region
    _
  $region9: #{point_transformer_forward.31} parent=0 // pred_fallthru
    _
  // Predicated region
  $region10: #{point_transformer_forward.31} parent=0 // pred_check
    _
  $region11: #{point_transformer_forward.31} parent=0 // pred_check_branch
    %31 = sbr.rel (0) target = $region13
  $region12: #{point_transformer_forward.31} parent=0 // pred_region
    _
  $region13: #{point_transformer_forward.31} parent=0 // pred_fallthru
    _

// kernel: point_transformer_forward.32
$region0: #{point_transformer_forward.32}
  #allocation0 [shape = 'u32[]', space=smem, size = 0x4, offset = 0x4, fixed_abs, tag = 'smem constant byte address 0x4 - core index']
  #allocation1 [shape = 'u32[72,128]{1,0:T(1,128)}', space=vmem, size = 0x9000, scoped, tag = 'internal scratch']
  %s0 = inlined_call_operand.vmem [shape: f32[16,64], index: 0, kind: input, shape index: {}]
  %s1 = inlined_call_operand.vmem [shape: f32[64,64], index: 1, kind: input, shape index: {}]
  %s2 = inlined_call_operand.vmem [shape: f32[1,64], index: 2, kind: input, shape index: {}]
  %s3 = inlined_call_operand.vmem [shape: f32[16,64], index: 3, kind: output, shape index: {}]
  %s4 = sld [smem:[#allocation0]]
  $region22: #{point_transformer_forward.32} parent=0
    _
  %s6 = ssub.s32 1, %s4
  %s7 = scalar_select 0, %s6, %s4
  // Predicated region
  $region2: #{point_transformer_forward.32} parent=0 // pred_check
    _
  $region3: #{point_transformer_forward.32} parent=0 // pred_check_branch
    %9 = sbr.rel (0) target = $region5
  $region4: #{point_transformer_forward.32} parent=0 // pred_region
    _
  $region5: #{point_transformer_forward.32} parent=0 // pred_fallthru
    _
  // Predicated region
  $region6: #{point_transformer_forward.32} parent=0 // pred_check
    _
  $region7: #{point_transformer_forward.32} parent=0 // pred_check_branch
    %11 = sbr.rel (0) target = $region9
  $region8: #{point_transformer_forward.32} parent=0 // pred_region
    _
  $region9: #{point_transformer_forward.32} parent=0 // pred_fallthru
    _
  // Predicated region
  $region10: #{point_transformer_forward.32} parent=0 // pred_check
    _
  $region11: #{point_transformer_forward.32} parent=0 // pred_check_branch
    %13 = sbr.rel (0) target = $region13
  $region12: #{point_transformer_forward.32} parent=0 // pred_region
    _
  $region13: #{point_transformer_forward.32} parent=0 // pred_fallthru
    _
  %v15 = vld [vmem:[%s0] sm:$0xff]
  %v16 = vld [vmem:[%s0 + $0x8] sm:$0xff]
  %v17 = vpack.c.bf16 %v16, %v15
  %v18 = vld [vmem:[%s1] sm:$0xff]
  %v19 = vld [vmem:[%s1 + $0x8] sm:$0xff]
  %v20 = vld [vmem:[%s1 + $0x10] sm:$0xff]
  %v21 = vld [vmem:[%s1 + $0x18] sm:$0xff]
  %v22 = vld [vmem:[%s1 + $0x20] sm:$0xff]
  %v23 = vld [vmem:[%s1 + $0x28] sm:$0xff]
  %v24 = vld [vmem:[%s1 + $0x30] sm:$0xff]
  %v25 = vld [vmem:[%s1 + $0x38] sm:$0xff]
  %v26 = vpack.c.bf16 %v19, %v18
  %v27 = vpack.c.bf16 %v21, %v20
  %v28 = vpack.c.bf16 %v23, %v22
  %v29 = vpack.c.bf16 %v25, %v24
  %v30 = vld [vmem:[%s2] sm:$0x1]
  %v32 = vperm.slane %v30, 0
  %vm34 = vcmask 523264
  %v36 = vsel %vm34, %v17, 0
  %38 = vmatpush.bf16.msra.mxu0 0
  %39 = vmatpush.bf16.msra.mxu0 0
  %40 = vmatpush.bf16.msra.mxu0 0
  %41 = vmatpush.bf16.msra.mxu0 0
  %42 = vmatpush.bf16.msra.mxu0 %v29
  %43 = vmatpush.bf16.msra.mxu0 %v28
  %44 = vmatpush.bf16.msra.mxu0 %v27
  %45 = vmatpush.bf16.msra.mxu0 %v26
  %46 = vmatmul.bf16.gmra.mxu0 %v36
  %v47 = vpop.f32.mrf.mxu0
  %v48 = vadd.f32 %v32, %v47
  %v49 = vpop.f32.mrf.mxu0
  %v50 = vadd.f32 %v32, %v49
  %51 = vdwg.mxu0
  %v52 = vmax.f32 %v48, 0.0
  %v53 = vmax.f32 %v50, 0.0
  %54 = vst.msk [vmem:[%s3] sm:$0xff] %vm34, %v52
  %55 = vst.msk [vmem:[%s3 + $0x8] sm:$0xff] %vm34, %v53
  // Predicated region
  $region14: #{point_transformer_forward.32} parent=0 // pred_check
    _
  $region15: #{point_transformer_forward.32} parent=0 // pred_check_branch
    %57 = sbr.rel (0) target = $region17
  $region16: #{point_transformer_forward.32} parent=0 // pred_region
    _
  $region17: #{point_transformer_forward.32} parent=0 // pred_fallthru
    _
  // Predicated region
  $region18: #{point_transformer_forward.32} parent=0 // pred_check
    _
  $region19: #{point_transformer_forward.32} parent=0 // pred_check_branch
    %59 = sbr.rel (0) target = $region21
  $region20: #{point_transformer_forward.32} parent=0 // pred_region
    _
  $region21: #{point_transformer_forward.32} parent=0 // pred_fallthru
    _

// kernel: point_transformer_forward.33
$region0: #{point_transformer_forward.33}
  #allocation0 [shape = 'u32[]', space=smem, size = 0x4, offset = 0x4, fixed_abs, tag = 'smem constant byte address 0x4 - core index']
  #allocation1 [shape = 'u32[72,128]{1,0:T(1,128)}', space=vmem, size = 0x9000, scoped, tag = 'internal scratch']
  %s0 = inlined_call_operand.vmem [shape: f32[16,64], index: 0, kind: input, shape index: {}]
  %s1 = inlined_call_operand.vmem [shape: f32[64,192], index: 1, kind: input, shape index: {}]
  %s2 = inlined_call_operand.vmem [shape: f32[1,192], index: 2, kind: input, shape index: {}]
  %s3 = inlined_call_operand.vmem [shape: f32[16,192], index: 3, kind: output, shape index: {}]
  %s4 = sld [smem:[#allocation0]]
  $region22: #{point_transformer_forward.33} parent=0
    _
  %s6 = ssub.s32 1, %s4
  %s7 = scalar_select 0, %s6, %s4
  // Predicated region
  $region2: #{point_transformer_forward.33} parent=0 // pred_check
    _
  $region3: #{point_transformer_forward.33} parent=0 // pred_check_branch
    %9 = sbr.rel (0) target = $region5
  $region4: #{point_transformer_forward.33} parent=0 // pred_region
    _
  $region5: #{point_transformer_forward.33} parent=0 // pred_fallthru
    _
  // Predicated region
  $region6: #{point_transformer_forward.33} parent=0 // pred_check
    _
  $region7: #{point_transformer_forward.33} parent=0 // pred_check_branch
    %11 = sbr.rel (0) target = $region9
  $region8: #{point_transformer_forward.33} parent=0 // pred_region
    _
  $region9: #{point_transformer_forward.33} parent=0 // pred_fallthru
    _
  // Predicated region
  $region10: #{point_transformer_forward.33} parent=0 // pred_check
    _
  $region11: #{point_transformer_forward.33} parent=0 // pred_check_branch
    %13 = sbr.rel (0) target = $region13
  $region12: #{point_transformer_forward.33} parent=0 // pred_region
    _
  $region13: #{point_transformer_forward.33} parent=0 // pred_fallthru
    _
  %v15 = vld [vmem:[%s0] sm:$0xff]
  %v16 = vld [vmem:[%s0 + $0x8] sm:$0xff]
  %v17 = vpack.c.bf16 %v16, %v15
  %v18 = vld [vmem:[%s1] sm:$0xff]
  %v19 = vld [vmem:[%s1 + $0x8] sm:$0xff]
  %v20 = vld [vmem:[%s1 + $0x10] sm:$0xff]
  %v21 = vld [vmem:[%s1 + $0x18] sm:$0xff]
  %v22 = vld [vmem:[%s1 + $0x20] sm:$0xff]
  %v23 = vld [vmem:[%s1 + $0x28] sm:$0xff]
  %v24 = vld [vmem:[%s1 + $0x30] sm:$0xff]
  %v25 = vld [vmem:[%s1 + $0x38] sm:$0xff]
  %v26 = vld [vmem:[%s1 + $0x40] sm:$0xff]
  %v27 = vld [vmem:[%s1 + $0x48] sm:$0xff]
  %v28 = vld [vmem:[%s1 + $0x50] sm:$0xff]
  %v29 = vld [vmem:[%s1 + $0x58] sm:$0xff]
  %v30 = vld [vmem:[%s1 + $0x60] sm:$0xff]
  %v31 = vld [vmem:[%s1 + $0x68] sm:$0xff]
  %v32 = vld [vmem:[%s1 + $0x70] sm:$0xff]
  %v33 = vld [vmem:[%s1 + $0x78] sm:$0xff]
  %v34 = vpack.c.bf16 %v20, %v18
  %v35 = vpack.c.bf16 %v21, %v19
  %v36 = vpack.c.bf16 %v24, %v22
  %v37 = vpack.c.bf16 %v25, %v23
  %v38 = vpack.c.bf16 %v28, %v26
  %v39 = vpack.c.bf16 %v29, %v27
  %v40 = vpack.c.bf16 %v32, %v30
  %v41 = vpack.c.bf16 %v33, %v31
  %v42 = vld [vmem:[%s2] sm:$0x3]
  %v44 = vperm.slane %v42, 0
  %v45 = vperm.slane %v42, 1
  %vm48 = vcmask 523264
  %v50 = vsel %vm48, %v17, 0
  %52 = vmatpush.bf16.msra.mxu0 0
  %53 = vmatpush.bf16.msra.mxu0 0
  %54 = vmatpush.bf16.msra.mxu0 0
  %55 = vmatpush.bf16.msra.mxu0 0
  %56 = vmatpush.bf16.msra.mxu0 %v40
  %57 = vmatpush.bf16.msra.mxu0 %v38
  %58 = vmatpush.bf16.msra.mxu0 %v36
  %59 = vmatpush.bf16.msra.mxu0 %v34
  %60 = vmatmul.bf16.gmra.mxu0 %v50
  %v61 = vpop.f32.mrf.mxu0
  %v62 = vadd.f32 %v44, %v61
  %v63 = vpop.f32.mrf.mxu0
  %v64 = vadd.f32 %v44, %v63
  %65 = vdwg.mxu0
  %66 = vmatpush.bf16.msra.mxu0 0
  %67 = vmatpush.bf16.msra.mxu0 0
  %68 = vmatpush.bf16.msra.mxu0 0
  %69 = vmatpush.bf16.msra.mxu0 0
  %70 = vmatpush.bf16.msra.mxu0 %v41
  %71 = vmatpush.bf16.msra.mxu0 %v39
  %72 = vmatpush.bf16.msra.mxu0 %v37
  %73 = vmatpush.bf16.msra.mxu0 %v35
  %74 = vmatmul.bf16.gmra.mxu0 %v50
  %v75 = vpop.f32.mrf.mxu0
  %v76 = vadd.f32 %v45, %v75
  %v77 = vpop.f32.mrf.mxu0
  %v78 = vadd.f32 %v45, %v77
  %79 = vdwg.mxu0
  %80 = vst [vmem:[%s3] sm:$0xff] %v62
  %81 = vst.msk [vmem:[%s3 + $0x8] sm:$0xff] %vm48, %v76
  %82 = vst [vmem:[%s3 + $0x10] sm:$0xff] %v64
  %83 = vst.msk [vmem:[%s3 + $0x18] sm:$0xff] %vm48, %v78
  // Predicated region
  $region14: #{point_transformer_forward.33} parent=0 // pred_check
    _
  $region15: #{point_transformer_forward.33} parent=0 // pred_check_branch
    %85 = sbr.rel (0) target = $region17
  $region16: #{point_transformer_forward.33} parent=0 // pred_region
    _
  $region17: #{point_transformer_forward.33} parent=0 // pred_fallthru
    _
  // Predicated region
  $region18: #{point_transformer_forward.33} parent=0 // pred_check
    _
  $region19: #{point_transformer_forward.33} parent=0 // pred_check_branch
    %87 = sbr.rel (0) target = $region21
  $region20: #{point_transformer_forward.33} parent=0 // pred_region
    _
  $region21: #{point_transformer_forward.33} parent=0 // pred_fallthru
    _

// kernel: neg.8
$region0: #{neg.8}
  #allocation0 [shape = 's32[1]{0}', space=sflag, size = 0x4, scoped, tag = 'scoped memory for neg.8']
  %s0 = inlined_call_operand.vmem [shape: f32[64,16], index: 0, kind: input, shape index: {}]
  %s1 = inlined_call_operand.vmem [shape: f32[64,16], index: 1, kind: output, shape index: {}]
  %v2 = vld [vmem:[%s0] sm:$0xff]
  %3 = xla_tuple %v2
  %4 = xla_tuple %3
  %v5 = vxor.u32 %v2, 2147483648
  %6 = xla_tuple %v5
  %7 = vst [vmem:[%s1] sm:$0xff] %v5
  %s8 = scalar_lea.vmem %s0, 8
  %v9 = vld [vmem:[%s8] sm:$0xff]
  %10 = xla_tuple %v9
  %11 = xla_tuple %10
  %v12 = vxor.u32 %v9, 2147483648
  %13 = xla_tuple %v12
  %s14 = scalar_lea.vmem %s1, 8
  %15 = vst [vmem:[%s14] sm:$0xff] %v12

// kernel: point_transformer_forward.41
$region0: #{point_transformer_forward.41}
  #allocation0 [shape = 'u32[]', space=smem, size = 0x4, offset = 0x4, fixed_abs, tag = 'smem constant byte address 0x4 - core index']
  #allocation1 [shape = 'u32[72,128]{1,0:T(1,128)}', space=vmem, size = 0x9000, scoped, tag = 'internal scratch']
  %s0 = inlined_call_operand.vmem [shape: f32[16,64], index: 0, kind: input, shape index: {}]
  %s1 = inlined_call_operand.vmem [shape: f32[64,32], index: 1, kind: input, shape index: {}]
  %s2 = inlined_call_operand.vmem [shape: f32[1,32], index: 2, kind: input, shape index: {}]
  %s3 = inlined_call_operand.vmem [shape: f32[16,32], index: 3, kind: output, shape index: {}]
  %s4 = sld [smem:[#allocation0]]
  $region22: #{point_transformer_forward.41} parent=0
    _
  %s6 = ssub.s32 1, %s4
  %s7 = scalar_select 0, %s6, %s4
  // Predicated region
  $region2: #{point_transformer_forward.41} parent=0 // pred_check
    _
  $region3: #{point_transformer_forward.41} parent=0 // pred_check_branch
    %9 = sbr.rel (0) target = $region5
  $region4: #{point_transformer_forward.41} parent=0 // pred_region
    _
  $region5: #{point_transformer_forward.41} parent=0 // pred_fallthru
    _
  // Predicated region
  $region6: #{point_transformer_forward.41} parent=0 // pred_check
    _
  $region7: #{point_transformer_forward.41} parent=0 // pred_check_branch
    %11 = sbr.rel (0) target = $region9
  $region8: #{point_transformer_forward.41} parent=0 // pred_region
    _
  $region9: #{point_transformer_forward.41} parent=0 // pred_fallthru
    _
  // Predicated region
  $region10: #{point_transformer_forward.41} parent=0 // pred_check
    _
  $region11: #{point_transformer_forward.41} parent=0 // pred_check_branch
    %13 = sbr.rel (0) target = $region13
  $region12: #{point_transformer_forward.41} parent=0 // pred_region
    _
  $region13: #{point_transformer_forward.41} parent=0 // pred_fallthru
    _
  %v15 = vld [vmem:[%s0] sm:$0xff]
  %v16 = vld [vmem:[%s0 + $0x8] sm:$0xff]
  %v17 = vpack.c.bf16 %v16, %v15
  %v18 = vld [vmem:[%s1] sm:$0xff]
  %v19 = vld [vmem:[%s1 + $0x8] sm:$0xff]
  %v20 = vld [vmem:[%s1 + $0x10] sm:$0xff]
  %v21 = vld [vmem:[%s1 + $0x18] sm:$0xff]
  %v22 = vld [vmem:[%s1 + $0x20] sm:$0xff]
  %v23 = vld [vmem:[%s1 + $0x28] sm:$0xff]
  %v24 = vld [vmem:[%s1 + $0x30] sm:$0xff]
  %v25 = vld [vmem:[%s1 + $0x38] sm:$0xff]
  %v26 = vpack.c.bf16 %v19, %v18
  %v27 = vpack.c.bf16 %v21, %v20
  %v28 = vpack.c.bf16 %v23, %v22
  %v29 = vpack.c.bf16 %v25, %v24
  %v30 = vld [vmem:[%s2] sm:$0x1]
  %v32 = vperm.slane %v30, 0
  %vm34 = vcmask 523264
  %v36 = vsel %vm34, %v17, 0
  %38 = vmatpush.bf16.msra.mxu0 0
  %39 = vmatpush.bf16.msra.mxu0 0
  %40 = vmatpush.bf16.msra.mxu0 0
  %41 = vmatpush.bf16.msra.mxu0 0
  %42 = vmatpush.bf16.msra.mxu0 %v29
  %43 = vmatpush.bf16.msra.mxu0 %v28
  %44 = vmatpush.bf16.msra.mxu0 %v27
  %45 = vmatpush.bf16.msra.mxu0 %v26
  %46 = vmatmul.bf16.gmra.mxu0 %v36
  %v47 = vpop.f32.mrf.mxu0
  %v48 = vadd.f32 %v32, %v47
  %v49 = vpop.f32.mrf.mxu0
  %v50 = vadd.f32 %v32, %v49
  %51 = vdwg.mxu0
  %v52 = vmax.f32 %v48, 0.0
  %v53 = vmax.f32 %v50, 0.0
  %vm54 = vcmask 261120
  %55 = vst.msk [vmem:[%s3] sm:$0xff] %vm54, %v52
  %56 = vst.msk [vmem:[%s3 + $0x8] sm:$0xff] %vm54, %v53
  // Predicated region
  $region14: #{point_transformer_forward.41} parent=0 // pred_check
    _
  $region15: #{point_transformer_forward.41} parent=0 // pred_check_branch
    %58 = sbr.rel (0) target = $region17
  $region16: #{point_transformer_forward.41} parent=0 // pred_region
    _
  $region17: #{point_transformer_forward.41} parent=0 // pred_fallthru
    _
  // Predicated region
  $region18: #{point_transformer_forward.41} parent=0 // pred_check
    _
  $region19: #{point_transformer_forward.41} parent=0 // pred_check_branch
    %60 = sbr.rel (0) target = $region21
  $region20: #{point_transformer_forward.41} parent=0 // pred_region
    _
  $region21: #{point_transformer_forward.41} parent=0 // pred_fallthru
    _

// kernel: point_transformer_forward.34
$region0: #{point_transformer_forward.34}
  #allocation0 [shape = 'u32[]', space=smem, size = 0x4, offset = 0x4, fixed_abs, tag = 'smem constant byte address 0x4 - core index']
  #allocation1 [shape = 'u32[72,128]{1,0:T(1,128)}', space=vmem, size = 0x9000, scoped, tag = 'internal scratch']
  %s0 = inlined_call_operand.vmem [shape: f32[5,16,3], index: 0, kind: input, shape index: {}]
  %s1 = inlined_call_operand.vmem [shape: f32[5,16,64], index: 1, kind: input, shape index: {}]
  %s2 = inlined_call_operand.vmem [shape: f32[5,16,64], index: 2, kind: input, shape index: {}]
  %s3 = inlined_call_operand.vmem [shape: f32[16,64], index: 3, kind: input, shape index: {}]
  %s4 = inlined_call_operand.vmem [shape: f32[3,64], index: 4, kind: input, shape index: {}]
  %s5 = inlined_call_operand.vmem [shape: f32[1,64], index: 5, kind: input, shape index: {}]
  %s6 = inlined_call_operand.vmem [shape: f32[64,64], index: 6, kind: input, shape index: {}]
  %s7 = inlined_call_operand.vmem [shape: f32[1,64], index: 7, kind: input, shape index: {}]
  %s8 = inlined_call_operand.vmem [shape: f32[64,64], index: 8, kind: input, shape index: {}]
  %s9 = inlined_call_operand.vmem [shape: f32[1,64], index: 9, kind: input, shape index: {}]
  %s10 = inlined_call_operand.vmem [shape: f32[64,64], index: 10, kind: input, shape index: {}]
  %s11 = inlined_call_operand.vmem [shape: f32[1,64], index: 11, kind: input, shape index: {}]
  %s12 = inlined_call_operand.vmem [shape: f32[16,64], index: 12, kind: output, shape index: {}]
  %s13 = sld [smem:[#allocation0]]
  $region58: #{point_transformer_forward.34} parent=0
    _
  %s15 = ssub.s32 1, %s13
  %s16 = scalar_select 0, %s15, %s13
  // Predicated region
  $region2: #{point_transformer_forward.34} parent=0 // pred_check
    _
  $region3: #{point_transformer_forward.34} parent=0 // pred_check_branch
    %18 = sbr.rel (0) target = $region5
  $region4: #{point_transformer_forward.34} parent=0 // pred_region
    _
  $region5: #{point_transformer_forward.34} parent=0 // pred_fallthru
    _
  // Predicated region
  $region6: #{point_transformer_forward.34} parent=0 // pred_check
    _
  $region7: #{point_transformer_forward.34} parent=0 // pred_check_branch
    %20 = sbr.rel (0) target = $region9
  $region8: #{point_transformer_forward.34} parent=0 // pred_region
    _
  $region9: #{point_transformer_forward.34} parent=0 // pred_fallthru
    _
  // Predicated region
  $region10: #{point_transformer_forward.34} parent=0 // pred_check
    _
  $region11: #{point_transformer_forward.34} parent=0 // pred_check_branch
    %22 = sbr.rel (0) target = $region13
  $region12: #{point_transformer_forward.34} parent=0 // pred_region
    _
  $region13: #{point_transformer_forward.34} parent=0 // pred_fallthru
    _
  // Predicated region
  $region14: #{point_transformer_forward.34} parent=0 // pred_check
    _
  $region15: #{point_transformer_forward.34} parent=0 // pred_check_branch
    %24 = sbr.rel (0) target = $region17
  $region16: #{point_transformer_forward.34} parent=0 // pred_region
    _
  $region17: #{point_transformer_forward.34} parent=0 // pred_fallthru
    _
  // Predicated region
  $region18: #{point_transformer_forward.34} parent=0 // pred_check
    _
  $region19: #{point_transformer_forward.34} parent=0 // pred_check_branch
    %26 = sbr.rel (0) target = $region21
  $region20: #{point_transformer_forward.34} parent=0 // pred_region
    _
  $region21: #{point_transformer_forward.34} parent=0 // pred_fallthru
    _
  // Predicated region
  $region22: #{point_transformer_forward.34} parent=0 // pred_check
    _
  $region23: #{point_transformer_forward.34} parent=0 // pred_check_branch
    %28 = sbr.rel (0) target = $region25
  $region24: #{point_transformer_forward.34} parent=0 // pred_region
    _
  $region25: #{point_transformer_forward.34} parent=0 // pred_fallthru
    _
  // Predicated region
  $region26: #{point_transformer_forward.34} parent=0 // pred_check
    _
  $region27: #{point_transformer_forward.34} parent=0 // pred_check_branch
    %30 = sbr.rel (0) target = $region29
  $region28: #{point_transformer_forward.34} parent=0 // pred_region
    _
  $region29: #{point_transformer_forward.34} parent=0 // pred_fallthru
    _
  // Predicated region
  $region30: #{point_transformer_forward.34} parent=0 // pred_check
    _
  $region31: #{point_transformer_forward.34} parent=0 // pred_check_branch
    %32 = sbr.rel (0) target = $region33
  $region32: #{point_transformer_forward.34} parent=0 // pred_region
    _
  $region33: #{point_transformer_forward.34} parent=0 // pred_fallthru
    _
  // Predicated region
  $region34: #{point_transformer_forward.34} parent=0 // pred_check
    _
  $region35: #{point_transformer_forward.34} parent=0 // pred_check_branch
    %34 = sbr.rel (0) target = $region37
  $region36: #{point_transformer_forward.34} parent=0 // pred_region
    _
  $region37: #{point_transformer_forward.34} parent=0 // pred_fallthru
    _
  // Predicated region
  $region38: #{point_transformer_forward.34} parent=0 // pred_check
    _
  $region39: #{point_transformer_forward.34} parent=0 // pred_check_branch
    %36 = sbr.rel (0) target = $region41
  $region40: #{point_transformer_forward.34} parent=0 // pred_region
    _
  $region41: #{point_transformer_forward.34} parent=0 // pred_fallthru
    _
  // Predicated region
  $region42: #{point_transformer_forward.34} parent=0 // pred_check
    _
  $region43: #{point_transformer_forward.34} parent=0 // pred_check_branch
    %38 = sbr.rel (0) target = $region45
  $region44: #{point_transformer_forward.34} parent=0 // pred_region
    _
  $region45: #{point_transformer_forward.34} parent=0 // pred_fallthru
    _
  // Predicated region
  $region46: #{point_transformer_forward.34} parent=0 // pred_check
    _
  $region47: #{point_transformer_forward.34} parent=0 // pred_check_branch
    %40 = sbr.rel (0) target = $region49
  $region48: #{point_transformer_forward.34} parent=0 // pred_region
    _
  $region49: #{point_transformer_forward.34} parent=0 // pred_fallthru
    _
  %v42 = vld [vmem:[%s3] sm:$0xff]
  %v43 = vld [vmem:[%s3 + $0x8] sm:$0xff]
  %v44 = vld [vmem:[%s4] sm:$0x7]
  %v45 = vpack.c.bf16 %v44, %v44
  %v46 = vld [vmem:[%s5] sm:$0x1]
  %v47 = vld [vmem:[%s6] sm:$0xff]
  %v48 = vld [vmem:[%s6 + $0x8] sm:$0xff]
  %v49 = vld [vmem:[%s6 + $0x10] sm:$0xff]
  %v50 = vld [vmem:[%s6 + $0x18] sm:$0xff]
  %v51 = vld [vmem:[%s6 + $0x20] sm:$0xff]
  %v52 = vld [vmem:[%s6 + $0x28] sm:$0xff]
  %v53 = vld [vmem:[%s6 + $0x30] sm:$0xff]
  %v54 = vld [vmem:[%s6 + $0x38] sm:$0xff]
  %v55 = vpack.c.bf16 %v48, %v47
  %v56 = vpack.c.bf16 %v50, %v49
  %v57 = vpack.c.bf16 %v52, %v51
  %v58 = vpack.c.bf16 %v54, %v53
  %v59 = vld [vmem:[%s7] sm:$0x1]
  %v60 = vld [vmem:[%s8] sm:$0xff]
  %v61 = vld [vmem:[%s8 + $0x8] sm:$0xff]
  %v62 = vld [vmem:[%s8 + $0x10] sm:$0xff]
  %v63 = vld [vmem:[%s8 + $0x18] sm:$0xff]
  %v64 = vld [vmem:[%s8 + $0x20] sm:$0xff]
  %v65 = vld [vmem:[%s8 + $0x28] sm:$0xff]
  %v66 = vld [vmem:[%s8 + $0x30] sm:$0xff]
  %v67 = vld [vmem:[%s8 + $0x38] sm:$0xff]
  %v68 = vpack.c.bf16 %v61, %v60
  %v69 = vpack.c.bf16 %v63, %v62
  %v70 = vpack.c.bf16 %v65, %v64
  %v71 = vpack.c.bf16 %v67, %v66
  %v72 = vld [vmem:[%s9] sm:$0x1]
  %v73 = vld [vmem:[%s10] sm:$0xff]
  %v74 = vld [vmem:[%s10 + $0x8] sm:$0xff]
  %v75 = vld [vmem:[%s10 + $0x10] sm:$0xff]
  %v76 = vld [vmem:[%s10 + $0x18] sm:$0xff]
  %v77 = vld [vmem:[%s10 + $0x20] sm:$0xff]
  %v78 = vld [vmem:[%s10 + $0x28] sm:$0xff]
  %v79 = vld [vmem:[%s10 + $0x30] sm:$0xff]
  %v80 = vld [vmem:[%s10 + $0x38] sm:$0xff]
  %v81 = vpack.c.bf16 %v74, %v73
  %v82 = vpack.c.bf16 %v76, %v75
  %v83 = vpack.c.bf16 %v78, %v77
  %v84 = vpack.c.bf16 %v80, %v79
  %v85 = vld [vmem:[%s11] sm:$0x1]
  %v86 = vld [vmem:[%s0] sm:$0xff]
  %v87 = vld [vmem:[%s0 + $0x8] sm:$0xff]
  %v88 = vpack.c.bf16 %v87, %v86
  %v90 = vperm.slane %v46, 0
  %vm92 = vcmask 23552
  %v94 = vsel %vm92, %v88, 0
  %vm96 = vcmask 1040384
  %vm97 = vcmask 1041408
  %v98 = vsel %vm96, 4294967295, 65535
  %v99 = vsel %vm97, %v98, 0
  %v101 = vand.u32 %v45, %v99
  %103 = vmatpush.bf16.msra.mxu0 0
  %104 = vmatpush.bf16.msra.mxu0 0
  %105 = vmatpush.bf16.msra.mxu0 0
  %106 = vmatpush.bf16.msra.mxu0 0
  %107 = vmatpush.bf16.msra.mxu0 0
  %108 = vmatpush.bf16.msra.mxu0 0
  %109 = vmatpush.bf16.msra.mxu0 0
  %110 = vmatpush.bf16.msra.mxu0 %v101
  %111 = vmatmul.bf16.gmra.mxu0 %v94
  %v112 = vpop.f32.mrf.mxu0
  %v113 = vadd.f32 %v90, %v112
  %v114 = vpop.f32.mrf.mxu0
  %v115 = vadd.f32 %v90, %v114
  %116 = vdwg.mxu0
  %v117 = vmax.f32 %v113, 0.0
  %v118 = vmax.f32 %v115, 0.0
  %v119 = vpack.c.bf16 %v118, %v117
  %v121 = vperm.slane %v59, 0
  %vm123 = vcmask 523264
  %v125 = vsel %vm123, %v119, 0
  %127 = vmatpush.bf16.msra.mxu0 0
  %128 = vmatpush.bf16.msra.mxu0 0
  %129 = vmatpush.bf16.msra.mxu0 0
  %130 = vmatpush.bf16.msra.mxu0 0
  %131 = vmatpush.bf16.msra.mxu0 %v58
  %132 = vmatpush.bf16.msra.mxu0 %v57
  %133 = vmatpush.bf16.msra.mxu0 %v56
  %134 = vmatpush.bf16.msra.mxu0 %v55
  %135 = vmatmul.bf16.gmra.mxu0 %v125
  %v136 = vpop.f32.mrf.mxu0
  %v137 = vadd.f32 %v121, %v136
  %v138 = vpop.f32.mrf.mxu0
  %v139 = vadd.f32 %v121, %v138
  %140 = vdwg.mxu0
  %v141 = vmax.f32 %v137, 0.0
  %v142 = vmax.f32 %v139, 0.0
  %v143 = vld [vmem:[%s2] sm:$0xff]
  %v144 = vld [vmem:[%s2 + $0x8] sm:$0xff]
  %v145 = vsub.f32 %v42, %v143
  %v146 = vsub.f32 %v43, %v144
  %v147 = vadd.f32 %v145, %v141
  %v148 = vadd.f32 %v146, %v142
  %v149 = vpack.c.bf16 %v148, %v147
  %v151 = vperm.slane %v72, 0
  %v154 = vsel %vm123, %v149, 0
  %156 = vmatpush.bf16.msra.mxu0 0
  %157 = vmatpush.bf16.msra.mxu0 0
  %158 = vmatpush.bf16.msra.mxu0 0
  %159 = vmatpush.bf16.msra.mxu0 0
  %160 = vmatpush.bf16.msra.mxu0 %v71
  %161 = vmatpush.bf16.msra.mxu0 %v70
  %162 = vmatpush.bf16.msra.mxu0 %v69
  %163 = vmatpush.bf16.msra.mxu0 %v68
  %164 = vmatmul.bf16.gmra.mxu0 %v154
  %v165 = vpop.f32.mrf.mxu0
  %v166 = vadd.f32 %v151, %v165
  %v167 = vpop.f32.mrf.mxu0
  %v168 = vadd.f32 %v151, %v167
  %169 = vdwg.mxu0
  %v170 = vmax.f32 %v166, 0.0
  %v171 = vmax.f32 %v168, 0.0
  %v172 = vpack.c.bf16 %v171, %v170
  %v174 = vperm.slane %v85, 0
  %v177 = vsel %vm123, %v172, 0
  %179 = vmatpush.bf16.msra.mxu0 0
  %180 = vmatpush.bf16.msra.mxu0 0
  %181 = vmatpush.bf16.msra.mxu0 0
  %182 = vmatpush.bf16.msra.mxu0 0
  %183 = vmatpush.bf16.msra.mxu0 %v84
  %184 = vmatpush.bf16.msra.mxu0 %v83
  %185 = vmatpush.bf16.msra.mxu0 %v82
  %186 = vmatpush.bf16.msra.mxu0 %v81
  %187 = vmatmul.bf16.gmra.mxu0 %v177
  %v188 = vpop.f32.mrf.mxu0
  %v189 = vadd.f32 %v174, %v188
  %v190 = vpop.f32.mrf.mxu0
  %v191 = vadd.f32 %v174, %v190
  %192 = vdwg.mxu0
  %v193 = vmax.f32 %v189, 0.0
  %v194 = vmax.f32 %v191, 0.0
  %v195 = vmax.f32 %v193, 0.0
  %v196 = vmax.f32 %v194, 0.0
  %v197 = vsub.f32 0.0, %v195
  %v198 = vsub.f32 0.0, %v196
  %v199 = vmul.f32 %v197, 1.442695
  %v200 = vpow.pop %v199
  %v201 = vmul.f32 %v198, 1.442695
  %v202 = vpow.pop %v201
  %v203 = vsub.f32 %v193, %v195
  %v204 = vsub.f32 %v194, %v196
  %v205 = vmul.f32 %v203, 1.442695
  %v206 = vpow.pop %v205
  %v207 = vmul.f32 %v204, 1.442695
  %v208 = vpow.pop %v207
  %v209 = vmul.f32 %v200, 0.0
  %v210 = vmul.f32 %v202, 0.0
  %v211 = vadd.f32 %v209, %v206
  %v212 = vadd.f32 %v210, %v208
  %v213 = vld [vmem:[%s1] sm:$0xff]
  %v214 = vld [vmem:[%s1 + $0x8] sm:$0xff]
  %v215 = vadd.f32 %v213, %v141
  %v216 = vadd.f32 %v214, %v142
  %v217 = vmul.f32 %v206, %v215
  %v218 = vmul.f32 %v208, %v216
  %v219 = vadd.f32 %v209, %v217
  %v220 = vadd.f32 %v210, %v218
  %s221 = scalar_lea.vmem %s0, 16
  %v222 = vld [vmem:[%s221] sm:$0xff]
  %v223 = vld [vmem:[%s221 + $0x8] sm:$0xff]
  %v224 = vpack.c.bf16 %v223, %v222
  %v226 = vsel %vm92, %v224, 0
  %228 = vmatpush.bf16.msra.mxu0 0
  %229 = vmatpush.bf16.msra.mxu0 0
  %230 = vmatpush.bf16.msra.mxu0 0
  %231 = vmatpush.bf16.msra.mxu0 0
  %232 = vmatpush.bf16.msra.mxu0 0
  %233 = vmatpush.bf16.msra.mxu0 0
  %234 = vmatpush.bf16.msra.mxu0 0
  %235 = vmatpush.bf16.msra.mxu0 %v101
  %236 = vmatmul.bf16.gmra.mxu0 %v226
  %v237 = vpop.f32.mrf.mxu0
  %v238 = vadd.f32 %v90, %v237
  %v239 = vpop.f32.mrf.mxu0
  %v240 = vadd.f32 %v90, %v239
  %241 = vdwg.mxu0
  %v242 = vmax.f32 %v238, 0.0
  %v243 = vmax.f32 %v240, 0.0
  %v244 = vpack.c.bf16 %v243, %v242
  %v246 = vsel %vm123, %v244, 0
  %248 = vmatpush.bf16.msra.mxu0 0
  %249 = vmatpush.bf16.msra.mxu0 0
  %250 = vmatpush.bf16.msra.mxu0 0
  %251 = vmatpush.bf16.msra.mxu0 0
  %252 = vmatpush.bf16.msra.mxu0 %v58
  %253 = vmatpush.bf16.msra.mxu0 %v57
  %254 = vmatpush.bf16.msra.mxu0 %v56
  %255 = vmatpush.bf16.msra.mxu0 %v55
  %256 = vmatmul.bf16.gmra.mxu0 %v246
  %v257 = vpop.f32.mrf.mxu0
  %v258 = vadd.f32 %v121, %v257
  %v259 = vpop.f32.mrf.mxu0
  %v260 = vadd.f32 %v121, %v259
  %261 = vdwg.mxu0
  %v262 = vmax.f32 %v258, 0.0
  %v263 = vmax.f32 %v260, 0.0
  %s264 = scalar_lea.vmem %s2, 16
  %v265 = vld [vmem:[%s264] sm:$0xff]
  %v266 = vld [vmem:[%s264 + $0x8] sm:$0xff]
  %v267 = vsub.f32 %v42, %v265
  %v268 = vsub.f32 %v43, %v266
  %v269 = vadd.f32 %v267, %v262
  %v270 = vadd.f32 %v268, %v263
  %v271 = vpack.c.bf16 %v270, %v269
  %v273 = vsel %vm123, %v271, 0
  %275 = vmatpush.bf16.msra.mxu0 0
  %276 = vmatpush.bf16.msra.mxu0 0
  %277 = vmatpush.bf16.msra.mxu0 0
  %278 = vmatpush.bf16.msra.mxu0 0
  %279 = vmatpush.bf16.msra.mxu0 %v71
  %280 = vmatpush.bf16.msra.mxu0 %v70
  %281 = vmatpush.bf16.msra.mxu0 %v69
  %282 = vmatpush.bf16.msra.mxu0 %v68
  %283 = vmatmul.bf16.gmra.mxu0 %v273
  %v284 = vpop.f32.mrf.mxu0
  %v285 = vadd.f32 %v151, %v284
  %v286 = vpop.f32.mrf.mxu0
  %v287 = vadd.f32 %v151, %v286
  %288 = vdwg.mxu0
  %v289 = vmax.f32 %v285, 0.0
  %v290 = vmax.f32 %v287, 0.0
  %v291 = vpack.c.bf16 %v290, %v289
  %v293 = vsel %vm123, %v291, 0
  %295 = vmatpush.bf16.msra.mxu0 0
  %296 = vmatpush.bf16.msra.mxu0 0
  %297 = vmatpush.bf16.msra.mxu0 0
  %298 = vmatpush.bf16.msra.mxu0 0
  %299 = vmatpush.bf16.msra.mxu0 %v84
  %300 = vmatpush.bf16.msra.mxu0 %v83
  %301 = vmatpush.bf16.msra.mxu0 %v82
  %302 = vmatpush.bf16.msra.mxu0 %v81
  %303 = vmatmul.bf16.gmra.mxu0 %v293
  %v304 = vpop.f32.mrf.mxu0
  %v305 = vadd.f32 %v174, %v304
  %v306 = vpop.f32.mrf.mxu0
  %v307 = vadd.f32 %v174, %v306
  %308 = vdwg.mxu0
  %v309 = vmax.f32 %v305, 0.0
  %v310 = vmax.f32 %v307, 0.0
  %v311 = vmax.f32 %v195, %v309
  %v312 = vmax.f32 %v196, %v310
  %v313 = vsub.f32 %v195, %v311
  %v314 = vsub.f32 %v196, %v312
  %v315 = vmul.f32 %v313, 1.442695
  %v316 = vpow.pop %v315
  %v317 = vmul.f32 %v314, 1.442695
  %v318 = vpow.pop %v317
  %v319 = vsub.f32 %v309, %v311
  %v320 = vsub.f32 %v310, %v312
  %v321 = vmul.f32 %v319, 1.442695
  %v322 = vpow.pop %v321
  %v323 = vmul.f32 %v320, 1.442695
  %v324 = vpow.pop %v323
  %v325 = vmul.f32 %v211, %v316
  %v326 = vmul.f32 %v212, %v318
  %v327 = vadd.f32 %v325, %v322
  %v328 = vadd.f32 %v326, %v324
  %v329 = vmul.f32 %v219, %v316
  %v330 = vmul.f32 %v220, %v318
  %s331 = scalar_lea.vmem %s1, 16
  %v332 = vld [vmem:[%s331] sm:$0xff]
  %v333 = vld [vmem:[%s331 + $0x8] sm:$0xff]
  %v334 = vadd.f32 %v332, %v262
  %v335 = vadd.f32 %v333, %v263
  %v336 = vmul.f32 %v322, %v334
  %v337 = vmul.f32 %v324, %v335
  %v338 = vadd.f32 %v329, %v336
  %v339 = vadd.f32 %v330, %v337
  %s340 = scalar_lea.vmem %s0, 32
  %v341 = vld [vmem:[%s340] sm:$0xff]
  %v342 = vld [vmem:[%s340 + $0x8] sm:$0xff]
  %v343 = vpack.c.bf16 %v342, %v341
  %v345 = vsel %vm92, %v343, 0
  %347 = vmatpush.bf16.msra.mxu0 0
  %348 = vmatpush.bf16.msra.mxu0 0
  %349 = vmatpush.bf16.msra.mxu0 0
  %350 = vmatpush.bf16.msra.mxu0 0
  %351 = vmatpush.bf16.msra.mxu0 0
  %352 = vmatpush.bf16.msra.mxu0 0
  %353 = vmatpush.bf16.msra.mxu0 0
  %354 = vmatpush.bf16.msra.mxu0 %v101
  %355 = vmatmul.bf16.gmra.mxu0 %v345
  %v356 = vpop.f32.mrf.mxu0
  %v357 = vadd.f32 %v90, %v356
  %v358 = vpop.f32.mrf.mxu0
  %v359 = vadd.f32 %v90, %v358
  %360 = vdwg.mxu0
  %v361 = vmax.f32 %v357, 0.0
  %v362 = vmax.f32 %v359, 0.0
  %v363 = vpack.c.bf16 %v362, %v361
  %v365 = vsel %vm123, %v363, 0
  %367 = vmatpush.bf16.msra.mxu0 0
  %368 = vmatpush.bf16.msra.mxu0 0
  %369 = vmatpush.bf16.msra.mxu0 0
  %370 = vmatpush.bf16.msra.mxu0 0
  %371 = vmatpush.bf16.msra.mxu0 %v58
  %372 = vmatpush.bf16.msra.mxu0 %v57
  %373 = vmatpush.bf16.msra.mxu0 %v56
  %374 = vmatpush.bf16.msra.mxu0 %v55
  %375 = vmatmul.bf16.gmra.mxu0 %v365
  %v376 = vpop.f32.mrf.mxu0
  %v377 = vadd.f32 %v121, %v376
  %v378 = vpop.f32.mrf.mxu0
  %v379 = vadd.f32 %v121, %v378
  %380 = vdwg.mxu0
  %v381 = vmax.f32 %v377, 0.0
  %v382 = vmax.f32 %v379, 0.0
  %s383 = scalar_lea.vmem %s2, 32
  %v384 = vld [vmem:[%s383] sm:$0xff]
  %v385 = vld [vmem:[%s383 + $0x8] sm:$0xff]
  %v386 = vsub.f32 %v42, %v384
  %v387 = vsub.f32 %v43, %v385
  %v388 = vadd.f32 %v386, %v381
  %v389 = vadd.f32 %v387, %v382
  %v390 = vpack.c.bf16 %v389, %v388
  %v392 = vsel %vm123, %v390, 0
  %394 = vmatpush.bf16.msra.mxu0 0
  %395 = vmatpush.bf16.msra.mxu0 0
  %396 = vmatpush.bf16.msra.mxu0 0
  %397 = vmatpush.bf16.msra.mxu0 0
  %398 = vmatpush.bf16.msra.mxu0 %v71
  %399 = vmatpush.bf16.msra.mxu0 %v70
  %400 = vmatpush.bf16.msra.mxu0 %v69
  %401 = vmatpush.bf16.msra.mxu0 %v68
  %402 = vmatmul.bf16.gmra.mxu0 %v392
  %v403 = vpop.f32.mrf.mxu0
  %v404 = vadd.f32 %v151, %v403
  %v405 = vpop.f32.mrf.mxu0
  %v406 = vadd.f32 %v151, %v405
  %407 = vdwg.mxu0
  %v408 = vmax.f32 %v404, 0.0
  %v409 = vmax.f32 %v406, 0.0
  %v410 = vpack.c.bf16 %v409, %v408
  %v412 = vsel %vm123, %v410, 0
  %414 = vmatpush.bf16.msra.mxu0 0
  %415 = vmatpush.bf16.msra.mxu0 0
  %416 = vmatpush.bf16.msra.mxu0 0
  %417 = vmatpush.bf16.msra.mxu0 0
  %418 = vmatpush.bf16.msra.mxu0 %v84
  %419 = vmatpush.bf16.msra.mxu0 %v83
  %420 = vmatpush.bf16.msra.mxu0 %v82
  %421 = vmatpush.bf16.msra.mxu0 %v81
  %422 = vmatmul.bf16.gmra.mxu0 %v412
  %v423 = vpop.f32.mrf.mxu0
  %v424 = vadd.f32 %v174, %v423
  %v425 = vpop.f32.mrf.mxu0
  %v426 = vadd.f32 %v174, %v425
  %427 = vdwg.mxu0
  %v428 = vmax.f32 %v424, 0.0
  %v429 = vmax.f32 %v426, 0.0
  %v430 = vmax.f32 %v311, %v428
  %v431 = vmax.f32 %v312, %v429
  %v432 = vsub.f32 %v311, %v430
  %v433 = vsub.f32 %v312, %v431
  %v434 = vmul.f32 %v432, 1.442695
  %v435 = vpow.pop %v434
  %v436 = vmul.f32 %v433, 1.442695
  %v437 = vpow.pop %v436
  %v438 = vsub.f32 %v428, %v430
  %v439 = vsub.f32 %v429, %v431
  %v440 = vmul.f32 %v438, 1.442695
  %v441 = vpow.pop %v440
  %v442 = vmul.f32 %v439, 1.442695
  %v443 = vpow.pop %v442
  %v444 = vmul.f32 %v327, %v435
  %v445 = vmul.f32 %v328, %v437
  %v446 = vadd.f32 %v444, %v441
  %v447 = vadd.f32 %v445, %v443
  %v448 = vmul.f32 %v338, %v435
  %v449 = vmul.f32 %v339, %v437
  %s450 = scalar_lea.vmem %s1, 32
  %v451 = vld [vmem:[%s450] sm:$0xff]
  %v452 = vld [vmem:[%s450 + $0x8] sm:$0xff]
  %v453 = vadd.f32 %v451, %v381
  %v454 = vadd.f32 %v452, %v382
  %v455 = vmul.f32 %v441, %v453
  %v456 = vmul.f32 %v443, %v454
  %v457 = vadd.f32 %v448, %v455
  %v458 = vadd.f32 %v449, %v456
  %s459 = scalar_lea.vmem %s0, 48
  %v460 = vld [vmem:[%s459] sm:$0xff]
  %v461 = vld [vmem:[%s459 + $0x8] sm:$0xff]
  %v462 = vpack.c.bf16 %v461, %v460
  %v464 = vsel %vm92, %v462, 0
  %466 = vmatpush.bf16.msra.mxu0 0
  %467 = vmatpush.bf16.msra.mxu0 0
  %468 = vmatpush.bf16.msra.mxu0 0
  %469 = vmatpush.bf16.msra.mxu0 0
  %470 = vmatpush.bf16.msra.mxu0 0
  %471 = vmatpush.bf16.msra.mxu0 0
  %472 = vmatpush.bf16.msra.mxu0 0
  %473 = vmatpush.bf16.msra.mxu0 %v101
  %474 = vmatmul.bf16.gmra.mxu0 %v464
  %v475 = vpop.f32.mrf.mxu0
  %v476 = vadd.f32 %v90, %v475
  %v477 = vpop.f32.mrf.mxu0
  %v478 = vadd.f32 %v90, %v477
  %479 = vdwg.mxu0
  %v480 = vmax.f32 %v476, 0.0
  %v481 = vmax.f32 %v478, 0.0
  %v482 = vpack.c.bf16 %v481, %v480
  %v484 = vsel %vm123, %v482, 0
  %486 = vmatpush.bf16.msra.mxu0 0
  %487 = vmatpush.bf16.msra.mxu0 0
  %488 = vmatpush.bf16.msra.mxu0 0
  %489 = vmatpush.bf16.msra.mxu0 0
  %490 = vmatpush.bf16.msra.mxu0 %v58
  %491 = vmatpush.bf16.msra.mxu0 %v57
  %492 = vmatpush.bf16.msra.mxu0 %v56
  %493 = vmatpush.bf16.msra.mxu0 %v55
  %494 = vmatmul.bf16.gmra.mxu0 %v484
  %v495 = vpop.f32.mrf.mxu0
  %v496 = vadd.f32 %v121, %v495
  %v497 = vpop.f32.mrf.mxu0
  %v498 = vadd.f32 %v121, %v497
  %499 = vdwg.mxu0
  %v500 = vmax.f32 %v496, 0.0
  %v501 = vmax.f32 %v498, 0.0
  %s502 = scalar_lea.vmem %s2, 48
  %v503 = vld [vmem:[%s502] sm:$0xff]
  %v504 = vld [vmem:[%s502 + $0x8] sm:$0xff]
  %v505 = vsub.f32 %v42, %v503
  %v506 = vsub.f32 %v43, %v504
  %v507 = vadd.f32 %v505, %v500
  %v508 = vadd.f32 %v506, %v501
  %v509 = vpack.c.bf16 %v508, %v507
  %v511 = vsel %vm123, %v509, 0
  %513 = vmatpush.bf16.msra.mxu0 0
  %514 = vmatpush.bf16.msra.mxu0 0
  %515 = vmatpush.bf16.msra.mxu0 0
  %516 = vmatpush.bf16.msra.mxu0 0
  %517 = vmatpush.bf16.msra.mxu0 %v71
  %518 = vmatpush.bf16.msra.mxu0 %v70
  %519 = vmatpush.bf16.msra.mxu0 %v69
  %520 = vmatpush.bf16.msra.mxu0 %v68
  %521 = vmatmul.bf16.gmra.mxu0 %v511
  %v522 = vpop.f32.mrf.mxu0
  %v523 = vadd.f32 %v151, %v522
  %v524 = vpop.f32.mrf.mxu0
  %v525 = vadd.f32 %v151, %v524
  %526 = vdwg.mxu0
  %v527 = vmax.f32 %v523, 0.0
  %v528 = vmax.f32 %v525, 0.0
  %v529 = vpack.c.bf16 %v528, %v527
  %v531 = vsel %vm123, %v529, 0
  %533 = vmatpush.bf16.msra.mxu0 0
  %534 = vmatpush.bf16.msra.mxu0 0
  %535 = vmatpush.bf16.msra.mxu0 0
  %536 = vmatpush.bf16.msra.mxu0 0
  %537 = vmatpush.bf16.msra.mxu0 %v84
  %538 = vmatpush.bf16.msra.mxu0 %v83
  %539 = vmatpush.bf16.msra.mxu0 %v82
  %540 = vmatpush.bf16.msra.mxu0 %v81
  %541 = vmatmul.bf16.gmra.mxu0 %v531
  %v542 = vpop.f32.mrf.mxu0
  %v543 = vadd.f32 %v174, %v542
  %v544 = vpop.f32.mrf.mxu0
  %v545 = vadd.f32 %v174, %v544
  %546 = vdwg.mxu0
  %v547 = vmax.f32 %v543, 0.0
  %v548 = vmax.f32 %v545, 0.0
  %v549 = vmax.f32 %v430, %v547
  %v550 = vmax.f32 %v431, %v548
  %v551 = vsub.f32 %v430, %v549
  %v552 = vsub.f32 %v431, %v550
  %v553 = vmul.f32 %v551, 1.442695
  %v554 = vpow.pop %v553
  %v555 = vmul.f32 %v552, 1.442695
  %v556 = vpow.pop %v555
  %v557 = vsub.f32 %v547, %v549
  %v558 = vsub.f32 %v548, %v550
  %v559 = vmul.f32 %v557, 1.442695
  %v560 = vpow.pop %v559
  %v561 = vmul.f32 %v558, 1.442695
  %v562 = vpow.pop %v561
  %v563 = vmul.f32 %v446, %v554
  %v564 = vmul.f32 %v447, %v556
  %v565 = vadd.f32 %v563, %v560
  %v566 = vadd.f32 %v564, %v562
  %v567 = vmul.f32 %v457, %v554
  %v568 = vmul.f32 %v458, %v556
  %s569 = scalar_lea.vmem %s1, 48
  %v570 = vld [vmem:[%s569] sm:$0xff]
  %v571 = vld [vmem:[%s569 + $0x8] sm:$0xff]
  %v572 = vadd.f32 %v570, %v500
  %v573 = vadd.f32 %v571, %v501
  %v574 = vmul.f32 %v560, %v572
  %v575 = vmul.f32 %v562, %v573
  %v576 = vadd.f32 %v567, %v574
  %v577 = vadd.f32 %v568, %v575
  %s578 = scalar_lea.vmem %s0, 64
  %v579 = vld [vmem:[%s578] sm:$0xff]
  %v580 = vld [vmem:[%s578 + $0x8] sm:$0xff]
  %v581 = vpack.c.bf16 %v580, %v579
  %v583 = vsel %vm92, %v581, 0
  %585 = vmatpush.bf16.msra.mxu0 0
  %586 = vmatpush.bf16.msra.mxu0 0
  %587 = vmatpush.bf16.msra.mxu0 0
  %588 = vmatpush.bf16.msra.mxu0 0
  %589 = vmatpush.bf16.msra.mxu0 0
  %590 = vmatpush.bf16.msra.mxu0 0
  %591 = vmatpush.bf16.msra.mxu0 0
  %592 = vmatpush.bf16.msra.mxu0 %v101
  %593 = vmatmul.bf16.gmra.mxu0 %v583
  %v594 = vpop.f32.mrf.mxu0
  %v595 = vadd.f32 %v90, %v594
  %v596 = vpop.f32.mrf.mxu0
  %v597 = vadd.f32 %v90, %v596
  %598 = vdwg.mxu0
  %v599 = vmax.f32 %v595, 0.0
  %v600 = vmax.f32 %v597, 0.0
  %v601 = vpack.c.bf16 %v600, %v599
  %v603 = vsel %vm123, %v601, 0
  %605 = vmatpush.bf16.msra.mxu0 0
  %606 = vmatpush.bf16.msra.mxu0 0
  %607 = vmatpush.bf16.msra.mxu0 0
  %608 = vmatpush.bf16.msra.mxu0 0
  %609 = vmatpush.bf16.msra.mxu0 %v58
  %610 = vmatpush.bf16.msra.mxu0 %v57
  %611 = vmatpush.bf16.msra.mxu0 %v56
  %612 = vmatpush.bf16.msra.mxu0 %v55
  %613 = vmatmul.bf16.gmra.mxu0 %v603
  %v614 = vpop.f32.mrf.mxu0
  %v615 = vadd.f32 %v121, %v614
  %v616 = vpop.f32.mrf.mxu0
  %v617 = vadd.f32 %v121, %v616
  %618 = vdwg.mxu0
  %v619 = vmax.f32 %v615, 0.0
  %v620 = vmax.f32 %v617, 0.0
  %s621 = scalar_lea.vmem %s2, 64
  %v622 = vld [vmem:[%s621] sm:$0xff]
  %v623 = vld [vmem:[%s621 + $0x8] sm:$0xff]
  %v624 = vsub.f32 %v42, %v622
  %v625 = vsub.f32 %v43, %v623
  %v626 = vadd.f32 %v624, %v619
  %v627 = vadd.f32 %v625, %v620
  %v628 = vpack.c.bf16 %v627, %v626
  %v630 = vsel %vm123, %v628, 0
  %632 = vmatpush.bf16.msra.mxu0 0
  %633 = vmatpush.bf16.msra.mxu0 0
  %634 = vmatpush.bf16.msra.mxu0 0
  %635 = vmatpush.bf16.msra.mxu0 0
  %636 = vmatpush.bf16.msra.mxu0 %v71
  %637 = vmatpush.bf16.msra.mxu0 %v70
  %638 = vmatpush.bf16.msra.mxu0 %v69
  %639 = vmatpush.bf16.msra.mxu0 %v68
  %640 = vmatmul.bf16.gmra.mxu0 %v630
  %v641 = vpop.f32.mrf.mxu0
  %v642 = vadd.f32 %v151, %v641
  %v643 = vpop.f32.mrf.mxu0
  %v644 = vadd.f32 %v151, %v643
  %645 = vdwg.mxu0
  %v646 = vmax.f32 %v642, 0.0
  %v647 = vmax.f32 %v644, 0.0
  %v648 = vpack.c.bf16 %v647, %v646
  %v650 = vsel %vm123, %v648, 0
  %652 = vmatpush.bf16.msra.mxu0 0
  %653 = vmatpush.bf16.msra.mxu0 0
  %654 = vmatpush.bf16.msra.mxu0 0
  %655 = vmatpush.bf16.msra.mxu0 0
  %656 = vmatpush.bf16.msra.mxu0 %v84
  %657 = vmatpush.bf16.msra.mxu0 %v83
  %658 = vmatpush.bf16.msra.mxu0 %v82
  %659 = vmatpush.bf16.msra.mxu0 %v81
  %660 = vmatmul.bf16.gmra.mxu0 %v650
  %v661 = vpop.f32.mrf.mxu0
  %v662 = vadd.f32 %v174, %v661
  %v663 = vpop.f32.mrf.mxu0
  %v664 = vadd.f32 %v174, %v663
  %665 = vdwg.mxu0
  %v666 = vmax.f32 %v662, 0.0
  %v667 = vmax.f32 %v664, 0.0
  %v668 = vmax.f32 %v549, %v666
  %v669 = vmax.f32 %v550, %v667
  %v670 = vsub.f32 %v549, %v668
  %v671 = vsub.f32 %v550, %v669
  %v672 = vmul.f32 %v670, 1.442695
  %v673 = vpow.pop %v672
  %v674 = vmul.f32 %v671, 1.442695
  %v675 = vpow.pop %v674
  %v676 = vsub.f32 %v666, %v668
  %v677 = vsub.f32 %v667, %v669
  %v678 = vmul.f32 %v676, 1.442695
  %v679 = vpow.pop %v678
  %v680 = vmul.f32 %v677, 1.442695
  %v681 = vpow.pop %v680
  %v682 = vmul.f32 %v565, %v673
  %v683 = vmul.f32 %v566, %v675
  %v684 = vadd.f32 %v682, %v679
  %v685 = vadd.f32 %v683, %v681
  %v686 = vmul.f32 %v576, %v673
  %v687 = vmul.f32 %v577, %v675
  %s688 = scalar_lea.vmem %s1, 64
  %v689 = vld [vmem:[%s688] sm:$0xff]
  %v690 = vld [vmem:[%s688 + $0x8] sm:$0xff]
  %v691 = vadd.f32 %v689, %v619
  %v692 = vadd.f32 %v690, %v620
  %v693 = vmul.f32 %v679, %v691
  %v694 = vmul.f32 %v681, %v692
  %v695 = vadd.f32 %v686, %v693
  %v696 = vadd.f32 %v687, %v694
  %v697 = vrcp.pop %v684
  %v698 = vrcp.pop %v685
  %v699 = vmul.f32 %v695, %v697
  %v700 = vmul.f32 %v696, %v698
  %701 = vst.msk [vmem:[%s12] sm:$0xff] %vm123, %v699
  %702 = vst.msk [vmem:[%s12 + $0x8] sm:$0xff] %vm123, %v700
  // Predicated region
  $region50: #{point_transformer_forward.34} parent=0 // pred_check
    _
  $region51: #{point_transformer_forward.34} parent=0 // pred_check_branch
    %704 = sbr.rel (0) target = $region53
  $region52: #{point_transformer_forward.34} parent=0 // pred_region
    _
  $region53: #{point_transformer_forward.34} parent=0 // pred_fallthru
    _
  // Predicated region
  $region54: #{point_transformer_forward.34} parent=0 // pred_check
    _
  $region55: #{point_transformer_forward.34} parent=0 // pred_check_branch
    %706 = sbr.rel (0) target = $region57
  $region56: #{point_transformer_forward.34} parent=0 // pred_region
    _
  $region57: #{point_transformer_forward.34} parent=0 // pred_fallthru
    _

// kernel: point_transformer_forward.42
$region0: #{point_transformer_forward.42}
  #allocation0 [shape = 'u32[]', space=smem, size = 0x4, offset = 0x4, fixed_abs, tag = 'smem constant byte address 0x4 - core index']
  #allocation1 [shape = 'u32[72,128]{1,0:T(1,128)}', space=vmem, size = 0x9000, scoped, tag = 'internal scratch']
  %s0 = inlined_call_operand.vmem [shape: f32[3,64,32], index: 0, kind: input, shape index: {}]
  %s1 = inlined_call_operand.vmem [shape: f32[3,64,1], index: 1, kind: input, shape index: {}]
  %s2 = inlined_call_operand.vmem [shape: f32[64,32], index: 2, kind: output, shape index: {}]
  %s3 = sld [smem:[#allocation0]]
  $region18: #{point_transformer_forward.42} parent=0
    _
  %s5 = ssub.s32 1, %s3
  %s6 = scalar_select 0, %s5, %s3
  // Predicated region
  $region2: #{point_transformer_forward.42} parent=0 // pred_check
    _
  $region3: #{point_transformer_forward.42} parent=0 // pred_check_branch
    %8 = sbr.rel (0) target = $region5
  $region4: #{point_transformer_forward.42} parent=0 // pred_region
    _
  $region5: #{point_transformer_forward.42} parent=0 // pred_fallthru
    _
  // Predicated region
  $region6: #{point_transformer_forward.42} parent=0 // pred_check
    _
  $region7: #{point_transformer_forward.42} parent=0 // pred_check_branch
    %10 = sbr.rel (0) target = $region9
  $region8: #{point_transformer_forward.42} parent=0 // pred_region
    _
  $region9: #{point_transformer_forward.42} parent=0 // pred_fallthru
    _
  %v11 = vld [vmem:[%s1] sm:$0xff]
  %v12 = vld [vmem:[%s1 + $0x8] sm:$0xff]
  %v13 = vld [vmem:[%s1 + $0x10] sm:$0xff]
  %v14 = vld [vmem:[%s1 + $0x18] sm:$0xff]
  %v15 = vld [vmem:[%s1 + $0x20] sm:$0xff]
  %v16 = vld [vmem:[%s1 + $0x28] sm:$0xff]
  %v17 = vld [vmem:[%s1 + $0x30] sm:$0xff]
  %v18 = vld [vmem:[%s1 + $0x38] sm:$0xff]
  %v19 = vld [vmem:[%s0] sm:$0xff]
  %v20 = vld [vmem:[%s0 + $0x8] sm:$0xff]
  %v21 = vld [vmem:[%s0 + $0x10] sm:$0xff]
  %v22 = vld [vmem:[%s0 + $0x18] sm:$0xff]
  %v23 = vld [vmem:[%s0 + $0x20] sm:$0xff]
  %v24 = vld [vmem:[%s0 + $0x28] sm:$0xff]
  %v25 = vld [vmem:[%s0 + $0x30] sm:$0xff]
  %v26 = vld [vmem:[%s0 + $0x38] sm:$0xff]
  %28 = vset.pattern.permute.xlu0 0
  %29 = vperm.xlu0 %28, %v11
  %v30 = vpop.permute.xlu0 %29
  %33 = vset.pattern.permute.xlu0 0
  %34 = vperm.xlu0 %33, %v12
  %v35 = vpop.permute.xlu0 %34
  %38 = vset.pattern.permute.xlu0 0
  %39 = vperm.xlu0 %38, %v13
  %v40 = vpop.permute.xlu0 %39
  %43 = vset.pattern.permute.xlu0 0
  %44 = vperm.xlu0 %43, %v14
  %v45 = vpop.permute.xlu0 %44
  %48 = vset.pattern.permute.xlu0 0
  %49 = vperm.xlu0 %48, %v15
  %v50 = vpop.permute.xlu0 %49
  %53 = vset.pattern.permute.xlu0 0
  %54 = vperm.xlu0 %53, %v16
  %v55 = vpop.permute.xlu0 %54
  %58 = vset.pattern.permute.xlu0 0
  %59 = vperm.xlu0 %58, %v17
  %v60 = vpop.permute.xlu0 %59
  %63 = vset.pattern.permute.xlu0 0
  %64 = vperm.xlu0 %63, %v18
  %v65 = vpop.permute.xlu0 %64
  %v67 = vmul.f32 %v30, %v19
  %v68 = vmul.f32 %v35, %v20
  %v69 = vmul.f32 %v40, %v21
  %v70 = vmul.f32 %v45, %v22
  %v71 = vmul.f32 %v50, %v23
  %v72 = vmul.f32 %v55, %v24
  %v73 = vmul.f32 %v60, %v25
  %v74 = vmul.f32 %v65, %v26
  %s75 = scalar_lea.vmem %s1, 64
  %v76 = vld [vmem:[%s75] sm:$0xff]
  %v77 = vld [vmem:[%s75 + $0x8] sm:$0xff]
  %v78 = vld [vmem:[%s75 + $0x10] sm:$0xff]
  %v79 = vld [vmem:[%s75 + $0x18] sm:$0xff]
  %v80 = vld [vmem:[%s75 + $0x20] sm:$0xff]
  %v81 = vld [vmem:[%s75 + $0x28] sm:$0xff]
  %v82 = vld [vmem:[%s75 + $0x30] sm:$0xff]
  %v83 = vld [vmem:[%s75 + $0x38] sm:$0xff]
  %s84 = scalar_lea.vmem %s0, 64
  %v85 = vld [vmem:[%s84] sm:$0xff]
  %v86 = vld [vmem:[%s84 + $0x8] sm:$0xff]
  %v87 = vld [vmem:[%s84 + $0x10] sm:$0xff]
  %v88 = vld [vmem:[%s84 + $0x18] sm:$0xff]
  %v89 = vld [vmem:[%s84 + $0x20] sm:$0xff]
  %v90 = vld [vmem:[%s84 + $0x28] sm:$0xff]
  %v91 = vld [vmem:[%s84 + $0x30] sm:$0xff]
  %v92 = vld [vmem:[%s84 + $0x38] sm:$0xff]
  %94 = vset.pattern.permute.xlu0 0
  %95 = vperm.xlu0 %94, %v76
  %v96 = vpop.permute.xlu0 %95
  %99 = vset.pattern.permute.xlu0 0
  %100 = vperm.xlu0 %99, %v77
  %v101 = vpop.permute.xlu0 %100
  %104 = vset.pattern.permute.xlu0 0
  %105 = vperm.xlu0 %104, %v78
  %v106 = vpop.permute.xlu0 %105
  %109 = vset.pattern.permute.xlu0 0
  %110 = vperm.xlu0 %109, %v79
  %v111 = vpop.permute.xlu0 %110
  %114 = vset.pattern.permute.xlu0 0
  %115 = vperm.xlu0 %114, %v80
  %v116 = vpop.permute.xlu0 %115
  %119 = vset.pattern.permute.xlu0 0
  %120 = vperm.xlu0 %119, %v81
  %v121 = vpop.permute.xlu0 %120
  %124 = vset.pattern.permute.xlu0 0
  %125 = vperm.xlu0 %124, %v82
  %v126 = vpop.permute.xlu0 %125
  %129 = vset.pattern.permute.xlu0 0
  %130 = vperm.xlu0 %129, %v83
  %v131 = vpop.permute.xlu0 %130
  %v133 = vmul.f32 %v96, %v85
  %v134 = vmul.f32 %v101, %v86
  %v135 = vmul.f32 %v106, %v87
  %v136 = vmul.f32 %v111, %v88
  %v137 = vmul.f32 %v116, %v89
  %v138 = vmul.f32 %v121, %v90
  %v139 = vmul.f32 %v126, %v91
  %v140 = vmul.f32 %v131, %v92
  %v141 = vadd.f32 %v67, %v133
  %v142 = vadd.f32 %v68, %v134
  %v143 = vadd.f32 %v69, %v135
  %v144 = vadd.f32 %v70, %v136
  %v145 = vadd.f32 %v71, %v137
  %v146 = vadd.f32 %v72, %v138
  %v147 = vadd.f32 %v73, %v139
  %v148 = vadd.f32 %v74, %v140
  %v149 = vadd.f32 %v11, %v76
  %v150 = vadd.f32 %v12, %v77
  %v151 = vadd.f32 %v13, %v78
  %v152 = vadd.f32 %v14, %v79
  %v153 = vadd.f32 %v15, %v80
  %v154 = vadd.f32 %v16, %v81
  %v155 = vadd.f32 %v17, %v82
  %v156 = vadd.f32 %v18, %v83
  %s157 = scalar_lea.vmem %s1, 128
  %v158 = vld [vmem:[%s157] sm:$0xff]
  %v159 = vld [vmem:[%s157 + $0x8] sm:$0xff]
  %v160 = vld [vmem:[%s157 + $0x10] sm:$0xff]
  %v161 = vld [vmem:[%s157 + $0x18] sm:$0xff]
  %v162 = vld [vmem:[%s157 + $0x20] sm:$0xff]
  %v163 = vld [vmem:[%s157 + $0x28] sm:$0xff]
  %v164 = vld [vmem:[%s157 + $0x30] sm:$0xff]
  %v165 = vld [vmem:[%s157 + $0x38] sm:$0xff]
  %s166 = scalar_lea.vmem %s0, 128
  %v167 = vld [vmem:[%s166] sm:$0xff]
  %v168 = vld [vmem:[%s166 + $0x8] sm:$0xff]
  %v169 = vld [vmem:[%s166 + $0x10] sm:$0xff]
  %v170 = vld [vmem:[%s166 + $0x18] sm:$0xff]
  %v171 = vld [vmem:[%s166 + $0x20] sm:$0xff]
  %v172 = vld [vmem:[%s166 + $0x28] sm:$0xff]
  %v173 = vld [vmem:[%s166 + $0x30] sm:$0xff]
  %v174 = vld [vmem:[%s166 + $0x38] sm:$0xff]
  %176 = vset.pattern.permute.xlu0 0
  %177 = vperm.xlu0 %176, %v158
  %v178 = vpop.permute.xlu0 %177
  %181 = vset.pattern.permute.xlu0 0
  %182 = vperm.xlu0 %181, %v159
  %v183 = vpop.permute.xlu0 %182
  %186 = vset.pattern.permute.xlu0 0
  %187 = vperm.xlu0 %186, %v160
  %v188 = vpop.permute.xlu0 %187
  %191 = vset.pattern.permute.xlu0 0
  %192 = vperm.xlu0 %191, %v161
  %v193 = vpop.permute.xlu0 %192
  %196 = vset.pattern.permute.xlu0 0
  %197 = vperm.xlu0 %196, %v162
  %v198 = vpop.permute.xlu0 %197
  %201 = vset.pattern.permute.xlu0 0
  %202 = vperm.xlu0 %201, %v163
  %v203 = vpop.permute.xlu0 %202
  %206 = vset.pattern.permute.xlu0 0
  %207 = vperm.xlu0 %206, %v164
  %v208 = vpop.permute.xlu0 %207
  %211 = vset.pattern.permute.xlu0 0
  %212 = vperm.xlu0 %211, %v165
  %v213 = vpop.permute.xlu0 %212
  %v215 = vmul.f32 %v178, %v167
  %v216 = vmul.f32 %v183, %v168
  %v217 = vmul.f32 %v188, %v169
  %v218 = vmul.f32 %v193, %v170
  %v219 = vmul.f32 %v198, %v171
  %v220 = vmul.f32 %v203, %v172
  %v221 = vmul.f32 %v208, %v173
  %v222 = vmul.f32 %v213, %v174
  %v223 = vadd.f32 %v141, %v215
  %v224 = vadd.f32 %v142, %v216
  %v225 = vadd.f32 %v143, %v217
  %v226 = vadd.f32 %v144, %v218
  %v227 = vadd.f32 %v145, %v219
  %v228 = vadd.f32 %v146, %v220
  %v229 = vadd.f32 %v147, %v221
  %v230 = vadd.f32 %v148, %v222
  %v231 = vadd.f32 %v149, %v158
  %v232 = vadd.f32 %v150, %v159
  %v233 = vadd.f32 %v151, %v160
  %v234 = vadd.f32 %v152, %v161
  %v235 = vadd.f32 %v153, %v162
  %v236 = vadd.f32 %v154, %v163
  %v237 = vadd.f32 %v155, %v164
  %v238 = vadd.f32 %v156, %v165
  %v239 = vrcp.pop %v231
  %v240 = vrcp.pop %v232
  %v241 = vrcp.pop %v233
  %v242 = vrcp.pop %v234
  %v243 = vrcp.pop %v235
  %v244 = vrcp.pop %v236
  %v245 = vrcp.pop %v237
  %v246 = vrcp.pop %v238
  %248 = vset.pattern.permute.xlu0 0
  %249 = vperm.xlu0 %248, %v239
  %v250 = vpop.permute.xlu0 %249
  %253 = vset.pattern.permute.xlu0 0
  %254 = vperm.xlu0 %253, %v240
  %v255 = vpop.permute.xlu0 %254
  %258 = vset.pattern.permute.xlu0 0
  %259 = vperm.xlu0 %258, %v241
  %v260 = vpop.permute.xlu0 %259
  %263 = vset.pattern.permute.xlu0 0
  %264 = vperm.xlu0 %263, %v242
  %v265 = vpop.permute.xlu0 %264
  %268 = vset.pattern.permute.xlu0 0
  %269 = vperm.xlu0 %268, %v243
  %v270 = vpop.permute.xlu0 %269
  %273 = vset.pattern.permute.xlu0 0
  %274 = vperm.xlu0 %273, %v244
  %v275 = vpop.permute.xlu0 %274
  %278 = vset.pattern.permute.xlu0 0
  %279 = vperm.xlu0 %278, %v245
  %v280 = vpop.permute.xlu0 %279
  %283 = vset.pattern.permute.xlu0 0
  %284 = vperm.xlu0 %283, %v246
  %v285 = vpop.permute.xlu0 %284
  %v287 = vmul.f32 %v223, %v250
  %v288 = vmul.f32 %v224, %v255
  %v289 = vmul.f32 %v225, %v260
  %v290 = vmul.f32 %v226, %v265
  %v291 = vmul.f32 %v227, %v270
  %v292 = vmul.f32 %v228, %v275
  %v293 = vmul.f32 %v229, %v280
  %v294 = vmul.f32 %v230, %v285
  %vm295 = vcmask 261120
  %296 = vst.msk [vmem:[%s2] sm:$0xff] %vm295, %v287
  %297 = vst.msk [vmem:[%s2 + $0x8] sm:$0xff] %vm295, %v288
  %298 = vst.msk [vmem:[%s2 + $0x10] sm:$0xff] %vm295, %v289
  %299 = vst.msk [vmem:[%s2 + $0x18] sm:$0xff] %vm295, %v290
  %300 = vst.msk [vmem:[%s2 + $0x20] sm:$0xff] %vm295, %v291
  %301 = vst.msk [vmem:[%s2 + $0x28] sm:$0xff] %vm295, %v292
  %302 = vst.msk [vmem:[%s2 + $0x30] sm:$0xff] %vm295, %v293
  %303 = vst.msk [vmem:[%s2 + $0x38] sm:$0xff] %vm295, %v294
  // Predicated region
  $region10: #{point_transformer_forward.42} parent=0 // pred_check
    _
  $region11: #{point_transformer_forward.42} parent=0 // pred_check_branch
    %305 = sbr.rel (0) target = $region13
  $region12: #{point_transformer_forward.42} parent=0 // pred_region
    _
  $region13: #{point_transformer_forward.42} parent=0 // pred_fallthru
    _
  // Predicated region
  $region14: #{point_transformer_forward.42} parent=0 // pred_check
    _
  $region15: #{point_transformer_forward.42} parent=0 // pred_check_branch
    %307 = sbr.rel (0) target = $region17
  $region16: #{point_transformer_forward.42} parent=0 // pred_region
    _
  $region17: #{point_transformer_forward.42} parent=0 // pred_fallthru
    _

// kernel: point_transformer_forward.49
$region0: #{point_transformer_forward.49}
  #allocation0 [shape = 'u32[]', space=smem, size = 0x4, offset = 0x4, fixed_abs, tag = 'smem constant byte address 0x4 - core index']
  #allocation1 [shape = 'u32[72,128]{1,0:T(1,128)}', space=vmem, size = 0x9000, scoped, tag = 'internal scratch']
  %s0 = inlined_call_operand.vmem [shape: f32[64,64], index: 0, kind: input, shape index: {}]
  %s1 = inlined_call_operand.vmem [shape: f32[64,6], index: 1, kind: input, shape index: {}]
  %s2 = inlined_call_operand.vmem [shape: f32[1,6], index: 2, kind: input, shape index: {}]
  %s3 = inlined_call_operand.vmem [shape: f32[64,6], index: 3, kind: output, shape index: {}]
  %s4 = sld [smem:[#allocation0]]
  $region22: #{point_transformer_forward.49} parent=0
    _
  %s6 = ssub.s32 1, %s4
  %s7 = scalar_select 0, %s6, %s4
  // Predicated region
  $region2: #{point_transformer_forward.49} parent=0 // pred_check
    _
  $region3: #{point_transformer_forward.49} parent=0 // pred_check_branch
    %9 = sbr.rel (0) target = $region5
  $region4: #{point_transformer_forward.49} parent=0 // pred_region
    _
  $region5: #{point_transformer_forward.49} parent=0 // pred_fallthru
    _
  // Predicated region
  $region6: #{point_transformer_forward.49} parent=0 // pred_check
    _
  $region7: #{point_transformer_forward.49} parent=0 // pred_check_branch
    %11 = sbr.rel (0) target = $region9
  $region8: #{point_transformer_forward.49} parent=0 // pred_region
    _
  $region9: #{point_transformer_forward.49} parent=0 // pred_fallthru
    _
  // Predicated region
  $region10: #{point_transformer_forward.49} parent=0 // pred_check
    _
  $region11: #{point_transformer_forward.49} parent=0 // pred_check_branch
    %13 = sbr.rel (0) target = $region13
  $region12: #{point_transformer_forward.49} parent=0 // pred_region
    _
  $region13: #{point_transformer_forward.49} parent=0 // pred_fallthru
    _
  %v15 = vld [vmem:[%s0] sm:$0xff]
  %v16 = vld [vmem:[%s0 + $0x8] sm:$0xff]
  %v17 = vld [vmem:[%s0 + $0x10] sm:$0xff]
  %v18 = vld [vmem:[%s0 + $0x18] sm:$0xff]
  %v19 = vld [vmem:[%s0 + $0x20] sm:$0xff]
  %v20 = vld [vmem:[%s0 + $0x28] sm:$0xff]
  %v21 = vld [vmem:[%s0 + $0x30] sm:$0xff]
  %v22 = vld [vmem:[%s0 + $0x38] sm:$0xff]
  %v23 = vpack.c.bf16 %v16, %v15
  %v24 = vpack.c.bf16 %v18, %v17
  %v25 = vpack.c.bf16 %v20, %v19
  %v26 = vpack.c.bf16 %v22, %v21
  %v27 = vld [vmem:[%s1] sm:$0xff]
  %v28 = vld [vmem:[%s1 + $0x8] sm:$0xff]
  %v29 = vld [vmem:[%s1 + $0x10] sm:$0xff]
  %v30 = vld [vmem:[%s1 + $0x18] sm:$0xff]
  %v31 = vld [vmem:[%s1 + $0x20] sm:$0xff]
  %v32 = vld [vmem:[%s1 + $0x28] sm:$0xff]
  %v33 = vld [vmem:[%s1 + $0x30] sm:$0xff]
  %v34 = vld [vmem:[%s1 + $0x38] sm:$0xff]
  %v35 = vpack.c.bf16 %v28, %v27
  %v36 = vpack.c.bf16 %v30, %v29
  %v37 = vpack.c.bf16 %v32, %v31
  %v38 = vpack.c.bf16 %v34, %v33
  %v39 = vld [vmem:[%s2] sm:$0x1]
  %v41 = vperm.slane %v39, 0
  %vm43 = vcmask 523264
  %v45 = vsel %vm43, %v23, 0
  %v48 = vsel %vm43, %v24, 0
  %v51 = vsel %vm43, %v25, 0
  %v54 = vsel %vm43, %v26, 0
  %56 = vmatpush.bf16.msra.mxu0 0
  %57 = vmatpush.bf16.msra.mxu0 0
  %58 = vmatpush.bf16.msra.mxu0 0
  %59 = vmatpush.bf16.msra.mxu0 0
  %60 = vmatpush.bf16.msra.mxu0 %v38
  %61 = vmatpush.bf16.msra.mxu0 %v37
  %62 = vmatpush.bf16.msra.mxu0 %v36
  %63 = vmatpush.bf16.msra.mxu0 %v35
  %64 = vmatmul.bf16.gmra.mxu0 %v45
  %v65 = vpop.f32.mrf.mxu0
  %v66 = vadd.f32 %v41, %v65
  %v67 = vpop.f32.mrf.mxu0
  %v68 = vadd.f32 %v41, %v67
  %69 = vmatmul.bf16.gmra.mxu0 %v48
  %v70 = vpop.f32.mrf.mxu0
  %v71 = vadd.f32 %v41, %v70
  %v72 = vpop.f32.mrf.mxu0
  %v73 = vadd.f32 %v41, %v72
  %74 = vmatmul.bf16.gmra.mxu0 %v51
  %v75 = vpop.f32.mrf.mxu0
  %v76 = vadd.f32 %v41, %v75
  %v77 = vpop.f32.mrf.mxu0
  %v78 = vadd.f32 %v41, %v77
  %79 = vmatmul.bf16.gmra.mxu0 %v54
  %v80 = vpop.f32.mrf.mxu0
  %v81 = vadd.f32 %v41, %v80
  %v82 = vpop.f32.mrf.mxu0
  %v83 = vadd.f32 %v41, %v82
  %84 = vdwg.mxu0
  %vm85 = vcmask 48128
  %v86 = vsel %vm85, %v66, -inf
  %87 = vmax.xlane.f32.xlu0 %v86
  %v88 = vpop.xlane.xlu0 %87
  %v89 = vsel %vm85, %v68, -inf
  %90 = vmax.xlane.f32.xlu0 %v89
  %v91 = vpop.xlane.xlu0 %90
  %v92 = vsel %vm85, %v71, -inf
  %93 = vmax.xlane.f32.xlu0 %v92
  %v94 = vpop.xlane.xlu0 %93
  %v95 = vsel %vm85, %v73, -inf
  %96 = vmax.xlane.f32.xlu0 %v95
  %v97 = vpop.xlane.xlu0 %96
  %v98 = vsel %vm85, %v76, -inf
  %99 = vmax.xlane.f32.xlu0 %v98
  %v100 = vpop.xlane.xlu0 %99
  %v101 = vsel %vm85, %v78, -inf
  %102 = vmax.xlane.f32.xlu0 %v101
  %v103 = vpop.xlane.xlu0 %102
  %v104 = vsel %vm85, %v81, -inf
  %105 = vmax.xlane.f32.xlu0 %v104
  %v106 = vpop.xlane.xlu0 %105
  %v107 = vsel %vm85, %v83, -inf
  %108 = vmax.xlane.f32.xlu0 %v107
  %v109 = vpop.xlane.xlu0 %108
  %v110 = vsub.f32 %v66, %v88
  %v111 = vsub.f32 %v68, %v91
  %v112 = vsub.f32 %v71, %v94
  %v113 = vsub.f32 %v73, %v97
  %v114 = vsub.f32 %v76, %v100
  %v115 = vsub.f32 %v78, %v103
  %v116 = vsub.f32 %v81, %v106
  %v117 = vsub.f32 %v83, %v109
  %v118 = vmul.f32 %v110, 1.442695
  %v119 = vpow.pop %v118
  %v120 = vmul.f32 %v111, 1.442695
  %v121 = vpow.pop %v120
  %v122 = vmul.f32 %v112, 1.442695
  %v123 = vpow.pop %v122
  %v124 = vmul.f32 %v113, 1.442695
  %v125 = vpow.pop %v124
  %v126 = vmul.f32 %v114, 1.442695
  %v127 = vpow.pop %v126
  %v128 = vmul.f32 %v115, 1.442695
  %v129 = vpow.pop %v128
  %v130 = vmul.f32 %v116, 1.442695
  %v131 = vpow.pop %v130
  %v132 = vmul.f32 %v117, 1.442695
  %v133 = vpow.pop %v132
  %v134 = vsel %vm85, %v119, 0.0
  %135 = vadd.xlane.f32.xlu0 %v134
  %v136 = vpop.xlane.xlu0 %135
  %v137 = vsel %vm85, %v121, 0.0
  %138 = vadd.xlane.f32.xlu0 %v137
  %v139 = vpop.xlane.xlu0 %138
  %v140 = vsel %vm85, %v123, 0.0
  %141 = vadd.xlane.f32.xlu0 %v140
  %v142 = vpop.xlane.xlu0 %141
  %v143 = vsel %vm85, %v125, 0.0
  %144 = vadd.xlane.f32.xlu0 %v143
  %v145 = vpop.xlane.xlu0 %144
  %v146 = vsel %vm85, %v127, 0.0
  %147 = vadd.xlane.f32.xlu0 %v146
  %v148 = vpop.xlane.xlu0 %147
  %v149 = vsel %vm85, %v129, 0.0
  %150 = vadd.xlane.f32.xlu0 %v149
  %v151 = vpop.xlane.xlu0 %150
  %v152 = vsel %vm85, %v131, 0.0
  %153 = vadd.xlane.f32.xlu0 %v152
  %v154 = vpop.xlane.xlu0 %153
  %v155 = vsel %vm85, %v133, 0.0
  %156 = vadd.xlane.f32.xlu0 %v155
  %v157 = vpop.xlane.xlu0 %156
  %v158 = vlog2.pop %v136
  %v159 = vmul.f32 %v158, 0.6931472
  %v160 = vlog2.pop %v139
  %v161 = vmul.f32 %v160, 0.6931472
  %v162 = vlog2.pop %v142
  %v163 = vmul.f32 %v162, 0.6931472
  %v164 = vlog2.pop %v145
  %v165 = vmul.f32 %v164, 0.6931472
  %v166 = vlog2.pop %v148
  %v167 = vmul.f32 %v166, 0.6931472
  %v168 = vlog2.pop %v151
  %v169 = vmul.f32 %v168, 0.6931472
  %v170 = vlog2.pop %v154
  %v171 = vmul.f32 %v170, 0.6931472
  %v172 = vlog2.pop %v157
  %v173 = vmul.f32 %v172, 0.6931472
  %v174 = vsub.f32 %v110, %v159
  %v175 = vsub.f32 %v111, %v161
  %v176 = vsub.f32 %v112, %v163
  %v177 = vsub.f32 %v113, %v165
  %v178 = vsub.f32 %v114, %v167
  %v179 = vsub.f32 %v115, %v169
  %v180 = vsub.f32 %v116, %v171
  %v181 = vsub.f32 %v117, %v173
  %182 = vst.msk [vmem:[%s3] sm:$0xff] %vm85, %v174
  %183 = vst.msk [vmem:[%s3 + $0x8] sm:$0xff] %vm85, %v175
  %184 = vst.msk [vmem:[%s3 + $0x10] sm:$0xff] %vm85, %v176
  %185 = vst.msk [vmem:[%s3 + $0x18] sm:$0xff] %vm85, %v177
  %186 = vst.msk [vmem:[%s3 + $0x20] sm:$0xff] %vm85, %v178
  %187 = vst.msk [vmem:[%s3 + $0x28] sm:$0xff] %vm85, %v179
  %188 = vst.msk [vmem:[%s3 + $0x30] sm:$0xff] %vm85, %v180
  %189 = vst.msk [vmem:[%s3 + $0x38] sm:$0xff] %vm85, %v181
  // Predicated region
  $region14: #{point_transformer_forward.49} parent=0 // pred_check
    _
  $region15: #{point_transformer_forward.49} parent=0 // pred_check_branch
    %191 = sbr.rel (0) target = $region17
  $region16: #{point_transformer_forward.49} parent=0 // pred_region
    _
  $region17: #{point_transformer_forward.49} parent=0 // pred_fallthru
    _
  // Predicated region
  $region18: #{point_transformer_forward.49} parent=0 // pred_check
    _
  $region19: #{point_transformer_forward.49} parent=0 // pred_check_branch
    %193 = sbr.rel (0) target = $region21
  $region20: #{point_transformer_forward.49} parent=0 // pred_region
    _
  $region21: #{point_transformer_forward.49} parent=0 // pred_fallthru
    _

</llo_original>
